<compile_context>
chip_gen: v7x
topology: tpu7x:2x2x1
jax: 0.10.0
libtpu: 0.0.40
codegen_flags: <defaults>
</compile_context>

<pallas_src>
import jax
import jax.numpy as jnp
from jax.experimental import pallas as pl
from jax.experimental.pallas import tpu as pltpu

VOCAB = 32
EMB = 64
MAX_LEN = 224
NUM_CLASSES = 3
NUM_LAYERS = 2
NUM_HEADS = 4
FFN = 256
HEAD_DIM = EMB // NUM_HEADS
LN_EPS = 1e-5
NEG_INF = -1e9                      # additive bias for padded keys (≈ -inf)
LOGIT_PAD = 128                     # lane-dense logits, sliced to 3 outside
QKV_COLS = 2 * EMB + NUM_HEADS * EMB   # [Q | K | per-head V·Wo] = 384

PACK_ORDER = ("wqkv", "bqkv", "battn", "ln1g", "ln1b",
              "w1", "b1", "w2", "b2", "ln2g", "ln2b", "clsw", "clsb")


def _layernorm(x, g, b):
    mu = jnp.mean(x, axis=-1, keepdims=True)
    var = jnp.mean((x - mu) ** 2, axis=-1, keepdims=True)
    return (x - mu) * jax.lax.rsqrt(var + LN_EPS) * g + b


def fused_transformer_kernel(x_ref, bias_ref,
                             wqkv_ref, bqkv_ref, battn_ref,
                             ln1g_ref, ln1b_ref,
                             w1_ref, b1_ref, w2_ref, b2_ref,
                             ln2g_ref, ln2b_ref, clsw_ref, clsb_ref,
                             out_ref):
    BT, Lp, E = x_ref.shape             # batch tile, padded seq len, emb dim
    NL = wqkv_ref.shape[0]
    H, D = NUM_HEADS, HEAD_DIM
    M = BT * Lp

    bias = bias_ref[...]                # [BT, 1, Lp] f32: 0 valid / NEG_INF pad key
    # f32 working copy for residual/LayerNorm math; input arrives bf16.
    x = x_ref[...].reshape(M, E).astype(jnp.float32)

    for layer in range(NL):
        xb = x.astype(jnp.bfloat16)     # one cast per layer for all matmuls

        # ---- fused Q | K | (V·Wo per head) projection: one lane-dense matmul
        qkv = jnp.dot(xb, wqkv_ref[layer],
                      preferred_element_type=jnp.float32) + bqkv_ref[layer]  # [M, 384]

        # ---- multi-head self-attention, batched over the whole tile --------
        attn = None
        for h in range(H):              # H=4 static unroll; each stage full-tile
            q = qkv[:, h * D:(h + 1) * D].reshape(BT, Lp, D).astype(jnp.bfloat16)
            k = qkv[:, E + h * D:E + (h + 1) * D].reshape(BT, Lp, D).astype(jnp.bfloat16)
            v = qkv[:, 2 * E + h * E:2 * E + (h + 1) * E] \
                .reshape(BT, Lp, E).astype(jnp.bfloat16)          # V already × Wo_h

            s = jnp.einsum('bqd,bkd->bqk', q, k,
                           preferred_element_type=jnp.float32) + bias   # [BT,Lp,Lp]
            s = s - jnp.max(s, axis=-1, keepdims=True)
            p = jnp.exp(s)
            p = p * pl.reciprocal(jnp.sum(p, axis=-1, keepdims=True), approx=True)
            o = jnp.einsum('bqk,bke->bqe', p.astype(jnp.bfloat16), v,
                           preferred_element_type=jnp.float32)          # [BT,Lp,E]
            attn = o if attn is None else attn + o
        attn = attn.reshape(M, E) + battn_ref[layer]                    # + bo

        # ---- residual + LayerNorm 1 (f32) ----------------------------------
        x1 = _layernorm(x + attn, ln1g_ref[layer], ln1b_ref[layer])

        # ---- feed-forward (ReLU), flattened over the whole tile ------------
        h1 = jnp.dot(x1.astype(jnp.bfloat16), w1_ref[layer],
                     preferred_element_type=jnp.float32) + b1_ref[layer]
        h1 = jnp.maximum(h1, 0.0)
        h2 = jnp.dot(h1.astype(jnp.bfloat16), w2_ref[layer],
                     preferred_element_type=jnp.float32) + b2_ref[layer]

        # ---- residual + LayerNorm 2 (f32) -----------------------------------
        x = _layernorm(x1 + h2, ln2g_ref[layer], ln2b_ref[layer])

    # ---- classifier: CLS row of every sample, one strided slice -------------
    cls = x.reshape(BT, Lp, E)[:, 0, :]                                  # [BT, E]
    logits = jnp.dot(cls.astype(jnp.bfloat16), clsw_ref[...],
                     preferred_element_type=jnp.float32) + clsb_ref[...]  # [BT,128]
    out_ref[0] = logits


def _fused_forward_call(x, bias, packed, n_tiles, bt):
    Bp, Lp, E = x.shape
    weights = [packed[k] for k in PACK_ORDER]

    def const_spec(a):
        nd = a.ndim
        return pl.BlockSpec(a.shape, lambda *_, _nd=nd: (0,) * _nd)

    return pl.pallas_call(
        fused_transformer_kernel,
        out_shape=jax.ShapeDtypeStruct((n_tiles, bt, LOGIT_PAD), jnp.float32),
        grid_spec=pltpu.PrefetchScalarGridSpec(
            num_scalar_prefetch=0,
            grid=(n_tiles,),
            in_specs=[pl.BlockSpec((bt, Lp, E), lambda t: (t, 0, 0)),
                      pl.BlockSpec((bt, 1, Lp), lambda t: (t, 0, 0))]
                     + [const_spec(a) for a in weights],
            out_specs=pl.BlockSpec((1, bt, LOGIT_PAD), lambda t: (t, 0, 0)),
        ),
        compiler_params=pltpu.CompilerParams(
            dimension_semantics=("parallel",),
            vmem_limit_bytes=64 * 1024 * 1024),
    )(x, bias, *weights)


def pack_params(params):
    """Pack weights into layer-stacked, fused-QKV(+Wo) bf16 matmul form."""
    scale = 1.0 / (HEAD_DIM ** 0.5)          # exact 1/4: folded into Wq / bq
    wqkv_l, bqkv_l, battn_l = [], [], []
    ln1g_l, ln1b_l, w1_l, b1_l = [], [], [], []
    w2_l, b2_l, ln2g_l, ln2b_l = [], [], [], []

    for lp in params["layers"]:
        wqkv, bqkv = lp["wqkv"], lp["bqkv"]          # [E, 3E], [3E]  (x @ W form)
        wq, wk, wv = wqkv[:, :EMB], wqkv[:, EMB:2 * EMB], wqkv[:, 2 * EMB:]
        bq, bk, bv = bqkv[:EMB], bqkv[EMB:2 * EMB], bqkv[2 * EMB:]
        wo, bo = lp["wo"], lp["bo"]                  # [E, E], [E]

        # Fold the output projection into V per head (computed in f32):
        #   V'_h = X @ (Wv_h Wo_h) + bv_h @ Wo_h
        wvo = jnp.concatenate(
            [wv[:, h * HEAD_DIM:(h + 1) * HEAD_DIM] @ wo[h * HEAD_DIM:(h + 1) * HEAD_DIM, :]
             for h in range(NUM_HEADS)], axis=1)                          # [E, H*E]
        bvo = jnp.concatenate(
            [bv[h * HEAD_DIM:(h + 1) * HEAD_DIM] @ wo[h * HEAD_DIM:(h + 1) * HEAD_DIM, :]
             for h in range(NUM_HEADS)], axis=0)                          # [H*E]

        wqkv_l.append(jnp.concatenate([wq * scale, wk, wvo], axis=1))     # [E, 384]
        bqkv_l.append(jnp.concatenate([bq * scale, bk, bvo])[None, :])    # [1, 384]
        battn_l.append(bo[None, :])
        ln1g_l.append(lp["ln1g"][None, :]); ln1b_l.append(lp["ln1b"][None, :])
        w1_l.append(lp["w1"]); b1_l.append(lp["b1"][None, :])
        w2_l.append(lp["w2"]); b2_l.append(lp["b2"][None, :])
        ln2g_l.append(lp["ln2g"][None, :]); ln2b_l.append(lp["ln2b"][None, :])

    packed = {
        "wqkv": jnp.stack(wqkv_l).astype(jnp.bfloat16),     # [NL, 64, 384]
        "bqkv": jnp.stack(bqkv_l).astype(jnp.float32),      # [NL, 1, 384]
        "battn": jnp.stack(battn_l).astype(jnp.float32),    # [NL, 1, 64]
        "ln1g": jnp.stack(ln1g_l).astype(jnp.float32),
        "ln1b": jnp.stack(ln1b_l).astype(jnp.float32),
        "w1": jnp.stack(w1_l).astype(jnp.bfloat16),         # [NL, 64, 256]
        "b1": jnp.stack(b1_l).astype(jnp.float32),          # [NL, 1, 256]
        "w2": jnp.stack(w2_l).astype(jnp.bfloat16),         # [NL, 256, 64]
        "b2": jnp.stack(b2_l).astype(jnp.float32),
        "ln2g": jnp.stack(ln2g_l).astype(jnp.float32),
        "ln2b": jnp.stack(ln2b_l).astype(jnp.float32),
    }
    clsw = jnp.zeros((EMB, LOGIT_PAD), jnp.float32).at[:, :NUM_CLASSES].set(params["cls_w"])
    clsb = jnp.zeros((1, LOGIT_PAD), jnp.float32).at[0, :NUM_CLASSES].set(params["cls_b"])
    packed["clsw"] = clsw.astype(jnp.bfloat16)
    packed["clsb"] = clsb
    return packed


def neurotoken_transformer_forward(params, input_ids, attention_mask):
    """input_ids: [B, S] int32, attention_mask: [B, S] (1=valid, 0=pad)."""
    B, S = input_ids.shape
    L = S + 1
    packed = pack_params(params)

    # ---- embedding / pos-embed / CLS / mask glue (plain JAX) ----------------
    x = jnp.take(params["embed"], input_ids, axis=0)             # [B, S, E]
    x = x + params["pos_embed"][:, :S, :]                        # (CLS gets no pos-emb,
    cls = jnp.broadcast_to(params["cls_token"], (B, 1, EMB))     #  matching the PyTorch spec)
    x = jnp.concatenate([cls, x], axis=1).astype(jnp.float32)    # [B, L, E]

    mask = jnp.concatenate(
        [jnp.ones((B, 1), dtype=bool), attention_mask.astype(bool)], axis=1)  # [B, L]
    bias = jnp.where(mask, 0.0, NEG_INF).astype(jnp.float32)                  # [B, L]

    # ---- sequence padding: bf16 sublane-pair aligned; lane-dense keys when long
    if L <= 128:
        Lp = max(16, ((L + 15) // 16) * 16)
    else:
        Lp = ((L + 127) // 128) * 128

    # ---- batch tiling: >=2 even grid steps for v7x's two TCs; bigger tiles on
    # v5e/v6e to amortize per-step overhead; cap bt at long Lp (v7x 64 MiB VMEM).
    if B == 1:
        bt, n_tiles = 1, 1
    else:
        bt_cap = 8 if Lp > 128 else 16
        bt = max(1, min(bt_cap, B // 2))
        n_tiles = -(-B // bt)
        if n_tiles % 2:
            n_tiles += 1
    Bp = bt * n_tiles

    # zero-pad activations (passed bf16); padded keys get NEG_INF bias.
    x = jnp.pad(x, ((0, Bp - B), (0, Lp - L), (0, 0))).astype(jnp.bfloat16)
    bias = jnp.pad(bias, ((0, Bp - B), (0, Lp - L)),
                   constant_values=NEG_INF)[:, None, :]           # [Bp, 1, Lp]

    out = _fused_forward_call(x, bias, packed, n_tiles, bt)       # [n_tiles, bt, 128]
    logits = out.reshape(Bp, LOGIT_PAD)[:B, :NUM_CLASSES]
    return logits


def init_params(key):
    """Deterministic synthetic init mirroring the PyTorch _init_weights scheme."""
    keys = jax.random.split(key, 3 + 4 * NUM_LAYERS + 1)

    def xavier(k, shape):  # shape = (fan_in, fan_out), x @ W convention
        bound = (6.0 / (shape[0] + shape[1])) ** 0.5
        return jax.random.uniform(k, shape, jnp.float32, -bound, bound)

    params = {
        "embed": 0.02 * jax.random.normal(keys[0], (VOCAB, EMB), jnp.float32),
        "pos_embed": 0.02 * jax.random.normal(keys[1], (1, MAX_LEN, EMB), jnp.float32),
        "cls_token": 0.02 * jax.random.normal(keys[2], (1, 1, EMB), jnp.float32),
    }
    layers = []
    kidx = 3
    for _ in range(NUM_LAYERS):
        layers.append(dict(
            wqkv=xavier(keys[kidx + 0], (EMB, 3 * EMB)),
            bqkv=jnp.zeros((3 * EMB,), jnp.float32),
            wo=xavier(keys[kidx + 1], (EMB, EMB)),
            bo=jnp.zeros((EMB,), jnp.float32),
            ln1g=jnp.ones((EMB,), jnp.float32),
            ln1b=jnp.zeros((EMB,), jnp.float32),
            w1=xavier(keys[kidx + 2], (EMB, FFN)),
            b1=jnp.zeros((FFN,), jnp.float32),
            w2=xavier(keys[kidx + 3], (FFN, EMB)),
            b2=jnp.zeros((EMB,), jnp.float32),
            ln2g=jnp.ones((EMB,), jnp.float32),
            ln2b=jnp.zeros((EMB,), jnp.float32),
        ))
        kidx += 4
    params["layers"] = layers
    params["cls_w"] = xavier(keys[kidx], (EMB, NUM_CLASSES))
    params["cls_b"] = jnp.zeros((NUM_CLASSES,), jnp.float32)
    return params


if __name__ == "__main__":
    key = jax.random.PRNGKey(0)
    pkey, ikey = jax.random.split(key)
    params = init_params(pkey)

    B, S = 2, 8
    input_ids = jax.random.randint(ikey, (B, S), 1, VOCAB, dtype=jnp.int32)
    attention_mask = jnp.ones((B, S), dtype=jnp.int32)
    attention_mask = attention_mask.at[1, 6:].set(0)  # pad last 2 tokens of sample 1

    forward = jax.jit(neurotoken_transformer_forward)
    logits = forward(params, input_ids, attention_mask)
    logits = jax.block_until_ready(logits)
    assert logits.shape == (B, NUM_CLASSES)
    assert bool(jnp.all(jnp.isfinite(logits)))
    print("KERNEL_OK")
</pallas_src>

<mosaic_0001>
module attributes {stable_mosaic.version = 11 : i64} {
  func.func @fused_transformer_kernel(%arg0: i32, %arg1: memref<1x16x64xbf16, #tpu.memory_space<vmem>>, %arg2: memref<1x1x16xf32, #tpu.memory_space<vmem>>, %arg3: memref<2x64x384xbf16, #tpu.memory_space<vmem>>, %arg4: memref<2x1x384xf32, #tpu.memory_space<vmem>>, %arg5: memref<2x1x64xf32, #tpu.memory_space<vmem>>, %arg6: memref<2x1x64xf32, #tpu.memory_space<vmem>>, %arg7: memref<2x1x64xf32, #tpu.memory_space<vmem>>, %arg8: memref<2x64x256xbf16, #tpu.memory_space<vmem>>, %arg9: memref<2x1x256xf32, #tpu.memory_space<vmem>>, %arg10: memref<2x256x64xbf16, #tpu.memory_space<vmem>>, %arg11: memref<2x1x64xf32, #tpu.memory_space<vmem>>, %arg12: memref<2x1x64xf32, #tpu.memory_space<vmem>>, %arg13: memref<2x1x64xf32, #tpu.memory_space<vmem>>, %arg14: memref<64x128xbf16, #tpu.memory_space<vmem>>, %arg15: memref<1x128xf32, #tpu.memory_space<vmem>>, %arg16: memref<1x1x128xf32, #tpu.memory_space<vmem>>) attributes {dimension_semantics = [#tpu.dimension_semantics<parallel>], iteration_bounds = array<i64: 2>, scalar_prefetch = 0 : i64, scratch_operands = 0 : i64, tpu.core_type = #tpu.core_type<tc>, window_params = [{transform_indices = @transform_0, window_bounds = array<i64: 1, 16, 64>}, {transform_indices = @transform_1, window_bounds = array<i64: 1, 1, 16>}, {pipeline_mode = #tpu.pipeline_mode<synchronous>, transform_indices = @transform_2, window_bounds = array<i64: 2, 64, 384>}, {pipeline_mode = #tpu.pipeline_mode<synchronous>, transform_indices = @transform_3, window_bounds = array<i64: 2, 1, 384>}, {pipeline_mode = #tpu.pipeline_mode<synchronous>, transform_indices = @transform_4, window_bounds = array<i64: 2, 1, 64>}, {pipeline_mode = #tpu.pipeline_mode<synchronous>, transform_indices = @transform_5, window_bounds = array<i64: 2, 1, 64>}, {pipeline_mode = #tpu.pipeline_mode<synchronous>, transform_indices = @transform_6, window_bounds = array<i64: 2, 1, 64>}, {pipeline_mode = #tpu.pipeline_mode<synchronous>, transform_indices = @transform_7, window_bounds = array<i64: 2, 64, 256>}, {pipeline_mode = #tpu.pipeline_mode<synchronous>, transform_indices = @transform_8, window_bounds = array<i64: 2, 1, 256>}, {pipeline_mode = #tpu.pipeline_mode<synchronous>, transform_indices = @transform_9, window_bounds = array<i64: 2, 256, 64>}, {pipeline_mode = #tpu.pipeline_mode<synchronous>, transform_indices = @transform_10, window_bounds = array<i64: 2, 1, 64>}, {pipeline_mode = #tpu.pipeline_mode<synchronous>, transform_indices = @transform_11, window_bounds = array<i64: 2, 1, 64>}, {pipeline_mode = #tpu.pipeline_mode<synchronous>, transform_indices = @transform_12, window_bounds = array<i64: 2, 1, 64>}, {pipeline_mode = #tpu.pipeline_mode<synchronous>, transform_indices = @transform_13, window_bounds = array<i64: 64, 128>}, {pipeline_mode = #tpu.pipeline_mode<synchronous>, transform_indices = @transform_14, window_bounds = array<i64: 1, 128>}, {transform_indices = @transform_15, window_bounds = array<i64: 1, 1, 128>}]} {
    %c0 = arith.constant 0 : index
    %c0_0 = arith.constant 0 : index
    %c0_1 = arith.constant 0 : index
    %0 = vector.load %arg2[%c0, %c0_0, %c0_1] : memref<1x1x16xf32, #tpu.memory_space<vmem>>, vector<1x1x16xf32>
    %c0_2 = arith.constant 0 : index
    %c0_3 = arith.constant 0 : index
    %c0_4 = arith.constant 0 : index
    %1 = vector.load %arg1[%c0_2, %c0_3, %c0_4] : memref<1x16x64xbf16, #tpu.memory_space<vmem>>, vector<1x16x64xbf16>
    %2 = vector.shape_cast %1 : vector<1x16x64xbf16> to vector<16x64xbf16>
    %3 = arith.extf %2 : vector<16x64xbf16> to vector<16x64xf32>
    %4 = arith.truncf %3 : vector<16x64xf32> to vector<16x64xbf16>
    %c0_5 = arith.constant 0 : index
    %c0_6 = arith.constant 0 : index
    %c0_7 = arith.constant 0 : index
    %5 = vector.load %arg3[%c0_5, %c0_6, %c0_7] : memref<2x64x384xbf16, #tpu.memory_space<vmem>>, vector<1x64x384xbf16>
    %6 = vector.shape_cast %5 : vector<1x64x384xbf16> to vector<64x384xbf16>
    %cst = arith.constant dense<0.000000e+00> : vector<16x384xf32>
    %7 = tpu.matmul %4, %6, %cst {dimension_numbers = #tpu.dot_dimension_numbers<[1], [0], [0], [1], [0, 0, 1, 1], [], []>} : vector<16x64xbf16>, vector<64x384xbf16>, vector<16x384xf32> -> vector<16x384xf32>
    %c0_8 = arith.constant 0 : index
    %c0_9 = arith.constant 0 : index
    %c0_10 = arith.constant 0 : index
    %8 = vector.load %arg4[%c0_8, %c0_9, %c0_10] : memref<2x1x384xf32, #tpu.memory_space<vmem>>, vector<1x1x384xf32>
    %9 = vector.shape_cast %8 : vector<1x1x384xf32> to vector<1x384xf32>
    %10 = vector.broadcast %9 : vector<1x384xf32> to vector<16x384xf32>
    %11 = arith.addf %7, %10 : vector<16x384xf32>
    %12 = vector.extract_strided_slice %11 {offsets = [0, 0], sizes = [16, 16], strides = [1, 1]} : vector<16x384xf32> to vector<16x16xf32>
    %13 = vector.shape_cast %12 : vector<16x16xf32> to vector<1x16x16xf32>
    %14 = arith.truncf %13 : vector<1x16x16xf32> to vector<1x16x16xbf16>
    %15 = vector.extract_strided_slice %11 {offsets = [0, 64], sizes = [16, 16], strides = [1, 1]} : vector<16x384xf32> to vector<16x16xf32>
    %16 = vector.shape_cast %15 : vector<16x16xf32> to vector<1x16x16xf32>
    %17 = arith.truncf %16 : vector<1x16x16xf32> to vector<1x16x16xbf16>
    %18 = vector.extract_strided_slice %11 {offsets = [0, 128], sizes = [16, 64], strides = [1, 1]} : vector<16x384xf32> to vector<16x64xf32>
    %19 = vector.shape_cast %18 : vector<16x64xf32> to vector<1x16x64xf32>
    %20 = arith.truncf %19 : vector<1x16x64xf32> to vector<1x16x64xbf16>
    "tpu.trace_start"() <{level = 10 : i32, message = "bqd,bkd->bqk"}> : () -> ()
    %cst_11 = arith.constant dense<0.000000e+00> : vector<1x16x16xf32>
    %21 = tpu.matmul %14, %17, %cst_11 {dimension_numbers = #tpu.dot_dimension_numbers<[2], [2], [1], [1], [0, 0, 0, 1, 1, 1], [0], [0]>} : vector<1x16x16xbf16>, vector<1x16x16xbf16>, vector<1x16x16xf32> -> vector<1x16x16xf32>
    "tpu.trace_stop"() : () -> ()
    %22 = vector.broadcast %0 : vector<1x1x16xf32> to vector<1x16x16xf32>
    %23 = arith.addf %21, %22 : vector<1x16x16xf32>
    %cst_12 = arith.constant dense<0xFF800000> : vector<1x16xf32>
    %24 = vector.multi_reduction <maximumf>, %23, %cst_12 [2] : vector<1x16x16xf32> to vector<1x16xf32>
    %25 = vector.shape_cast %24 : vector<1x16xf32> to vector<1x16x1xf32>
    %26 = vector.broadcast %25 : vector<1x16x1xf32> to vector<1x16x16xf32>
    %27 = arith.subf %23, %26 : vector<1x16x16xf32>
    %28 = math.exp %27 : vector<1x16x16xf32>
    %cst_13 = arith.constant dense<0.000000e+00> : vector<1x16xf32>
    %29 = vector.multi_reduction <add>, %28, %cst_13 [2] : vector<1x16x16xf32> to vector<1x16xf32>
    %30 = vector.shape_cast %29 : vector<1x16xf32> to vector<1x16x1xf32>
    %31 = tpu.reciprocal %30 {approx = true} : vector<1x16x1xf32> -> vector<1x16x1xf32>
    %32 = vector.broadcast %31 : vector<1x16x1xf32> to vector<1x16x16xf32>
    %33 = arith.mulf %28, %32 : vector<1x16x16xf32>
    %34 = arith.truncf %33 : vector<1x16x16xf32> to vector<1x16x16xbf16>
    "tpu.trace_start"() <{level = 10 : i32, message = "bqk,bke->bqe"}> : () -> ()
    %cst_14 = arith.constant dense<0.000000e+00> : vector<1x16x64xf32>
    %35 = tpu.matmul %34, %20, %cst_14 {dimension_numbers = #tpu.dot_dimension_numbers<[2], [1], [1], [2], [0, 0, 0, 1, 1, 2], [0], [0]>} : vector<1x16x16xbf16>, vector<1x16x64xbf16>, vector<1x16x64xf32> -> vector<1x16x64xf32>
    "tpu.trace_stop"() : () -> ()
    %36 = vector.extract_strided_slice %11 {offsets = [0, 16], sizes = [16, 16], strides = [1, 1]} : vector<16x384xf32> to vector<16x16xf32>
    %37 = vector.shape_cast %36 : vector<16x16xf32> to vector<1x16x16xf32>
    %38 = arith.truncf %37 : vector<1x16x16xf32> to vector<1x16x16xbf16>
    %39 = vector.extract_strided_slice %11 {offsets = [0, 80], sizes = [16, 16], strides = [1, 1]} : vector<16x384xf32> to vector<16x16xf32>
    %40 = vector.shape_cast %39 : vector<16x16xf32> to vector<1x16x16xf32>
    %41 = arith.truncf %40 : vector<1x16x16xf32> to vector<1x16x16xbf16>
    %42 = vector.extract_strided_slice %11 {offsets = [0, 192], sizes = [16, 64], strides = [1, 1]} : vector<16x384xf32> to vector<16x64xf32>
    %43 = vector.shape_cast %42 : vector<16x64xf32> to vector<1x16x64xf32>
    %44 = arith.truncf %43 : vector<1x16x64xf32> to vector<1x16x64xbf16>
    "tpu.trace_start"() <{level = 10 : i32, message = "bqd,bkd->bqk"}> : () -> ()
    %cst_15 = arith.constant dense<0.000000e+00> : vector<1x16x16xf32>
    %45 = tpu.matmul %38, %41, %cst_15 {dimension_numbers = #tpu.dot_dimension_numbers<[2], [2], [1], [1], [0, 0, 0, 1, 1, 1], [0], [0]>} : vector<1x16x16xbf16>, vector<1x16x16xbf16>, vector<1x16x16xf32> -> vector<1x16x16xf32>
    "tpu.trace_stop"() : () -> ()
    %46 = vector.broadcast %0 : vector<1x1x16xf32> to vector<1x16x16xf32>
    %47 = arith.addf %45, %46 : vector<1x16x16xf32>
    %cst_16 = arith.constant dense<0xFF800000> : vector<1x16xf32>
    %48 = vector.multi_reduction <maximumf>, %47, %cst_16 [2] : vector<1x16x16xf32> to vector<1x16xf32>
    %49 = vector.shape_cast %48 : vector<1x16xf32> to vector<1x16x1xf32>
    %50 = vector.broadcast %49 : vector<1x16x1xf32> to vector<1x16x16xf32>
    %51 = arith.subf %47, %50 : vector<1x16x16xf32>
    %52 = math.exp %51 : vector<1x16x16xf32>
    %cst_17 = arith.constant dense<0.000000e+00> : vector<1x16xf32>
    %53 = vector.multi_reduction <add>, %52, %cst_17 [2] : vector<1x16x16xf32> to vector<1x16xf32>
    %54 = vector.shape_cast %53 : vector<1x16xf32> to vector<1x16x1xf32>
    %55 = tpu.reciprocal %54 {approx = true} : vector<1x16x1xf32> -> vector<1x16x1xf32>
    %56 = vector.broadcast %55 : vector<1x16x1xf32> to vector<1x16x16xf32>
    %57 = arith.mulf %52, %56 : vector<1x16x16xf32>
    %58 = arith.truncf %57 : vector<1x16x16xf32> to vector<1x16x16xbf16>
    "tpu.trace_start"() <{level = 10 : i32, message = "bqk,bke->bqe"}> : () -> ()
    %cst_18 = arith.constant dense<0.000000e+00> : vector<1x16x64xf32>
    %59 = tpu.matmul %58, %44, %cst_18 {dimension_numbers = #tpu.dot_dimension_numbers<[2], [1], [1], [2], [0, 0, 0, 1, 1, 2], [0], [0]>} : vector<1x16x16xbf16>, vector<1x16x64xbf16>, vector<1x16x64xf32> -> vector<1x16x64xf32>
    "tpu.trace_stop"() : () -> ()
    %60 = arith.addf %35, %59 : vector<1x16x64xf32>
    %61 = vector.extract_strided_slice %11 {offsets = [0, 32], sizes = [16, 16], strides = [1, 1]} : vector<16x384xf32> to vector<16x16xf32>
    %62 = vector.shape_cast %61 : vector<16x16xf32> to vector<1x16x16xf32>
    %63 = arith.truncf %62 : vector<1x16x16xf32> to vector<1x16x16xbf16>
    %64 = vector.extract_strided_slice %11 {offsets = [0, 96], sizes = [16, 16], strides = [1, 1]} : vector<16x384xf32> to vector<16x16xf32>
    %65 = vector.shape_cast %64 : vector<16x16xf32> to vector<1x16x16xf32>
    %66 = arith.truncf %65 : vector<1x16x16xf32> to vector<1x16x16xbf16>
    %67 = vector.extract_strided_slice %11 {offsets = [0, 256], sizes = [16, 64], strides = [1, 1]} : vector<16x384xf32> to vector<16x64xf32>
    %68 = vector.shape_cast %67 : vector<16x64xf32> to vector<1x16x64xf32>
    %69 = arith.truncf %68 : vector<1x16x64xf32> to vector<1x16x64xbf16>
    "tpu.trace_start"() <{level = 10 : i32, message = "bqd,bkd->bqk"}> : () -> ()
    %cst_19 = arith.constant dense<0.000000e+00> : vector<1x16x16xf32>
    %70 = tpu.matmul %63, %66, %cst_19 {dimension_numbers = #tpu.dot_dimension_numbers<[2], [2], [1], [1], [0, 0, 0, 1, 1, 1], [0], [0]>} : vector<1x16x16xbf16>, vector<1x16x16xbf16>, vector<1x16x16xf32> -> vector<1x16x16xf32>
    "tpu.trace_stop"() : () -> ()
    %71 = vector.broadcast %0 : vector<1x1x16xf32> to vector<1x16x16xf32>
    %72 = arith.addf %70, %71 : vector<1x16x16xf32>
    %cst_20 = arith.constant dense<0xFF800000> : vector<1x16xf32>
    %73 = vector.multi_reduction <maximumf>, %72, %cst_20 [2] : vector<1x16x16xf32> to vector<1x16xf32>
    %74 = vector.shape_cast %73 : vector<1x16xf32> to vector<1x16x1xf32>
    %75 = vector.broadcast %74 : vector<1x16x1xf32> to vector<1x16x16xf32>
    %76 = arith.subf %72, %75 : vector<1x16x16xf32>
    %77 = math.exp %76 : vector<1x16x16xf32>
    %cst_21 = arith.constant dense<0.000000e+00> : vector<1x16xf32>
    %78 = vector.multi_reduction <add>, %77, %cst_21 [2] : vector<1x16x16xf32> to vector<1x16xf32>
    %79 = vector.shape_cast %78 : vector<1x16xf32> to vector<1x16x1xf32>
    %80 = tpu.reciprocal %79 {approx = true} : vector<1x16x1xf32> -> vector<1x16x1xf32>
    %81 = vector.broadcast %80 : vector<1x16x1xf32> to vector<1x16x16xf32>
    %82 = arith.mulf %77, %81 : vector<1x16x16xf32>
    %83 = arith.truncf %82 : vector<1x16x16xf32> to vector<1x16x16xbf16>
    "tpu.trace_start"() <{level = 10 : i32, message = "bqk,bke->bqe"}> : () -> ()
    %cst_22 = arith.constant dense<0.000000e+00> : vector<1x16x64xf32>
    %84 = tpu.matmul %83, %69, %cst_22 {dimension_numbers = #tpu.dot_dimension_numbers<[2], [1], [1], [2], [0, 0, 0, 1, 1, 2], [0], [0]>} : vector<1x16x16xbf16>, vector<1x16x64xbf16>, vector<1x16x64xf32> -> vector<1x16x64xf32>
    "tpu.trace_stop"() : () -> ()
    %85 = arith.addf %60, %84 : vector<1x16x64xf32>
    %86 = vector.extract_strided_slice %11 {offsets = [0, 48], sizes = [16, 16], strides = [1, 1]} : vector<16x384xf32> to vector<16x16xf32>
    %87 = vector.shape_cast %86 : vector<16x16xf32> to vector<1x16x16xf32>
    %88 = arith.truncf %87 : vector<1x16x16xf32> to vector<1x16x16xbf16>
    %89 = vector.extract_strided_slice %11 {offsets = [0, 112], sizes = [16, 16], strides = [1, 1]} : vector<16x384xf32> to vector<16x16xf32>
    %90 = vector.shape_cast %89 : vector<16x16xf32> to vector<1x16x16xf32>
    %91 = arith.truncf %90 : vector<1x16x16xf32> to vector<1x16x16xbf16>
    %92 = vector.extract_strided_slice %11 {offsets = [0, 320], sizes = [16, 64], strides = [1, 1]} : vector<16x384xf32> to vector<16x64xf32>
    %93 = vector.shape_cast %92 : vector<16x64xf32> to vector<1x16x64xf32>
    %94 = arith.truncf %93 : vector<1x16x64xf32> to vector<1x16x64xbf16>
    "tpu.trace_start"() <{level = 10 : i32, message = "bqd,bkd->bqk"}> : () -> ()
    %cst_23 = arith.constant dense<0.000000e+00> : vector<1x16x16xf32>
    %95 = tpu.matmul %88, %91, %cst_23 {dimension_numbers = #tpu.dot_dimension_numbers<[2], [2], [1], [1], [0, 0, 0, 1, 1, 1], [0], [0]>} : vector<1x16x16xbf16>, vector<1x16x16xbf16>, vector<1x16x16xf32> -> vector<1x16x16xf32>
    "tpu.trace_stop"() : () -> ()
    %96 = vector.broadcast %0 : vector<1x1x16xf32> to vector<1x16x16xf32>
    %97 = arith.addf %95, %96 : vector<1x16x16xf32>
    %cst_24 = arith.constant dense<0xFF800000> : vector<1x16xf32>
    %98 = vector.multi_reduction <maximumf>, %97, %cst_24 [2] : vector<1x16x16xf32> to vector<1x16xf32>
    %99 = vector.shape_cast %98 : vector<1x16xf32> to vector<1x16x1xf32>
    %100 = vector.broadcast %99 : vector<1x16x1xf32> to vector<1x16x16xf32>
    %101 = arith.subf %97, %100 : vector<1x16x16xf32>
    %102 = math.exp %101 : vector<1x16x16xf32>
    %cst_25 = arith.constant dense<0.000000e+00> : vector<1x16xf32>
    %103 = vector.multi_reduction <add>, %102, %cst_25 [2] : vector<1x16x16xf32> to vector<1x16xf32>
    %104 = vector.shape_cast %103 : vector<1x16xf32> to vector<1x16x1xf32>
    %105 = tpu.reciprocal %104 {approx = true} : vector<1x16x1xf32> -> vector<1x16x1xf32>
    %106 = vector.broadcast %105 : vector<1x16x1xf32> to vector<1x16x16xf32>
    %107 = arith.mulf %102, %106 : vector<1x16x16xf32>
    %108 = arith.truncf %107 : vector<1x16x16xf32> to vector<1x16x16xbf16>
    "tpu.trace_start"() <{level = 10 : i32, message = "bqk,bke->bqe"}> : () -> ()
    %cst_26 = arith.constant dense<0.000000e+00> : vector<1x16x64xf32>
    %109 = tpu.matmul %108, %94, %cst_26 {dimension_numbers = #tpu.dot_dimension_numbers<[2], [1], [1], [2], [0, 0, 0, 1, 1, 2], [0], [0]>} : vector<1x16x16xbf16>, vector<1x16x64xbf16>, vector<1x16x64xf32> -> vector<1x16x64xf32>
    "tpu.trace_stop"() : () -> ()
    %110 = arith.addf %85, %109 : vector<1x16x64xf32>
    %111 = vector.shape_cast %110 : vector<1x16x64xf32> to vector<16x64xf32>
    %c0_27 = arith.constant 0 : index
    %c0_28 = arith.constant 0 : index
    %c0_29 = arith.constant 0 : index
    %112 = vector.load %arg5[%c0_27, %c0_28, %c0_29] : memref<2x1x64xf32, #tpu.memory_space<vmem>>, vector<1x1x64xf32>
    %113 = vector.shape_cast %112 : vector<1x1x64xf32> to vector<1x64xf32>
    %114 = vector.broadcast %113 : vector<1x64xf32> to vector<16x64xf32>
    %115 = arith.addf %111, %114 : vector<16x64xf32>
    %116 = arith.addf %3, %115 : vector<16x64xf32>
    %c0_30 = arith.constant 0 : index
    %c0_31 = arith.constant 0 : index
    %c0_32 = arith.constant 0 : index
    %117 = vector.load %arg6[%c0_30, %c0_31, %c0_32] : memref<2x1x64xf32, #tpu.memory_space<vmem>>, vector<1x1x64xf32>
    %118 = vector.shape_cast %117 : vector<1x1x64xf32> to vector<1x64xf32>
    %c0_33 = arith.constant 0 : index
    %c0_34 = arith.constant 0 : index
    %c0_35 = arith.constant 0 : index
    %119 = vector.load %arg7[%c0_33, %c0_34, %c0_35] : memref<2x1x64xf32, #tpu.memory_space<vmem>>, vector<1x1x64xf32>
    %120 = vector.shape_cast %119 : vector<1x1x64xf32> to vector<1x64xf32>
    %cst_36 = arith.constant dense<0.000000e+00> : vector<16xf32>
    %121 = vector.multi_reduction <add>, %116, %cst_36 [1] : vector<16x64xf32> to vector<16xf32>
    %122 = vector.shape_cast %121 : vector<16xf32> to vector<16x1xf32>
    %cst_37 = arith.constant 6.400000e+01 : f32
    %123 = vector.broadcast %cst_37 : f32 to vector<16x1xf32>
    %124 = arith.divf %122, %123 : vector<16x1xf32>
    %125 = vector.broadcast %124 : vector<16x1xf32> to vector<16x64xf32>
    %126 = arith.subf %116, %125 : vector<16x64xf32>
    %127 = arith.mulf %126, %126 : vector<16x64xf32>
    %cst_38 = arith.constant dense<0.000000e+00> : vector<16xf32>
    %128 = vector.multi_reduction <add>, %127, %cst_38 [1] : vector<16x64xf32> to vector<16xf32>
    %129 = vector.shape_cast %128 : vector<16xf32> to vector<16x1xf32>
    %cst_39 = arith.constant 6.400000e+01 : f32
    %130 = vector.broadcast %cst_39 : f32 to vector<16x1xf32>
    %131 = arith.divf %129, %130 : vector<16x1xf32>
    %132 = vector.broadcast %124 : vector<16x1xf32> to vector<16x64xf32>
    %133 = arith.subf %116, %132 : vector<16x64xf32>
    %cst_40 = arith.constant 9.99999974E-6 : f32
    %134 = vector.broadcast %cst_40 : f32 to vector<16x1xf32>
    %135 = arith.addf %131, %134 : vector<16x1xf32>
    %136 = math.rsqrt %135 : vector<16x1xf32>
    %137 = vector.broadcast %136 : vector<16x1xf32> to vector<16x64xf32>
    %138 = arith.mulf %133, %137 : vector<16x64xf32>
    %139 = vector.broadcast %118 : vector<1x64xf32> to vector<16x64xf32>
    %140 = arith.mulf %138, %139 : vector<16x64xf32>
    %141 = vector.broadcast %120 : vector<1x64xf32> to vector<16x64xf32>
    %142 = arith.addf %140, %141 : vector<16x64xf32>
    %143 = arith.truncf %142 : vector<16x64xf32> to vector<16x64xbf16>
    %c0_41 = arith.constant 0 : index
    %c0_42 = arith.constant 0 : index
    %c0_43 = arith.constant 0 : index
    %144 = vector.load %arg8[%c0_41, %c0_42, %c0_43] : memref<2x64x256xbf16, #tpu.memory_space<vmem>>, vector<1x64x256xbf16>
    %145 = vector.shape_cast %144 : vector<1x64x256xbf16> to vector<64x256xbf16>
    %cst_44 = arith.constant dense<0.000000e+00> : vector<16x256xf32>
    %146 = tpu.matmul %143, %145, %cst_44 {dimension_numbers = #tpu.dot_dimension_numbers<[1], [0], [0], [1], [0, 0, 1, 1], [], []>} : vector<16x64xbf16>, vector<64x256xbf16>, vector<16x256xf32> -> vector<16x256xf32>
    %c0_45 = arith.constant 0 : index
    %c0_46 = arith.constant 0 : index
    %c0_47 = arith.constant 0 : index
    %147 = vector.load %arg9[%c0_45, %c0_46, %c0_47] : memref<2x1x256xf32, #tpu.memory_space<vmem>>, vector<1x1x256xf32>
    %148 = vector.shape_cast %147 : vector<1x1x256xf32> to vector<1x256xf32>
    %149 = vector.broadcast %148 : vector<1x256xf32> to vector<16x256xf32>
    %150 = arith.addf %146, %149 : vector<16x256xf32>
    %cst_48 = arith.constant 0.000000e+00 : f32
    %151 = vector.broadcast %cst_48 : f32 to vector<16x256xf32>
    %152 = arith.maximumf %150, %151 : vector<16x256xf32>
    %153 = arith.truncf %152 : vector<16x256xf32> to vector<16x256xbf16>
    %c0_49 = arith.constant 0 : index
    %c0_50 = arith.constant 0 : index
    %c0_51 = arith.constant 0 : index
    %154 = vector.load %arg10[%c0_49, %c0_50, %c0_51] : memref<2x256x64xbf16, #tpu.memory_space<vmem>>, vector<1x256x64xbf16>
    %155 = vector.shape_cast %154 : vector<1x256x64xbf16> to vector<256x64xbf16>
    %cst_52 = arith.constant dense<0.000000e+00> : vector<16x64xf32>
    %156 = tpu.matmul %153, %155, %cst_52 {dimension_numbers = #tpu.dot_dimension_numbers<[1], [0], [0], [1], [0, 0, 1, 1], [], []>} : vector<16x256xbf16>, vector<256x64xbf16>, vector<16x64xf32> -> vector<16x64xf32>
    %c0_53 = arith.constant 0 : index
    %c0_54 = arith.constant 0 : index
    %c0_55 = arith.constant 0 : index
    %157 = vector.load %arg11[%c0_53, %c0_54, %c0_55] : memref<2x1x64xf32, #tpu.memory_space<vmem>>, vector<1x1x64xf32>
    %158 = vector.shape_cast %157 : vector<1x1x64xf32> to vector<1x64xf32>
    %159 = vector.broadcast %158 : vector<1x64xf32> to vector<16x64xf32>
    %160 = arith.addf %156, %159 : vector<16x64xf32>
    %161 = arith.addf %142, %160 : vector<16x64xf32>
    %c0_56 = arith.constant 0 : index
    %c0_57 = arith.constant 0 : index
    %c0_58 = arith.constant 0 : index
    %162 = vector.load %arg12[%c0_56, %c0_57, %c0_58] : memref<2x1x64xf32, #tpu.memory_space<vmem>>, vector<1x1x64xf32>
    %163 = vector.shape_cast %162 : vector<1x1x64xf32> to vector<1x64xf32>
    %c0_59 = arith.constant 0 : index
    %c0_60 = arith.constant 0 : index
    %c0_61 = arith.constant 0 : index
    %164 = vector.load %arg13[%c0_59, %c0_60, %c0_61] : memref<2x1x64xf32, #tpu.memory_space<vmem>>, vector<1x1x64xf32>
    %165 = vector.shape_cast %164 : vector<1x1x64xf32> to vector<1x64xf32>
    %cst_62 = arith.constant dense<0.000000e+00> : vector<16xf32>
    %166 = vector.multi_reduction <add>, %161, %cst_62 [1] : vector<16x64xf32> to vector<16xf32>
    %167 = vector.shape_cast %166 : vector<16xf32> to vector<16x1xf32>
    %cst_63 = arith.constant 6.400000e+01 : f32
    %168 = vector.broadcast %cst_63 : f32 to vector<16x1xf32>
    %169 = arith.divf %167, %168 : vector<16x1xf32>
    %170 = vector.broadcast %169 : vector<16x1xf32> to vector<16x64xf32>
    %171 = arith.subf %161, %170 : vector<16x64xf32>
    %172 = arith.mulf %171, %171 : vector<16x64xf32>
    %cst_64 = arith.constant dense<0.000000e+00> : vector<16xf32>
    %173 = vector.multi_reduction <add>, %172, %cst_64 [1] : vector<16x64xf32> to vector<16xf32>
    %174 = vector.shape_cast %173 : vector<16xf32> to vector<16x1xf32>
    %cst_65 = arith.constant 6.400000e+01 : f32
    %175 = vector.broadcast %cst_65 : f32 to vector<16x1xf32>
    %176 = arith.divf %174, %175 : vector<16x1xf32>
    %177 = vector.broadcast %169 : vector<16x1xf32> to vector<16x64xf32>
    %178 = arith.subf %161, %177 : vector<16x64xf32>
    %cst_66 = arith.constant 9.99999974E-6 : f32
    %179 = vector.broadcast %cst_66 : f32 to vector<16x1xf32>
    %180 = arith.addf %176, %179 : vector<16x1xf32>
    %181 = math.rsqrt %180 : vector<16x1xf32>
    %182 = vector.broadcast %181 : vector<16x1xf32> to vector<16x64xf32>
    %183 = arith.mulf %178, %182 : vector<16x64xf32>
    %184 = vector.broadcast %163 : vector<1x64xf32> to vector<16x64xf32>
    %185 = arith.mulf %183, %184 : vector<16x64xf32>
    %186 = vector.broadcast %165 : vector<1x64xf32> to vector<16x64xf32>
    %187 = arith.addf %185, %186 : vector<16x64xf32>
    %188 = arith.truncf %187 : vector<16x64xf32> to vector<16x64xbf16>
    %c1 = arith.constant 1 : index
    %c0_67 = arith.constant 0 : index
    %c0_68 = arith.constant 0 : index
    %189 = vector.load %arg3[%c1, %c0_67, %c0_68] : memref<2x64x384xbf16, #tpu.memory_space<vmem>>, vector<1x64x384xbf16>
    %190 = vector.shape_cast %189 : vector<1x64x384xbf16> to vector<64x384xbf16>
    %cst_69 = arith.constant dense<0.000000e+00> : vector<16x384xf32>
    %191 = tpu.matmul %188, %190, %cst_69 {dimension_numbers = #tpu.dot_dimension_numbers<[1], [0], [0], [1], [0, 0, 1, 1], [], []>} : vector<16x64xbf16>, vector<64x384xbf16>, vector<16x384xf32> -> vector<16x384xf32>
    %c1_70 = arith.constant 1 : index
    %c0_71 = arith.constant 0 : index
    %c0_72 = arith.constant 0 : index
    %192 = vector.load %arg4[%c1_70, %c0_71, %c0_72] : memref<2x1x384xf32, #tpu.memory_space<vmem>>, vector<1x1x384xf32>
    %193 = vector.shape_cast %192 : vector<1x1x384xf32> to vector<1x384xf32>
    %194 = vector.broadcast %193 : vector<1x384xf32> to vector<16x384xf32>
    %195 = arith.addf %191, %194 : vector<16x384xf32>
    %196 = vector.extract_strided_slice %195 {offsets = [0, 0], sizes = [16, 16], strides = [1, 1]} : vector<16x384xf32> to vector<16x16xf32>
    %197 = vector.shape_cast %196 : vector<16x16xf32> to vector<1x16x16xf32>
    %198 = arith.truncf %197 : vector<1x16x16xf32> to vector<1x16x16xbf16>
    %199 = vector.extract_strided_slice %195 {offsets = [0, 64], sizes = [16, 16], strides = [1, 1]} : vector<16x384xf32> to vector<16x16xf32>
    %200 = vector.shape_cast %199 : vector<16x16xf32> to vector<1x16x16xf32>
    %201 = arith.truncf %200 : vector<1x16x16xf32> to vector<1x16x16xbf16>
    %202 = vector.extract_strided_slice %195 {offsets = [0, 128], sizes = [16, 64], strides = [1, 1]} : vector<16x384xf32> to vector<16x64xf32>
    %203 = vector.shape_cast %202 : vector<16x64xf32> to vector<1x16x64xf32>
    %204 = arith.truncf %203 : vector<1x16x64xf32> to vector<1x16x64xbf16>
    "tpu.trace_start"() <{level = 10 : i32, message = "bqd,bkd->bqk"}> : () -> ()
    %cst_73 = arith.constant dense<0.000000e+00> : vector<1x16x16xf32>
    %205 = tpu.matmul %198, %201, %cst_73 {dimension_numbers = #tpu.dot_dimension_numbers<[2], [2], [1], [1], [0, 0, 0, 1, 1, 1], [0], [0]>} : vector<1x16x16xbf16>, vector<1x16x16xbf16>, vector<1x16x16xf32> -> vector<1x16x16xf32>
    "tpu.trace_stop"() : () -> ()
    %206 = vector.broadcast %0 : vector<1x1x16xf32> to vector<1x16x16xf32>
    %207 = arith.addf %205, %206 : vector<1x16x16xf32>
    %cst_74 = arith.constant dense<0xFF800000> : vector<1x16xf32>
    %208 = vector.multi_reduction <maximumf>, %207, %cst_74 [2] : vector<1x16x16xf32> to vector<1x16xf32>
    %209 = vector.shape_cast %208 : vector<1x16xf32> to vector<1x16x1xf32>
    %210 = vector.broadcast %209 : vector<1x16x1xf32> to vector<1x16x16xf32>
    %211 = arith.subf %207, %210 : vector<1x16x16xf32>
    %212 = math.exp %211 : vector<1x16x16xf32>
    %cst_75 = arith.constant dense<0.000000e+00> : vector<1x16xf32>
    %213 = vector.multi_reduction <add>, %212, %cst_75 [2] : vector<1x16x16xf32> to vector<1x16xf32>
    %214 = vector.shape_cast %213 : vector<1x16xf32> to vector<1x16x1xf32>
    %215 = tpu.reciprocal %214 {approx = true} : vector<1x16x1xf32> -> vector<1x16x1xf32>
    %216 = vector.broadcast %215 : vector<1x16x1xf32> to vector<1x16x16xf32>
    %217 = arith.mulf %212, %216 : vector<1x16x16xf32>
    %218 = arith.truncf %217 : vector<1x16x16xf32> to vector<1x16x16xbf16>
    "tpu.trace_start"() <{level = 10 : i32, message = "bqk,bke->bqe"}> : () -> ()
    %cst_76 = arith.constant dense<0.000000e+00> : vector<1x16x64xf32>
    %219 = tpu.matmul %218, %204, %cst_76 {dimension_numbers = #tpu.dot_dimension_numbers<[2], [1], [1], [2], [0, 0, 0, 1, 1, 2], [0], [0]>} : vector<1x16x16xbf16>, vector<1x16x64xbf16>, vector<1x16x64xf32> -> vector<1x16x64xf32>
    "tpu.trace_stop"() : () -> ()
    %220 = vector.extract_strided_slice %195 {offsets = [0, 16], sizes = [16, 16], strides = [1, 1]} : vector<16x384xf32> to vector<16x16xf32>
    %221 = vector.shape_cast %220 : vector<16x16xf32> to vector<1x16x16xf32>
    %222 = arith.truncf %221 : vector<1x16x16xf32> to vector<1x16x16xbf16>
    %223 = vector.extract_strided_slice %195 {offsets = [0, 80], sizes = [16, 16], strides = [1, 1]} : vector<16x384xf32> to vector<16x16xf32>
    %224 = vector.shape_cast %223 : vector<16x16xf32> to vector<1x16x16xf32>
    %225 = arith.truncf %224 : vector<1x16x16xf32> to vector<1x16x16xbf16>
    %226 = vector.extract_strided_slice %195 {offsets = [0, 192], sizes = [16, 64], strides = [1, 1]} : vector<16x384xf32> to vector<16x64xf32>
    %227 = vector.shape_cast %226 : vector<16x64xf32> to vector<1x16x64xf32>
    %228 = arith.truncf %227 : vector<1x16x64xf32> to vector<1x16x64xbf16>
    "tpu.trace_start"() <{level = 10 : i32, message = "bqd,bkd->bqk"}> : () -> ()
    %cst_77 = arith.constant dense<0.000000e+00> : vector<1x16x16xf32>
    %229 = tpu.matmul %222, %225, %cst_77 {dimension_numbers = #tpu.dot_dimension_numbers<[2], [2], [1], [1], [0, 0, 0, 1, 1, 1], [0], [0]>} : vector<1x16x16xbf16>, vector<1x16x16xbf16>, vector<1x16x16xf32> -> vector<1x16x16xf32>
    "tpu.trace_stop"() : () -> ()
    %230 = vector.broadcast %0 : vector<1x1x16xf32> to vector<1x16x16xf32>
    %231 = arith.addf %229, %230 : vector<1x16x16xf32>
    %cst_78 = arith.constant dense<0xFF800000> : vector<1x16xf32>
    %232 = vector.multi_reduction <maximumf>, %231, %cst_78 [2] : vector<1x16x16xf32> to vector<1x16xf32>
    %233 = vector.shape_cast %232 : vector<1x16xf32> to vector<1x16x1xf32>
    %234 = vector.broadcast %233 : vector<1x16x1xf32> to vector<1x16x16xf32>
    %235 = arith.subf %231, %234 : vector<1x16x16xf32>
    %236 = math.exp %235 : vector<1x16x16xf32>
    %cst_79 = arith.constant dense<0.000000e+00> : vector<1x16xf32>
    %237 = vector.multi_reduction <add>, %236, %cst_79 [2] : vector<1x16x16xf32> to vector<1x16xf32>
    %238 = vector.shape_cast %237 : vector<1x16xf32> to vector<1x16x1xf32>
    %239 = tpu.reciprocal %238 {approx = true} : vector<1x16x1xf32> -> vector<1x16x1xf32>
    %240 = vector.broadcast %239 : vector<1x16x1xf32> to vector<1x16x16xf32>
    %241 = arith.mulf %236, %240 : vector<1x16x16xf32>
    %242 = arith.truncf %241 : vector<1x16x16xf32> to vector<1x16x16xbf16>
    "tpu.trace_start"() <{level = 10 : i32, message = "bqk,bke->bqe"}> : () -> ()
    %cst_80 = arith.constant dense<0.000000e+00> : vector<1x16x64xf32>
    %243 = tpu.matmul %242, %228, %cst_80 {dimension_numbers = #tpu.dot_dimension_numbers<[2], [1], [1], [2], [0, 0, 0, 1, 1, 2], [0], [0]>} : vector<1x16x16xbf16>, vector<1x16x64xbf16>, vector<1x16x64xf32> -> vector<1x16x64xf32>
    "tpu.trace_stop"() : () -> ()
    %244 = arith.addf %219, %243 : vector<1x16x64xf32>
    %245 = vector.extract_strided_slice %195 {offsets = [0, 32], sizes = [16, 16], strides = [1, 1]} : vector<16x384xf32> to vector<16x16xf32>
    %246 = vector.shape_cast %245 : vector<16x16xf32> to vector<1x16x16xf32>
    %247 = arith.truncf %246 : vector<1x16x16xf32> to vector<1x16x16xbf16>
    %248 = vector.extract_strided_slice %195 {offsets = [0, 96], sizes = [16, 16], strides = [1, 1]} : vector<16x384xf32> to vector<16x16xf32>
    %249 = vector.shape_cast %248 : vector<16x16xf32> to vector<1x16x16xf32>
    %250 = arith.truncf %249 : vector<1x16x16xf32> to vector<1x16x16xbf16>
    %251 = vector.extract_strided_slice %195 {offsets = [0, 256], sizes = [16, 64], strides = [1, 1]} : vector<16x384xf32> to vector<16x64xf32>
    %252 = vector.shape_cast %251 : vector<16x64xf32> to vector<1x16x64xf32>
    %253 = arith.truncf %252 : vector<1x16x64xf32> to vector<1x16x64xbf16>
    "tpu.trace_start"() <{level = 10 : i32, message = "bqd,bkd->bqk"}> : () -> ()
    %cst_81 = arith.constant dense<0.000000e+00> : vector<1x16x16xf32>
    %254 = tpu.matmul %247, %250, %cst_81 {dimension_numbers = #tpu.dot_dimension_numbers<[2], [2], [1], [1], [0, 0, 0, 1, 1, 1], [0], [0]>} : vector<1x16x16xbf16>, vector<1x16x16xbf16>, vector<1x16x16xf32> -> vector<1x16x16xf32>
    "tpu.trace_stop"() : () -> ()
    %255 = vector.broadcast %0 : vector<1x1x16xf32> to vector<1x16x16xf32>
    %256 = arith.addf %254, %255 : vector<1x16x16xf32>
    %cst_82 = arith.constant dense<0xFF800000> : vector<1x16xf32>
    %257 = vector.multi_reduction <maximumf>, %256, %cst_82 [2] : vector<1x16x16xf32> to vector<1x16xf32>
    %258 = vector.shape_cast %257 : vector<1x16xf32> to vector<1x16x1xf32>
    %259 = vector.broadcast %258 : vector<1x16x1xf32> to vector<1x16x16xf32>
    %260 = arith.subf %256, %259 : vector<1x16x16xf32>
    %261 = math.exp %260 : vector<1x16x16xf32>
    %cst_83 = arith.constant dense<0.000000e+00> : vector<1x16xf32>
    %262 = vector.multi_reduction <add>, %261, %cst_83 [2] : vector<1x16x16xf32> to vector<1x16xf32>
    %263 = vector.shape_cast %262 : vector<1x16xf32> to vector<1x16x1xf32>
    %264 = tpu.reciprocal %263 {approx = true} : vector<1x16x1xf32> -> vector<1x16x1xf32>
    %265 = vector.broadcast %264 : vector<1x16x1xf32> to vector<1x16x16xf32>
    %266 = arith.mulf %261, %265 : vector<1x16x16xf32>
    %267 = arith.truncf %266 : vector<1x16x16xf32> to vector<1x16x16xbf16>
    "tpu.trace_start"() <{level = 10 : i32, message = "bqk,bke->bqe"}> : () -> ()
    %cst_84 = arith.constant dense<0.000000e+00> : vector<1x16x64xf32>
    %268 = tpu.matmul %267, %253, %cst_84 {dimension_numbers = #tpu.dot_dimension_numbers<[2], [1], [1], [2], [0, 0, 0, 1, 1, 2], [0], [0]>} : vector<1x16x16xbf16>, vector<1x16x64xbf16>, vector<1x16x64xf32> -> vector<1x16x64xf32>
    "tpu.trace_stop"() : () -> ()
    %269 = arith.addf %244, %268 : vector<1x16x64xf32>
    %270 = vector.extract_strided_slice %195 {offsets = [0, 48], sizes = [16, 16], strides = [1, 1]} : vector<16x384xf32> to vector<16x16xf32>
    %271 = vector.shape_cast %270 : vector<16x16xf32> to vector<1x16x16xf32>
    %272 = arith.truncf %271 : vector<1x16x16xf32> to vector<1x16x16xbf16>
    %273 = vector.extract_strided_slice %195 {offsets = [0, 112], sizes = [16, 16], strides = [1, 1]} : vector<16x384xf32> to vector<16x16xf32>
    %274 = vector.shape_cast %273 : vector<16x16xf32> to vector<1x16x16xf32>
    %275 = arith.truncf %274 : vector<1x16x16xf32> to vector<1x16x16xbf16>
    %276 = vector.extract_strided_slice %195 {offsets = [0, 320], sizes = [16, 64], strides = [1, 1]} : vector<16x384xf32> to vector<16x64xf32>
    %277 = vector.shape_cast %276 : vector<16x64xf32> to vector<1x16x64xf32>
    %278 = arith.truncf %277 : vector<1x16x64xf32> to vector<1x16x64xbf16>
    "tpu.trace_start"() <{level = 10 : i32, message = "bqd,bkd->bqk"}> : () -> ()
    %cst_85 = arith.constant dense<0.000000e+00> : vector<1x16x16xf32>
    %279 = tpu.matmul %272, %275, %cst_85 {dimension_numbers = #tpu.dot_dimension_numbers<[2], [2], [1], [1], [0, 0, 0, 1, 1, 1], [0], [0]>} : vector<1x16x16xbf16>, vector<1x16x16xbf16>, vector<1x16x16xf32> -> vector<1x16x16xf32>
    "tpu.trace_stop"() : () -> ()
    %280 = vector.broadcast %0 : vector<1x1x16xf32> to vector<1x16x16xf32>
    %281 = arith.addf %279, %280 : vector<1x16x16xf32>
    %cst_86 = arith.constant dense<0xFF800000> : vector<1x16xf32>
    %282 = vector.multi_reduction <maximumf>, %281, %cst_86 [2] : vector<1x16x16xf32> to vector<1x16xf32>
    %283 = vector.shape_cast %282 : vector<1x16xf32> to vector<1x16x1xf32>
    %284 = vector.broadcast %283 : vector<1x16x1xf32> to vector<1x16x16xf32>
    %285 = arith.subf %281, %284 : vector<1x16x16xf32>
    %286 = math.exp %285 : vector<1x16x16xf32>
    %cst_87 = arith.constant dense<0.000000e+00> : vector<1x16xf32>
    %287 = vector.multi_reduction <add>, %286, %cst_87 [2] : vector<1x16x16xf32> to vector<1x16xf32>
    %288 = vector.shape_cast %287 : vector<1x16xf32> to vector<1x16x1xf32>
    %289 = tpu.reciprocal %288 {approx = true} : vector<1x16x1xf32> -> vector<1x16x1xf32>
    %290 = vector.broadcast %289 : vector<1x16x1xf32> to vector<1x16x16xf32>
    %291 = arith.mulf %286, %290 : vector<1x16x16xf32>
    %292 = arith.truncf %291 : vector<1x16x16xf32> to vector<1x16x16xbf16>
    "tpu.trace_start"() <{level = 10 : i32, message = "bqk,bke->bqe"}> : () -> ()
    %cst_88 = arith.constant dense<0.000000e+00> : vector<1x16x64xf32>
    %293 = tpu.matmul %292, %278, %cst_88 {dimension_numbers = #tpu.dot_dimension_numbers<[2], [1], [1], [2], [0, 0, 0, 1, 1, 2], [0], [0]>} : vector<1x16x16xbf16>, vector<1x16x64xbf16>, vector<1x16x64xf32> -> vector<1x16x64xf32>
    "tpu.trace_stop"() : () -> ()
    %294 = arith.addf %269, %293 : vector<1x16x64xf32>
    %295 = vector.shape_cast %294 : vector<1x16x64xf32> to vector<16x64xf32>
    %c1_89 = arith.constant 1 : index
    %c0_90 = arith.constant 0 : index
    %c0_91 = arith.constant 0 : index
    %296 = vector.load %arg5[%c1_89, %c0_90, %c0_91] : memref<2x1x64xf32, #tpu.memory_space<vmem>>, vector<1x1x64xf32>
    %297 = vector.shape_cast %296 : vector<1x1x64xf32> to vector<1x64xf32>
    %298 = vector.broadcast %297 : vector<1x64xf32> to vector<16x64xf32>
    %299 = arith.addf %295, %298 : vector<16x64xf32>
    %300 = arith.addf %187, %299 : vector<16x64xf32>
    %c1_92 = arith.constant 1 : index
    %c0_93 = arith.constant 0 : index
    %c0_94 = arith.constant 0 : index
    %301 = vector.load %arg6[%c1_92, %c0_93, %c0_94] : memref<2x1x64xf32, #tpu.memory_space<vmem>>, vector<1x1x64xf32>
    %302 = vector.shape_cast %301 : vector<1x1x64xf32> to vector<1x64xf32>
    %c1_95 = arith.constant 1 : index
    %c0_96 = arith.constant 0 : index
    %c0_97 = arith.constant 0 : index
    %303 = vector.load %arg7[%c1_95, %c0_96, %c0_97] : memref<2x1x64xf32, #tpu.memory_space<vmem>>, vector<1x1x64xf32>
    %304 = vector.shape_cast %303 : vector<1x1x64xf32> to vector<1x64xf32>
    %cst_98 = arith.constant dense<0.000000e+00> : vector<16xf32>
    %305 = vector.multi_reduction <add>, %300, %cst_98 [1] : vector<16x64xf32> to vector<16xf32>
    %306 = vector.shape_cast %305 : vector<16xf32> to vector<16x1xf32>
    %cst_99 = arith.constant 6.400000e+01 : f32
    %307 = vector.broadcast %cst_99 : f32 to vector<16x1xf32>
    %308 = arith.divf %306, %307 : vector<16x1xf32>
    %309 = vector.broadcast %308 : vector<16x1xf32> to vector<16x64xf32>
    %310 = arith.subf %300, %309 : vector<16x64xf32>
    %311 = arith.mulf %310, %310 : vector<16x64xf32>
    %cst_100 = arith.constant dense<0.000000e+00> : vector<16xf32>
    %312 = vector.multi_reduction <add>, %311, %cst_100 [1] : vector<16x64xf32> to vector<16xf32>
    %313 = vector.shape_cast %312 : vector<16xf32> to vector<16x1xf32>
    %cst_101 = arith.constant 6.400000e+01 : f32
    %314 = vector.broadcast %cst_101 : f32 to vector<16x1xf32>
    %315 = arith.divf %313, %314 : vector<16x1xf32>
    %316 = vector.broadcast %308 : vector<16x1xf32> to vector<16x64xf32>
    %317 = arith.subf %300, %316 : vector<16x64xf32>
    %cst_102 = arith.constant 9.99999974E-6 : f32
    %318 = vector.broadcast %cst_102 : f32 to vector<16x1xf32>
    %319 = arith.addf %315, %318 : vector<16x1xf32>
    %320 = math.rsqrt %319 : vector<16x1xf32>
    %321 = vector.broadcast %320 : vector<16x1xf32> to vector<16x64xf32>
    %322 = arith.mulf %317, %321 : vector<16x64xf32>
    %323 = vector.broadcast %302 : vector<1x64xf32> to vector<16x64xf32>
    %324 = arith.mulf %322, %323 : vector<16x64xf32>
    %325 = vector.broadcast %304 : vector<1x64xf32> to vector<16x64xf32>
    %326 = arith.addf %324, %325 : vector<16x64xf32>
    %327 = arith.truncf %326 : vector<16x64xf32> to vector<16x64xbf16>
    %c1_103 = arith.constant 1 : index
    %c0_104 = arith.constant 0 : index
    %c0_105 = arith.constant 0 : index
    %328 = vector.load %arg8[%c1_103, %c0_104, %c0_105] : memref<2x64x256xbf16, #tpu.memory_space<vmem>>, vector<1x64x256xbf16>
    %329 = vector.shape_cast %328 : vector<1x64x256xbf16> to vector<64x256xbf16>
    %cst_106 = arith.constant dense<0.000000e+00> : vector<16x256xf32>
    %330 = tpu.matmul %327, %329, %cst_106 {dimension_numbers = #tpu.dot_dimension_numbers<[1], [0], [0], [1], [0, 0, 1, 1], [], []>} : vector<16x64xbf16>, vector<64x256xbf16>, vector<16x256xf32> -> vector<16x256xf32>
    %c1_107 = arith.constant 1 : index
    %c0_108 = arith.constant 0 : index
    %c0_109 = arith.constant 0 : index
    %331 = vector.load %arg9[%c1_107, %c0_108, %c0_109] : memref<2x1x256xf32, #tpu.memory_space<vmem>>, vector<1x1x256xf32>
    %332 = vector.shape_cast %331 : vector<1x1x256xf32> to vector<1x256xf32>
    %333 = vector.broadcast %332 : vector<1x256xf32> to vector<16x256xf32>
    %334 = arith.addf %330, %333 : vector<16x256xf32>
    %cst_110 = arith.constant 0.000000e+00 : f32
    %335 = vector.broadcast %cst_110 : f32 to vector<16x256xf32>
    %336 = arith.maximumf %334, %335 : vector<16x256xf32>
    %337 = arith.truncf %336 : vector<16x256xf32> to vector<16x256xbf16>
    %c1_111 = arith.constant 1 : index
    %c0_112 = arith.constant 0 : index
    %c0_113 = arith.constant 0 : index
    %338 = vector.load %arg10[%c1_111, %c0_112, %c0_113] : memref<2x256x64xbf16, #tpu.memory_space<vmem>>, vector<1x256x64xbf16>
    %339 = vector.shape_cast %338 : vector<1x256x64xbf16> to vector<256x64xbf16>
    %cst_114 = arith.constant dense<0.000000e+00> : vector<16x64xf32>
    %340 = tpu.matmul %337, %339, %cst_114 {dimension_numbers = #tpu.dot_dimension_numbers<[1], [0], [0], [1], [0, 0, 1, 1], [], []>} : vector<16x256xbf16>, vector<256x64xbf16>, vector<16x64xf32> -> vector<16x64xf32>
    %c1_115 = arith.constant 1 : index
    %c0_116 = arith.constant 0 : index
    %c0_117 = arith.constant 0 : index
    %341 = vector.load %arg11[%c1_115, %c0_116, %c0_117] : memref<2x1x64xf32, #tpu.memory_space<vmem>>, vector<1x1x64xf32>
    %342 = vector.shape_cast %341 : vector<1x1x64xf32> to vector<1x64xf32>
    %343 = vector.broadcast %342 : vector<1x64xf32> to vector<16x64xf32>
    %344 = arith.addf %340, %343 : vector<16x64xf32>
    %345 = arith.addf %326, %344 : vector<16x64xf32>
    %c1_118 = arith.constant 1 : index
    %c0_119 = arith.constant 0 : index
    %c0_120 = arith.constant 0 : index
    %346 = vector.load %arg12[%c1_118, %c0_119, %c0_120] : memref<2x1x64xf32, #tpu.memory_space<vmem>>, vector<1x1x64xf32>
    %347 = vector.shape_cast %346 : vector<1x1x64xf32> to vector<1x64xf32>
    %c1_121 = arith.constant 1 : index
    %c0_122 = arith.constant 0 : index
    %c0_123 = arith.constant 0 : index
    %348 = vector.load %arg13[%c1_121, %c0_122, %c0_123] : memref<2x1x64xf32, #tpu.memory_space<vmem>>, vector<1x1x64xf32>
    %349 = vector.shape_cast %348 : vector<1x1x64xf32> to vector<1x64xf32>
    %cst_124 = arith.constant dense<0.000000e+00> : vector<16xf32>
    %350 = vector.multi_reduction <add>, %345, %cst_124 [1] : vector<16x64xf32> to vector<16xf32>
    %351 = vector.shape_cast %350 : vector<16xf32> to vector<16x1xf32>
    %cst_125 = arith.constant 6.400000e+01 : f32
    %352 = vector.broadcast %cst_125 : f32 to vector<16x1xf32>
    %353 = arith.divf %351, %352 : vector<16x1xf32>
    %354 = vector.broadcast %353 : vector<16x1xf32> to vector<16x64xf32>
    %355 = arith.subf %345, %354 : vector<16x64xf32>
    %356 = arith.mulf %355, %355 : vector<16x64xf32>
    %cst_126 = arith.constant dense<0.000000e+00> : vector<16xf32>
    %357 = vector.multi_reduction <add>, %356, %cst_126 [1] : vector<16x64xf32> to vector<16xf32>
    %358 = vector.shape_cast %357 : vector<16xf32> to vector<16x1xf32>
    %cst_127 = arith.constant 6.400000e+01 : f32
    %359 = vector.broadcast %cst_127 : f32 to vector<16x1xf32>
    %360 = arith.divf %358, %359 : vector<16x1xf32>
    %361 = vector.broadcast %353 : vector<16x1xf32> to vector<16x64xf32>
    %362 = arith.subf %345, %361 : vector<16x64xf32>
    %cst_128 = arith.constant 9.99999974E-6 : f32
    %363 = vector.broadcast %cst_128 : f32 to vector<16x1xf32>
    %364 = arith.addf %360, %363 : vector<16x1xf32>
    %365 = math.rsqrt %364 : vector<16x1xf32>
    %366 = vector.broadcast %365 : vector<16x1xf32> to vector<16x64xf32>
    %367 = arith.mulf %362, %366 : vector<16x64xf32>
    %368 = vector.broadcast %347 : vector<1x64xf32> to vector<16x64xf32>
    %369 = arith.mulf %367, %368 : vector<16x64xf32>
    %370 = vector.broadcast %349 : vector<1x64xf32> to vector<16x64xf32>
    %371 = arith.addf %369, %370 : vector<16x64xf32>
    %372 = vector.shape_cast %371 : vector<16x64xf32> to vector<1x16x64xf32>
    %373 = vector.extract_strided_slice %372 {offsets = [0, 0, 0], sizes = [1, 1, 64], strides = [1, 1, 1]} : vector<1x16x64xf32> to vector<1x1x64xf32>
    %374 = vector.shape_cast %373 : vector<1x1x64xf32> to vector<1x64xf32>
    %375 = arith.truncf %374 : vector<1x64xf32> to vector<1x64xbf16>
    %c0_129 = arith.constant 0 : index
    %c0_130 = arith.constant 0 : index
    %376 = vector.load %arg14[%c0_129, %c0_130] : memref<64x128xbf16, #tpu.memory_space<vmem>>, vector<64x128xbf16>
    %cst_131 = arith.constant dense<0.000000e+00> : vector<1x128xf32>
    %377 = tpu.matmul %375, %376, %cst_131 {dimension_numbers = #tpu.dot_dimension_numbers<[1], [0], [0], [1], [0, 0, 1, 1], [], []>} : vector<1x64xbf16>, vector<64x128xbf16>, vector<1x128xf32> -> vector<1x128xf32>
    %c0_132 = arith.constant 0 : index
    %c0_133 = arith.constant 0 : index
    %378 = vector.load %arg15[%c0_132, %c0_133] : memref<1x128xf32, #tpu.memory_space<vmem>>, vector<1x128xf32>
    %379 = arith.addf %377, %378 : vector<1x128xf32>
    %c0_134 = arith.constant 0 : index
    %c0_135 = arith.constant 0 : index
    %c0_136 = arith.constant 0 : index
    %380 = vector.load %arg16[%c0_134, %c0_135, %c0_136] : memref<1x1x128xf32, #tpu.memory_space<vmem>>, vector<1x1x128xf32>
    %381 = vector.shape_cast %380 : vector<1x1x128xf32> to vector<1x128xf32>
    %382 = vector.shape_cast %379 : vector<1x128xf32> to vector<1x1x128xf32>
    tpu.vector_store %arg16[%c0_134, %c0_135, %c0_136], %382 {strides = array<i32>} : memref<1x1x128xf32, #tpu.memory_space<vmem>>, vector<1x1x128xf32>,
    return
  }
  func.func @transform_0(%arg0: i32) -> (i32, i32, i32) {
    %c0_i32 = arith.constant 0 : i32
    %c0_i32_0 = arith.constant 0 : i32
    %c0_i32_1 = arith.constant 0 : i32
    return %arg0, %c0_i32, %c0_i32_0 : i32, i32, i32
  }
  func.func @transform_1(%arg0: i32) -> (i32, i32, i32) {
    %c0_i32 = arith.constant 0 : i32
    %c0_i32_0 = arith.constant 0 : i32
    %c0_i32_1 = arith.constant 0 : i32
    return %arg0, %c0_i32, %c0_i32_0 : i32, i32, i32
  }
  func.func @transform_2(%arg0: i32) -> (i32, i32, i32) {
    %c0_i32 = arith.constant 0 : i32
    %c0_i32_0 = arith.constant 0 : i32
    %c0_i32_1 = arith.constant 0 : i32
    %c0_i32_2 = arith.constant 0 : i32
    return %c0_i32, %c0_i32_0, %c0_i32_1 : i32, i32, i32
  }
  func.func @transform_3(%arg0: i32) -> (i32, i32, i32) {
    %c0_i32 = arith.constant 0 : i32
    %c0_i32_0 = arith.constant 0 : i32
    %c0_i32_1 = arith.constant 0 : i32
    %c0_i32_2 = arith.constant 0 : i32
    return %c0_i32, %c0_i32_0, %c0_i32_1 : i32, i32, i32
  }
  func.func @transform_4(%arg0: i32) -> (i32, i32, i32) {
    %c0_i32 = arith.constant 0 : i32
    %c0_i32_0 = arith.constant 0 : i32
    %c0_i32_1 = arith.constant 0 : i32
    %c0_i32_2 = arith.constant 0 : i32
    return %c0_i32, %c0_i32_0, %c0_i32_1 : i32, i32, i32
  }
  func.func @transform_5(%arg0: i32) -> (i32, i32, i32) {
    %c0_i32 = arith.constant 0 : i32
    %c0_i32_0 = arith.constant 0 : i32
    %c0_i32_1 = arith.constant 0 : i32
    %c0_i32_2 = arith.constant 0 : i32
    return %c0_i32, %c0_i32_0, %c0_i32_1 : i32, i32, i32
  }
  func.func @transform_6(%arg0: i32) -> (i32, i32, i32) {
    %c0_i32 = arith.constant 0 : i32
    %c0_i32_0 = arith.constant 0 : i32
    %c0_i32_1 = arith.constant 0 : i32
    %c0_i32_2 = arith.constant 0 : i32
    return %c0_i32, %c0_i32_0, %c0_i32_1 : i32, i32, i32
  }
  func.func @transform_7(%arg0: i32) -> (i32, i32, i32) {
    %c0_i32 = arith.constant 0 : i32
    %c0_i32_0 = arith.constant 0 : i32
    %c0_i32_1 = arith.constant 0 : i32
    %c0_i32_2 = arith.constant 0 : i32
    return %c0_i32, %c0_i32_0, %c0_i32_1 : i32, i32, i32
  }
  func.func @transform_8(%arg0: i32) -> (i32, i32, i32) {
    %c0_i32 = arith.constant 0 : i32
    %c0_i32_0 = arith.constant 0 : i32
    %c0_i32_1 = arith.constant 0 : i32
    %c0_i32_2 = arith.constant 0 : i32
    return %c0_i32, %c0_i32_0, %c0_i32_1 : i32, i32, i32
  }
  func.func @transform_9(%arg0: i32) -> (i32, i32, i32) {
    %c0_i32 = arith.constant 0 : i32
    %c0_i32_0 = arith.constant 0 : i32
    %c0_i32_1 = arith.constant 0 : i32
    %c0_i32_2 = arith.constant 0 : i32
    return %c0_i32, %c0_i32_0, %c0_i32_1 : i32, i32, i32
  }
  func.func @transform_10(%arg0: i32) -> (i32, i32, i32) {
    %c0_i32 = arith.constant 0 : i32
    %c0_i32_0 = arith.constant 0 : i32
    %c0_i32_1 = arith.constant 0 : i32
    %c0_i32_2 = arith.constant 0 : i32
    return %c0_i32, %c0_i32_0, %c0_i32_1 : i32, i32, i32
  }
  func.func @transform_11(%arg0: i32) -> (i32, i32, i32) {
    %c0_i32 = arith.constant 0 : i32
    %c0_i32_0 = arith.constant 0 : i32
    %c0_i32_1 = arith.constant 0 : i32
    %c0_i32_2 = arith.constant 0 : i32
    return %c0_i32, %c0_i32_0, %c0_i32_1 : i32, i32, i32
  }
  func.func @transform_12(%arg0: i32) -> (i32, i32, i32) {
    %c0_i32 = arith.constant 0 : i32
    %c0_i32_0 = arith.constant 0 : i32
    %c0_i32_1 = arith.constant 0 : i32
    %c0_i32_2 = arith.constant 0 : i32
    return %c0_i32, %c0_i32_0, %c0_i32_1 : i32, i32, i32
  }
  func.func @transform_13(%arg0: i32) -> (i32, i32) {
    %c0_i32 = arith.constant 0 : i32
    %c0_i32_0 = arith.constant 0 : i32
    %c0_i32_1 = arith.constant 0 : i32
    return %c0_i32, %c0_i32_0 : i32, i32
  }
  func.func @transform_14(%arg0: i32) -> (i32, i32) {
    %c0_i32 = arith.constant 0 : i32
    %c0_i32_0 = arith.constant 0 : i32
    %c0_i32_1 = arith.constant 0 : i32
    return %c0_i32, %c0_i32_0 : i32, i32
  }
  func.func @transform_15(%arg0: i32) -> (i32, i32, i32) {
    %c0_i32 = arith.constant 0 : i32
    %c0_i32_0 = arith.constant 0 : i32
    %c0_i32_1 = arith.constant 0 : i32
    return %arg0, %c0_i32, %c0_i32_0 : i32, i32, i32
  }
}

</mosaic_0001>

<llo_original>
// kernel: neurotoken_transformer_forward.1
$region0: #{neurotoken_transformer_forward.1}
  #allocation0 [shape = 'u32[]', space=smem, size = 0x4, offset = 0x4, fixed_abs, tag = 'smem constant byte address 0x4 - core index']
  #allocation1 [shape = 'u32[144,128]{1,0:T(1,128)}', space=vmem, size = 0x12000, scoped, tag = 'internal scratch']
  %s0 = inlined_call_operand.hbm [shape: bf16[2,16,64], index: 0, kind: input, shape index: {}]
  %s1 = inlined_call_operand.hbm [shape: f32[2,1,16], index: 1, kind: input, shape index: {}]
  %s2 = inlined_call_operand.hbm [shape: bf16[2,64,384], index: 2, kind: input, shape index: {}]
  %s3 = inlined_call_operand.hbm [shape: f32[2,1,384], index: 3, kind: input, shape index: {}]
  %s4 = inlined_call_operand.hbm [shape: f32[2,1,64], index: 4, kind: input, shape index: {}]
  %s5 = inlined_call_operand.hbm [shape: f32[2,1,64], index: 5, kind: input, shape index: {}]
  %s6 = inlined_call_operand.hbm [shape: f32[2,1,64], index: 6, kind: input, shape index: {}]
  %s7 = inlined_call_operand.hbm [shape: bf16[2,64,256], index: 7, kind: input, shape index: {}]
  %s8 = inlined_call_operand.hbm [shape: f32[2,1,256], index: 8, kind: input, shape index: {}]
  %s9 = inlined_call_operand.hbm [shape: bf16[2,256,64], index: 9, kind: input, shape index: {}]
  %s10 = inlined_call_operand.hbm [shape: f32[2,1,64], index: 10, kind: input, shape index: {}]
  %s11 = inlined_call_operand.hbm [shape: f32[2,1,64], index: 11, kind: input, shape index: {}]
  %s12 = inlined_call_operand.hbm [shape: f32[2,1,64], index: 12, kind: input, shape index: {}]
  %s13 = inlined_call_operand.hbm [shape: bf16[64,128], index: 13, kind: input, shape index: {}]
  %s14 = inlined_call_operand.hbm [shape: f32[1,128], index: 14, kind: input, shape index: {}]
  %s15 = inlined_call_operand.hbm [shape: f32[2,1,128], index: 15, kind: output, shape index: {}]
  %s16 = sld [smem:[#allocation0]]
  $region153: #{neurotoken_transformer_forward.1} parent=0
    _
  %s18 = ssub.s32 1, %s16
  %s19 = scalar_select 0, %s18, %s16
  $region1: #{neurotoken_transformer_forward.1} parent=0
    #allocation2 [shape = 'u8[8192]{0}', space=vmem, size = 0x2000, scoped, tag = 'input window, operand 0']
    #allocation3 [shape = 's32[2]{0}', space=sflag, size = 0x8, scoped, tag = 'scoped memory for neurotoken_transformer_forward.1']
    #allocation4 [shape = 's32[2]{0}', space=sflag, size = 0x8, scoped, tag = 'scoped memory for neurotoken_transformer_forward.1']
    #allocation5 [shape = 'u8[1024]{0}', space=vmem, size = 0x400, scoped, tag = 'input window, operand 1']
    #allocation6 [shape = 's32[2]{0}', space=sflag, size = 0x8, scoped, tag = 'scoped memory for neurotoken_transformer_forward.1']
    #allocation7 [shape = 'u8[98304]{0}', space=vmem, size = 0x18000, scoped, tag = 'input window, operand 2, single buffered']
    #allocation8 [shape = 'u8[3072]{0}', space=vmem, size = 0xc00, scoped, tag = 'input window, operand 3, single buffered']
    #allocation9 [shape = 's32[1]{0}', space=sflag, size = 0x4, scoped, tag = 'scoped memory for neurotoken_transformer_forward.1']
    #allocation10 [shape = 'u8[1024]{0}', space=vmem, size = 0x400, scoped, tag = 'input window, operand 4, single buffered']
    #allocation11 [shape = 'u8[1024]{0}', space=vmem, size = 0x400, scoped, tag = 'input window, operand 5, single buffered']
    #allocation12 [shape = 's32[1]{0}', space=sflag, size = 0x4, scoped, tag = 'scoped memory for neurotoken_transformer_forward.1']
    #allocation13 [shape = 'u8[1024]{0}', space=vmem, size = 0x400, scoped, tag = 'input window, operand 6, single buffered']
    #allocation14 [shape = 'u8[65536]{0}', space=vmem, size = 0x10000, scoped, tag = 'input window, operand 7, single buffered']
    #allocation15 [shape = 's32[1]{0}', space=sflag, size = 0x4, scoped, tag = 'scoped memory for neurotoken_transformer_forward.1']
    #allocation16 [shape = 'u8[2048]{0}', space=vmem, size = 0x800, scoped, tag = 'input window, operand 8, single buffered']
    #allocation17 [shape = 'u8[131072]{0}', space=vmem, size = 0x20000, scoped, tag = 'input window, operand 9, single buffered']
    #allocation18 [shape = 's32[1]{0}', space=sflag, size = 0x4, scoped, tag = 'scoped memory for neurotoken_transformer_forward.1']
    #allocation19 [shape = 'u8[1024]{0}', space=vmem, size = 0x400, scoped, tag = 'input window, operand 10, single buffered']
    #allocation20 [shape = 'u8[1024]{0}', space=vmem, size = 0x400, scoped, tag = 'input window, operand 11, single buffered']
    #allocation21 [shape = 's32[1]{0}', space=sflag, size = 0x4, scoped, tag = 'scoped memory for neurotoken_transformer_forward.1']
    #allocation22 [shape = 'u8[1024]{0}', space=vmem, size = 0x400, scoped, tag = 'input window, operand 12, single buffered']
    #allocation23 [shape = 'u8[16384]{0}', space=vmem, size = 0x4000, scoped, tag = 'input window, operand 13, single buffered']
    #allocation24 [shape = 's32[1]{0}', space=sflag, size = 0x4, scoped, tag = 'scoped memory for neurotoken_transformer_forward.1']
    #allocation25 [shape = 'u8[512]{0}', space=vmem, size = 0x400, scoped, tag = 'input window, operand 14, single buffered']
    #allocation26 [shape = 'u8[1024]{0}', space=vmem, size = 0x400, scoped, tag = 'output window, operand 0']
    %20 = vsyncpa [#allocation3], 0
    %s21 = scalar_lea.sflag [#allocation3], 1
    %22 = vsyncpa %s21, 0
    %23 = vsyncpa [#allocation6], 0
    %s24 = scalar_lea.sflag [#allocation6], 1
    %25 = vsyncpa %s24, 0
    %26 = vsyncpa [#allocation9], 0
    %27 = vsyncpa [#allocation12], 0
    %28 = vsyncpa [#allocation15], 0
    %29 = vsyncpa [#allocation18], 0
    %30 = vsyncpa [#allocation21], 0
    %31 = vsyncpa [#allocation24], 0
    %32 = vsyncpa [#allocation4], 0
    %s33 = scalar_lea.sflag [#allocation4], 1
    %34 = vsyncpa %s33, 0
    loop: start=0, step=1, limit=4
    $region2: #{neurotoken_transformer_forward.1} parent=1 // loop_pre_header
      _
    $region3: #{neurotoken_transformer_forward.1} parent=1 // loop_header
      %s36 = sphi 0, %s40
      %p37 = scmp.ge.s32.totalorder %s36, 4
      %s46 = sphi 0, %s48
      %s49 = sphi 0, %s46
      %s50 = sphi 0, %s49
      %s66 = sphi 0, %s50
      %s72 = sphi 0, %s74
      %s75 = sphi 0, %s72
      %s76 = sphi 0, %s75
      %s92 = sphi 0, %s76
      %s96 = sphi 0, %s96
      %s98 = sphi 0, %s96
      %s99 = sphi 0, %s98
      %s113 = sphi 0, %s99
      %s117 = sphi 0, %s117
      %s119 = sphi 0, %s117
      %s120 = sphi 0, %s119
      %s134 = sphi 0, %s120
      %s138 = sphi 0, %s138
      %s140 = sphi 0, %s138
      %s141 = sphi 0, %s140
      %s155 = sphi 0, %s141
      %s159 = sphi 0, %s159
      %s161 = sphi 0, %s159
      %s162 = sphi 0, %s161
      %s176 = sphi 0, %s162
      %s180 = sphi 0, %s180
      %s182 = sphi 0, %s180
      %s183 = sphi 0, %s182
      %s197 = sphi 0, %s183
      %s201 = sphi 0, %s201
      %s203 = sphi 0, %s201
      %s204 = sphi 0, %s203
      %s218 = sphi 0, %s204
      %s222 = sphi 0, %s222
      %s224 = sphi 0, %s222
      %s225 = sphi 0, %s224
      %s239 = sphi 0, %s225
      %s243 = sphi 0, %s243
      %s245 = sphi 0, %s243
      %s246 = sphi 0, %s245
      %s260 = sphi 0, %s246
      %s264 = sphi 0, %s264
      %s266 = sphi 0, %s264
      %s267 = sphi 0, %s266
      %s281 = sphi 0, %s267
      %s285 = sphi 0, %s285
      %s287 = sphi 0, %s285
      %s288 = sphi 0, %s287
      %s302 = sphi 0, %s288
      %s306 = sphi 0, %s306
      %s308 = sphi 0, %s306
      %s309 = sphi 0, %s308
      %s323 = sphi 0, %s309
      %s327 = sphi 0, %s327
      %s329 = sphi 0, %s327
      %s330 = sphi 0, %s329
      %s344 = sphi 0, %s330
      %s348 = sphi 0, %s348
      %s350 = sphi 0, %s348
      %s351 = sphi 0, %s350
      %s365 = sphi 0, %s351
      %s371 = sphi 0, %s373
      %s374 = sphi 0, %s371
      %s375 = sphi 0, %s374
      %s391 = sphi 0, %s375
    $region4: #{neurotoken_transformer_forward.1} parent=1 // loop_header_branch
      %39 = sbr.rel (%p37) target = $region8
    $region5: #{neurotoken_transformer_forward.1} parent=1 // loop_body
      %s41 = ssub.s32 %s36, 1
      %s42 = ssub.s32 %s36, 2
      %s43 = sadd.s32 %s36, 1
      %s44 = ssub.s32 %s36, %s43
      %p45 = scmp.eq.s32.totalorder %s44, 0
      %s47 = sadd.s32 %s46, 1
      %s48 = scalar_select %p45, %s46, %s47
      %p51 = pneg %p45
      %p52 = scmp.eq.s32.totalorder %s36, 1
      %p53 = por %p51, %p52
      %p54 = scmp.ne.s32.totalorder %s46, %s49
      %p55 = scmp.eq.s32.totalorder %s36, 0
      %p56 = por %p54, %p55
      %p57 = scmp.ne.s32.totalorder %s46, %s49
      %p58 = scmp.eq.s32.totalorder %s41, 1
      %p59 = por %p57, %p58
      %p60 = scmp.ne.s32.totalorder %s49, %s50
      %p61 = scmp.eq.s32.totalorder %s41, 0
      %p62 = por %p60, %p61
      %p63 = scmp.ne.s32.totalorder %s49, %s50
      %p64 = scmp.eq.s32.totalorder %s42, 1
      %p65 = por %p63, %p64
      %p67 = scmp.ne.s32.totalorder %s50, %s66
      %p68 = scmp.eq.s32.totalorder %s42, 0
      %p69 = por %p67, %p68
      %s70 = ssub.s32 %s36, %s43
      %p71 = scmp.eq.s32.totalorder %s70, 0
      %s73 = sadd.s32 %s72, 1
      %s74 = scalar_select %p71, %s72, %s73
      %p77 = pneg %p71
      %p78 = scmp.eq.s32.totalorder %s36, 1
      %p79 = por %p77, %p78
      %p80 = scmp.ne.s32.totalorder %s72, %s75
      %p81 = scmp.eq.s32.totalorder %s36, 0
      %p82 = por %p80, %p81
      %p83 = scmp.ne.s32.totalorder %s72, %s75
      %p84 = scmp.eq.s32.totalorder %s41, 1
      %p85 = por %p83, %p84
      %p86 = scmp.ne.s32.totalorder %s75, %s76
      %p87 = scmp.eq.s32.totalorder %s41, 0
      %p88 = por %p86, %p87
      %p89 = scmp.ne.s32.totalorder %s75, %s76
      %p90 = scmp.eq.s32.totalorder %s42, 1
      %p91 = por %p89, %p90
      %p93 = scmp.ne.s32.totalorder %s76, %s92
      %p94 = scmp.eq.s32.totalorder %s42, 0
      %p95 = por %p93, %p94
      %s97 = sadd.s32 %s96, 1
      %p100 = scmp.eq.s32.totalorder %s36, 1
      %p101 = scmp.ne.s32.totalorder %s96, %s98
      %p102 = scmp.eq.s32.totalorder %s36, 0
      %p103 = por %p101, %p102
      %p104 = scmp.ne.s32.totalorder %s96, %s98
      %p105 = scmp.eq.s32.totalorder %s41, 1
      %p106 = por %p104, %p105
      %p107 = scmp.ne.s32.totalorder %s98, %s99
      %p108 = scmp.eq.s32.totalorder %s41, 0
      %p109 = por %p107, %p108
      %p110 = scmp.ne.s32.totalorder %s98, %s99
      %p111 = scmp.eq.s32.totalorder %s42, 1
      %p112 = por %p110, %p111
      %p114 = scmp.ne.s32.totalorder %s99, %s113
      %p115 = scmp.eq.s32.totalorder %s42, 0
      %p116 = por %p114, %p115
      %s118 = sadd.s32 %s117, 1
      %p121 = scmp.eq.s32.totalorder %s36, 1
      %p122 = scmp.ne.s32.totalorder %s117, %s119
      %p123 = scmp.eq.s32.totalorder %s36, 0
      %p124 = por %p122, %p123
      %p125 = scmp.ne.s32.totalorder %s117, %s119
      %p126 = scmp.eq.s32.totalorder %s41, 1
      %p127 = por %p125, %p126
      %p128 = scmp.ne.s32.totalorder %s119, %s120
      %p129 = scmp.eq.s32.totalorder %s41, 0
      %p130 = por %p128, %p129
      %p131 = scmp.ne.s32.totalorder %s119, %s120
      %p132 = scmp.eq.s32.totalorder %s42, 1
      %p133 = por %p131, %p132
      %p135 = scmp.ne.s32.totalorder %s120, %s134
      %p136 = scmp.eq.s32.totalorder %s42, 0
      %p137 = por %p135, %p136
      %s139 = sadd.s32 %s138, 1
      %p142 = scmp.eq.s32.totalorder %s36, 1
      %p143 = scmp.ne.s32.totalorder %s138, %s140
      %p144 = scmp.eq.s32.totalorder %s36, 0
      %p145 = por %p143, %p144
      %p146 = scmp.ne.s32.totalorder %s138, %s140
      %p147 = scmp.eq.s32.totalorder %s41, 1
      %p148 = por %p146, %p147
      %p149 = scmp.ne.s32.totalorder %s140, %s141
      %p150 = scmp.eq.s32.totalorder %s41, 0
      %p151 = por %p149, %p150
      %p152 = scmp.ne.s32.totalorder %s140, %s141
      %p153 = scmp.eq.s32.totalorder %s42, 1
      %p154 = por %p152, %p153
      %p156 = scmp.ne.s32.totalorder %s141, %s155
      %p157 = scmp.eq.s32.totalorder %s42, 0
      %p158 = por %p156, %p157
      %s160 = sadd.s32 %s159, 1
      %p163 = scmp.eq.s32.totalorder %s36, 1
      %p164 = scmp.ne.s32.totalorder %s159, %s161
      %p165 = scmp.eq.s32.totalorder %s36, 0
      %p166 = por %p164, %p165
      %p167 = scmp.ne.s32.totalorder %s159, %s161
      %p168 = scmp.eq.s32.totalorder %s41, 1
      %p169 = por %p167, %p168
      %p170 = scmp.ne.s32.totalorder %s161, %s162
      %p171 = scmp.eq.s32.totalorder %s41, 0
      %p172 = por %p170, %p171
      %p173 = scmp.ne.s32.totalorder %s161, %s162
      %p174 = scmp.eq.s32.totalorder %s42, 1
      %p175 = por %p173, %p174
      %p177 = scmp.ne.s32.totalorder %s162, %s176
      %p178 = scmp.eq.s32.totalorder %s42, 0
      %p179 = por %p177, %p178
      %s181 = sadd.s32 %s180, 1
      %p184 = scmp.eq.s32.totalorder %s36, 1
      %p185 = scmp.ne.s32.totalorder %s180, %s182
      %p186 = scmp.eq.s32.totalorder %s36, 0
      %p187 = por %p185, %p186
      %p188 = scmp.ne.s32.totalorder %s180, %s182
      %p189 = scmp.eq.s32.totalorder %s41, 1
      %p190 = por %p188, %p189
      %p191 = scmp.ne.s32.totalorder %s182, %s183
      %p192 = scmp.eq.s32.totalorder %s41, 0
      %p193 = por %p191, %p192
      %p194 = scmp.ne.s32.totalorder %s182, %s183
      %p195 = scmp.eq.s32.totalorder %s42, 1
      %p196 = por %p194, %p195
      %p198 = scmp.ne.s32.totalorder %s183, %s197
      %p199 = scmp.eq.s32.totalorder %s42, 0
      %p200 = por %p198, %p199
      %s202 = sadd.s32 %s201, 1
      %p205 = scmp.eq.s32.totalorder %s36, 1
      %p206 = scmp.ne.s32.totalorder %s201, %s203
      %p207 = scmp.eq.s32.totalorder %s36, 0
      %p208 = por %p206, %p207
      %p209 = scmp.ne.s32.totalorder %s201, %s203
      %p210 = scmp.eq.s32.totalorder %s41, 1
      %p211 = por %p209, %p210
      %p212 = scmp.ne.s32.totalorder %s203, %s204
      %p213 = scmp.eq.s32.totalorder %s41, 0
      %p214 = por %p212, %p213
      %p215 = scmp.ne.s32.totalorder %s203, %s204
      %p216 = scmp.eq.s32.totalorder %s42, 1
      %p217 = por %p215, %p216
      %p219 = scmp.ne.s32.totalorder %s204, %s218
      %p220 = scmp.eq.s32.totalorder %s42, 0
      %p221 = por %p219, %p220
      %s223 = sadd.s32 %s222, 1
      %p226 = scmp.eq.s32.totalorder %s36, 1
      %p227 = scmp.ne.s32.totalorder %s222, %s224
      %p228 = scmp.eq.s32.totalorder %s36, 0
      %p229 = por %p227, %p228
      %p230 = scmp.ne.s32.totalorder %s222, %s224
      %p231 = scmp.eq.s32.totalorder %s41, 1
      %p232 = por %p230, %p231
      %p233 = scmp.ne.s32.totalorder %s224, %s225
      %p234 = scmp.eq.s32.totalorder %s41, 0
      %p235 = por %p233, %p234
      %p236 = scmp.ne.s32.totalorder %s224, %s225
      %p237 = scmp.eq.s32.totalorder %s42, 1
      %p238 = por %p236, %p237
      %p240 = scmp.ne.s32.totalorder %s225, %s239
      %p241 = scmp.eq.s32.totalorder %s42, 0
      %p242 = por %p240, %p241
      %s244 = sadd.s32 %s243, 1
      %p247 = scmp.eq.s32.totalorder %s36, 1
      %p248 = scmp.ne.s32.totalorder %s243, %s245
      %p249 = scmp.eq.s32.totalorder %s36, 0
      %p250 = por %p248, %p249
      %p251 = scmp.ne.s32.totalorder %s243, %s245
      %p252 = scmp.eq.s32.totalorder %s41, 1
      %p253 = por %p251, %p252
      %p254 = scmp.ne.s32.totalorder %s245, %s246
      %p255 = scmp.eq.s32.totalorder %s41, 0
      %p256 = por %p254, %p255
      %p257 = scmp.ne.s32.totalorder %s245, %s246
      %p258 = scmp.eq.s32.totalorder %s42, 1
      %p259 = por %p257, %p258
      %p261 = scmp.ne.s32.totalorder %s246, %s260
      %p262 = scmp.eq.s32.totalorder %s42, 0
      %p263 = por %p261, %p262
      %s265 = sadd.s32 %s264, 1
      %p268 = scmp.eq.s32.totalorder %s36, 1
      %p269 = scmp.ne.s32.totalorder %s264, %s266
      %p270 = scmp.eq.s32.totalorder %s36, 0
      %p271 = por %p269, %p270
      %p272 = scmp.ne.s32.totalorder %s264, %s266
      %p273 = scmp.eq.s32.totalorder %s41, 1
      %p274 = por %p272, %p273
      %p275 = scmp.ne.s32.totalorder %s266, %s267
      %p276 = scmp.eq.s32.totalorder %s41, 0
      %p277 = por %p275, %p276
      %p278 = scmp.ne.s32.totalorder %s266, %s267
      %p279 = scmp.eq.s32.totalorder %s42, 1
      %p280 = por %p278, %p279
      %p282 = scmp.ne.s32.totalorder %s267, %s281
      %p283 = scmp.eq.s32.totalorder %s42, 0
      %p284 = por %p282, %p283
      %s286 = sadd.s32 %s285, 1
      %p289 = scmp.eq.s32.totalorder %s36, 1
      %p290 = scmp.ne.s32.totalorder %s285, %s287
      %p291 = scmp.eq.s32.totalorder %s36, 0
      %p292 = por %p290, %p291
      %p293 = scmp.ne.s32.totalorder %s285, %s287
      %p294 = scmp.eq.s32.totalorder %s41, 1
      %p295 = por %p293, %p294
      %p296 = scmp.ne.s32.totalorder %s287, %s288
      %p297 = scmp.eq.s32.totalorder %s41, 0
      %p298 = por %p296, %p297
      %p299 = scmp.ne.s32.totalorder %s287, %s288
      %p300 = scmp.eq.s32.totalorder %s42, 1
      %p301 = por %p299, %p300
      %p303 = scmp.ne.s32.totalorder %s288, %s302
      %p304 = scmp.eq.s32.totalorder %s42, 0
      %p305 = por %p303, %p304
      %s307 = sadd.s32 %s306, 1
      %p310 = scmp.eq.s32.totalorder %s36, 1
      %p311 = scmp.ne.s32.totalorder %s306, %s308
      %p312 = scmp.eq.s32.totalorder %s36, 0
      %p313 = por %p311, %p312
      %p314 = scmp.ne.s32.totalorder %s306, %s308
      %p315 = scmp.eq.s32.totalorder %s41, 1
      %p316 = por %p314, %p315
      %p317 = scmp.ne.s32.totalorder %s308, %s309
      %p318 = scmp.eq.s32.totalorder %s41, 0
      %p319 = por %p317, %p318
      %p320 = scmp.ne.s32.totalorder %s308, %s309
      %p321 = scmp.eq.s32.totalorder %s42, 1
      %p322 = por %p320, %p321
      %p324 = scmp.ne.s32.totalorder %s309, %s323
      %p325 = scmp.eq.s32.totalorder %s42, 0
      %p326 = por %p324, %p325
      %s328 = sadd.s32 %s327, 1
      %p331 = scmp.eq.s32.totalorder %s36, 1
      %p332 = scmp.ne.s32.totalorder %s327, %s329
      %p333 = scmp.eq.s32.totalorder %s36, 0
      %p334 = por %p332, %p333
      %p335 = scmp.ne.s32.totalorder %s327, %s329
      %p336 = scmp.eq.s32.totalorder %s41, 1
      %p337 = por %p335, %p336
      %p338 = scmp.ne.s32.totalorder %s329, %s330
      %p339 = scmp.eq.s32.totalorder %s41, 0
      %p340 = por %p338, %p339
      %p341 = scmp.ne.s32.totalorder %s329, %s330
      %p342 = scmp.eq.s32.totalorder %s42, 1
      %p343 = por %p341, %p342
      %p345 = scmp.ne.s32.totalorder %s330, %s344
      %p346 = scmp.eq.s32.totalorder %s42, 0
      %p347 = por %p345, %p346
      %s349 = sadd.s32 %s348, 1
      %p352 = scmp.eq.s32.totalorder %s36, 1
      %p353 = scmp.ne.s32.totalorder %s348, %s350
      %p354 = scmp.eq.s32.totalorder %s36, 0
      %p355 = por %p353, %p354
      %p356 = scmp.ne.s32.totalorder %s348, %s350
      %p357 = scmp.eq.s32.totalorder %s41, 1
      %p358 = por %p356, %p357
      %p359 = scmp.ne.s32.totalorder %s350, %s351
      %p360 = scmp.eq.s32.totalorder %s41, 0
      %p361 = por %p359, %p360
      %p362 = scmp.ne.s32.totalorder %s350, %s351
      %p363 = scmp.eq.s32.totalorder %s42, 1
      %p364 = por %p362, %p363
      %p366 = scmp.ne.s32.totalorder %s351, %s365
      %p367 = scmp.eq.s32.totalorder %s42, 0
      %p368 = por %p366, %p367
      %s369 = ssub.s32 %s36, %s43
      %p370 = scmp.eq.s32.totalorder %s369, 0
      %s372 = sadd.s32 %s371, 1
      %s373 = scalar_select %p370, %s371, %s372
      %p376 = pneg %p370
      %p377 = scmp.eq.s32.totalorder %s36, 1
      %p378 = por %p376, %p377
      %p379 = scmp.ne.s32.totalorder %s371, %s374
      %p380 = scmp.eq.s32.totalorder %s36, 0
      %p381 = por %p379, %p380
      %p382 = scmp.ne.s32.totalorder %s371, %s374
      %p383 = scmp.eq.s32.totalorder %s41, 1
      %p384 = por %p382, %p383
      %p385 = scmp.ne.s32.totalorder %s374, %s375
      %p386 = scmp.eq.s32.totalorder %s41, 0
      %p387 = por %p385, %p386
      %p388 = scmp.ne.s32.totalorder %s374, %s375
      %p389 = scmp.eq.s32.totalorder %s42, 1
      %p390 = por %p388, %p389
      %p392 = scmp.ne.s32.totalorder %s375, %s391
      %p393 = scmp.eq.s32.totalorder %s42, 0
      %p394 = por %p392, %p393
      %p395 = scmp.le.s32.totalorder 1, %s36
      %p396 = scmp.lt.s32.totalorder %s36, 3
      %p397 = pnand %p395, %p396
      %p398 = pneg %p397
      // Predicated region
      $region9: #{neurotoken_transformer_forward.1} parent=5 // pred_check
        _
      $region10: #{neurotoken_transformer_forward.1} parent=5 // pred_check_branch
        %400 = sbr.rel (%p397) target = $region12
      $region11: #{neurotoken_transformer_forward.1} parent=5 // pred_region
        %s401 = ssub.s32 %s36, 1
        // Predicated region
        $region13: #{neurotoken_transformer_forward.1} parent=11 // pred_check
          %p402 = pneg %p109
        $region14: #{neurotoken_transformer_forward.1} parent=11 // pred_check_branch
          %404 = sbr.rel (%p402) target = $region16
        $region15: #{neurotoken_transformer_forward.1} parent=11 // pred_region
          %s406 = ssub.s32 3072, 3072
          %407 = vsyncadd [#allocation6], %s406
          %s408 = sshll.u32 [#allocation7], 4
          %s409 = int_to_ptr.vmem [resolvable:$true] %s408
          %414 = dma.hbm_to_vmem [thread:$0]  %s2, 3072, %s409, [#allocation6], 192, 192, 12
        $region16: #{neurotoken_transformer_forward.1} parent=11 // pred_fallthru
          _
        // Predicated region
        $region17: #{neurotoken_transformer_forward.1} parent=11 // pred_check
          %p415 = pneg %p130
        $region18: #{neurotoken_transformer_forward.1} parent=11 // pred_check_branch
          %417 = sbr.rel (%p415) target = $region20
        $region19: #{neurotoken_transformer_forward.1} parent=11 // pred_region
          %s419 = ssub.s32 96, 96
          %420 = vsyncadd [#allocation9], %s419
          %s421 = sshll.u32 [#allocation8], 4
          %s422 = int_to_ptr.vmem [resolvable:$true] %s421
          %427 = dma.hbm_to_vmem [thread:$0]  %s3, 96, %s422, [#allocation9], 48, 48, 3
        $region20: #{neurotoken_transformer_forward.1} parent=11 // pred_fallthru
          _
        // Predicated region
        $region21: #{neurotoken_transformer_forward.1} parent=11 // pred_check
          %p428 = pneg %p151
        $region22: #{neurotoken_transformer_forward.1} parent=11 // pred_check_branch
          %430 = sbr.rel (%p428) target = $region24
        $region23: #{neurotoken_transformer_forward.1} parent=11 // pred_region
          %s432 = ssub.s32 32, 32
          %433 = vsyncadd [#allocation9], %s432
          %s434 = sshll.u32 [#allocation10], 4
          %s435 = int_to_ptr.vmem [resolvable:$true] %s434
          %440 = dma.hbm_to_vmem [thread:$0]  %s4, 32, %s435, [#allocation9], 16, 16, 1
        $region24: #{neurotoken_transformer_forward.1} parent=11 // pred_fallthru
          _
        // Predicated region
        $region25: #{neurotoken_transformer_forward.1} parent=11 // pred_check
          %p441 = pneg %p172
        $region26: #{neurotoken_transformer_forward.1} parent=11 // pred_check_branch
          %443 = sbr.rel (%p441) target = $region28
        $region27: #{neurotoken_transformer_forward.1} parent=11 // pred_region
          %s445 = ssub.s32 32, 32
          %446 = vsyncadd [#allocation12], %s445
          %s447 = sshll.u32 [#allocation11], 4
          %s448 = int_to_ptr.vmem [resolvable:$true] %s447
          %453 = dma.hbm_to_vmem [thread:$0]  %s5, 32, %s448, [#allocation12], 16, 16, 1
        $region28: #{neurotoken_transformer_forward.1} parent=11 // pred_fallthru
          _
        // Predicated region
        $region29: #{neurotoken_transformer_forward.1} parent=11 // pred_check
          %p454 = pneg %p193
        $region30: #{neurotoken_transformer_forward.1} parent=11 // pred_check_branch
          %456 = sbr.rel (%p454) target = $region32
        $region31: #{neurotoken_transformer_forward.1} parent=11 // pred_region
          %s458 = ssub.s32 32, 32
          %459 = vsyncadd [#allocation12], %s458
          %s460 = sshll.u32 [#allocation13], 4
          %s461 = int_to_ptr.vmem [resolvable:$true] %s460
          %466 = dma.hbm_to_vmem [thread:$0]  %s6, 32, %s461, [#allocation12], 16, 16, 1
        $region32: #{neurotoken_transformer_forward.1} parent=11 // pred_fallthru
          _
        // Predicated region
        $region33: #{neurotoken_transformer_forward.1} parent=11 // pred_check
          %p467 = pneg %p214
        $region34: #{neurotoken_transformer_forward.1} parent=11 // pred_check_branch
          %469 = sbr.rel (%p467) target = $region36
        $region35: #{neurotoken_transformer_forward.1} parent=11 // pred_region
          %s471 = ssub.s32 2048, 2048
          %472 = vsyncadd [#allocation15], %s471
          %s473 = sshll.u32 [#allocation14], 4
          %s474 = int_to_ptr.vmem [resolvable:$true] %s473
          %479 = dma.hbm_to_vmem [thread:$0]  %s7, 2048, %s474, [#allocation15], 128, 128, 8
        $region36: #{neurotoken_transformer_forward.1} parent=11 // pred_fallthru
          _
        // Predicated region
        $region37: #{neurotoken_transformer_forward.1} parent=11 // pred_check
          %p480 = pneg %p235
        $region38: #{neurotoken_transformer_forward.1} parent=11 // pred_check_branch
          %482 = sbr.rel (%p480) target = $region40
        $region39: #{neurotoken_transformer_forward.1} parent=11 // pred_region
          %s484 = ssub.s32 64, 64
          %485 = vsyncadd [#allocation15], %s484
          %s486 = sshll.u32 [#allocation16], 4
          %s487 = int_to_ptr.vmem [resolvable:$true] %s486
          %492 = dma.hbm_to_vmem [thread:$0]  %s8, 64, %s487, [#allocation15], 32, 32, 2
        $region40: #{neurotoken_transformer_forward.1} parent=11 // pred_fallthru
          _
        // Predicated region
        $region41: #{neurotoken_transformer_forward.1} parent=11 // pred_check
          %p493 = pneg %p256
        $region42: #{neurotoken_transformer_forward.1} parent=11 // pred_check_branch
          %495 = sbr.rel (%p493) target = $region44
        $region43: #{neurotoken_transformer_forward.1} parent=11 // pred_region
          %s497 = ssub.s32 4096, 4096
          %498 = vsyncadd [#allocation18], %s497
          %s499 = sshll.u32 [#allocation17], 4
          %s500 = int_to_ptr.vmem [resolvable:$true] %s499
          %505 = dma.hbm_to_vmem [thread:$0]  %s9, 4096, %s500, [#allocation18], 64, 64, 4
        $region44: #{neurotoken_transformer_forward.1} parent=11 // pred_fallthru
          _
        // Predicated region
        $region45: #{neurotoken_transformer_forward.1} parent=11 // pred_check
          %p506 = pneg %p277
        $region46: #{neurotoken_transformer_forward.1} parent=11 // pred_check_branch
          %508 = sbr.rel (%p506) target = $region48
        $region47: #{neurotoken_transformer_forward.1} parent=11 // pred_region
          %s510 = ssub.s32 32, 32
          %511 = vsyncadd [#allocation18], %s510
          %s512 = sshll.u32 [#allocation19], 4
          %s513 = int_to_ptr.vmem [resolvable:$true] %s512
          %518 = dma.hbm_to_vmem [thread:$0]  %s10, 32, %s513, [#allocation18], 16, 16, 1
        $region48: #{neurotoken_transformer_forward.1} parent=11 // pred_fallthru
          _
        // Predicated region
        $region49: #{neurotoken_transformer_forward.1} parent=11 // pred_check
          %p519 = pneg %p298
        $region50: #{neurotoken_transformer_forward.1} parent=11 // pred_check_branch
          %521 = sbr.rel (%p519) target = $region52
        $region51: #{neurotoken_transformer_forward.1} parent=11 // pred_region
          %s523 = ssub.s32 32, 32
          %524 = vsyncadd [#allocation21], %s523
          %s525 = sshll.u32 [#allocation20], 4
          %s526 = int_to_ptr.vmem [resolvable:$true] %s525
          %531 = dma.hbm_to_vmem [thread:$0]  %s11, 32, %s526, [#allocation21], 16, 16, 1
        $region52: #{neurotoken_transformer_forward.1} parent=11 // pred_fallthru
          _
        // Predicated region
        $region53: #{neurotoken_transformer_forward.1} parent=11 // pred_check
          %p532 = pneg %p319
        $region54: #{neurotoken_transformer_forward.1} parent=11 // pred_check_branch
          %534 = sbr.rel (%p532) target = $region56
        $region55: #{neurotoken_transformer_forward.1} parent=11 // pred_region
          %s536 = ssub.s32 32, 32
          %537 = vsyncadd [#allocation21], %s536
          %s538 = sshll.u32 [#allocation22], 4
          %s539 = int_to_ptr.vmem [resolvable:$true] %s538
          %544 = dma.hbm_to_vmem [thread:$0]  %s12, 32, %s539, [#allocation21], 16, 16, 1
        $region56: #{neurotoken_transformer_forward.1} parent=11 // pred_fallthru
          _
        // Predicated region
        $region57: #{neurotoken_transformer_forward.1} parent=11 // pred_check
          %p545 = pneg %p340
        $region58: #{neurotoken_transformer_forward.1} parent=11 // pred_check_branch
          %547 = sbr.rel (%p545) target = $region60
        $region59: #{neurotoken_transformer_forward.1} parent=11 // pred_region
          %s549 = ssub.s32 512, 512
          %550 = vsyncadd [#allocation24], %s549
          %s551 = sshll.u32 [#allocation23], 4
          %s552 = int_to_ptr.vmem [resolvable:$true] %s551
          %557 = dma.hbm_to_vmem [thread:$0]  %s13, 512, %s552, [#allocation24], 64, 64, 4
        $region60: #{neurotoken_transformer_forward.1} parent=11 // pred_fallthru
          _
        // Predicated region
        $region61: #{neurotoken_transformer_forward.1} parent=11 // pred_check
          %p558 = pneg %p361
        $region62: #{neurotoken_transformer_forward.1} parent=11 // pred_check_branch
          %560 = sbr.rel (%p558) target = $region64
        $region63: #{neurotoken_transformer_forward.1} parent=11 // pred_region
          %s562 = ssub.s32 16, 16
          %563 = vsyncadd [#allocation24], %s562
          %s565 = sshll.u32 [#allocation25], 4
          %s566 = int_to_ptr.vmem [resolvable:$true] %s565
          %568 = dma.hbm_to_vmem [thread:$0]  %s14, 16, %s566, [#allocation24]
        $region64: #{neurotoken_transformer_forward.1} parent=11 // pred_fallthru
          _
      $region12: #{neurotoken_transformer_forward.1} parent=5 // pred_fallthru
        _
      %p569 = scmp.lt.s32.totalorder %s36, 2
      // Predicated region
      $region65: #{neurotoken_transformer_forward.1} parent=5 // pred_check
        %p570 = pneg %p569
      $region66: #{neurotoken_transformer_forward.1} parent=5 // pred_check_branch
        %572 = sbr.rel (%p570) target = $region68
      $region67: #{neurotoken_transformer_forward.1} parent=5 // pred_region
        // Predicated region
        $region69: #{neurotoken_transformer_forward.1} parent=67 // pred_check
          %p573 = pneg %p56
        $region70: #{neurotoken_transformer_forward.1} parent=67 // pred_check_branch
          %575 = sbr.rel (%p573) target = $region72
        $region71: #{neurotoken_transformer_forward.1} parent=67 // pred_region
          %s576 = sand.u32 %s46, 1
          %s577 = scalar_lea.sflag [#allocation3], %s576
          %s578 = sand.u32 %s46, 1
          %s579 = smul.addr %s578, 8
          %s580 = scalar_lea.vmem [#allocation2], %s579
          %s582 = ssub.s32 128, 128
          %583 = vsyncadd %s577, %s582
          %s584 = smul.addr %s36, 2
          %s585 = smul.addr %s584, 64
          %s586 = scalar_lea.hbm %s0, %s585
          %s587 = sshll.u32 %s580, 4
          %s588 = int_to_ptr.vmem [resolvable:$true] %s587
          %593 = dma.hbm_to_vmem [thread:$0]  %s586, 128, %s588, %s577, 64, 64, 4
        $region72: #{neurotoken_transformer_forward.1} parent=67 // pred_fallthru
          _
        // Predicated region
        $region73: #{neurotoken_transformer_forward.1} parent=67 // pred_check
          %p594 = pneg %p82
        $region74: #{neurotoken_transformer_forward.1} parent=67 // pred_check_branch
          %596 = sbr.rel (%p594) target = $region76
        $region75: #{neurotoken_transformer_forward.1} parent=67 // pred_region
          %s597 = sand.u32 %s36, 1
          %s598 = scalar_lea.sflag [#allocation6], %s597
          %s599 = sand.u32 %s72, 1
          %s600 = scalar_lea.vmem [#allocation5], %s599
          %s602 = ssub.s32 16, 16
          %603 = vsyncadd %s598, %s602
          %s604 = smul.addr %s36, 16
          %s605 = scalar_lea.hbm %s1, %s604
          %s607 = sshll.u32 %s600, 4
          %s608 = int_to_ptr.vmem [resolvable:$true] %s607
          %610 = dma.hbm_to_vmem [thread:$0]  %s605, 16, %s608, %s598
        $region76: #{neurotoken_transformer_forward.1} parent=67 // pred_fallthru
          _
      $region68: #{neurotoken_transformer_forward.1} parent=5 // pred_fallthru
        _
      %p611 = scmp.le.s32.totalorder 1, %s36
      %p612 = scmp.lt.s32.totalorder %s36, 3
      %p613 = pnand %p611, %p612
      %p614 = pneg %p613
      // Predicated region
      $region77: #{neurotoken_transformer_forward.1} parent=5 // pred_check
        _
      $region78: #{neurotoken_transformer_forward.1} parent=5 // pred_check_branch
        %616 = sbr.rel (%p613) target = $region80
      $region79: #{neurotoken_transformer_forward.1} parent=5 // pred_region
        %s617 = ssub.s32 %s36, 1
        %s618 = sand.u32 %s49, 1
        %s619 = scalar_lea.sflag [#allocation3], %s618
        %s620 = sand.u32 %s49, 1
        %s621 = smul.addr %s620, 8
        %s622 = scalar_lea.vmem [#allocation2], %s621
        // Predicated region
        $region81: #{neurotoken_transformer_forward.1} parent=79 // pred_check
          %p623 = pneg %p62
        $region82: #{neurotoken_transformer_forward.1} parent=79 // pred_check_branch
          %625 = sbr.rel (%p623) target = $region84
        $region83: #{neurotoken_transformer_forward.1} parent=79 // pred_region
          %626 = dma.done %s619, 128
        $region84: #{neurotoken_transformer_forward.1} parent=79 // pred_fallthru
          _
        %s627 = sand.u32 %s41, 1
        %s628 = scalar_lea.sflag [#allocation6], %s627
        %s629 = sand.u32 %s75, 1
        %s630 = scalar_lea.vmem [#allocation5], %s629
        // Predicated region
        $region85: #{neurotoken_transformer_forward.1} parent=79 // pred_check
          %p631 = pneg %p88
        $region86: #{neurotoken_transformer_forward.1} parent=79 // pred_check_branch
          %633 = sbr.rel (%p631) target = $region88
        $region87: #{neurotoken_transformer_forward.1} parent=79 // pred_region
          %634 = dma.done %s628, 16
        $region88: #{neurotoken_transformer_forward.1} parent=79 // pred_fallthru
          _
        // Predicated region
        $region89: #{neurotoken_transformer_forward.1} parent=79 // pred_check
          %p635 = pneg %p109
        $region90: #{neurotoken_transformer_forward.1} parent=79 // pred_check_branch
          %637 = sbr.rel (%p635) target = $region92
        $region91: #{neurotoken_transformer_forward.1} parent=79 // pred_region
          %638 = dma.done [#allocation6], 3072
        $region92: #{neurotoken_transformer_forward.1} parent=79 // pred_fallthru
          _
        // Predicated region
        $region93: #{neurotoken_transformer_forward.1} parent=79 // pred_check
          %p639 = pneg %p130
        $region94: #{neurotoken_transformer_forward.1} parent=79 // pred_check_branch
          %641 = sbr.rel (%p639) target = $region96
        $region95: #{neurotoken_transformer_forward.1} parent=79 // pred_region
          %642 = dma.done [#allocation9], 96
        $region96: #{neurotoken_transformer_forward.1} parent=79 // pred_fallthru
          _
        // Predicated region
        $region97: #{neurotoken_transformer_forward.1} parent=79 // pred_check
          %p643 = pneg %p151
        $region98: #{neurotoken_transformer_forward.1} parent=79 // pred_check_branch
          %645 = sbr.rel (%p643) target = $region100
        $region99: #{neurotoken_transformer_forward.1} parent=79 // pred_region
          %646 = dma.done [#allocation9], 32
        $region100: #{neurotoken_transformer_forward.1} parent=79 // pred_fallthru
          _
        // Predicated region
        $region101: #{neurotoken_transformer_forward.1} parent=79 // pred_check
          %p647 = pneg %p172
        $region102: #{neurotoken_transformer_forward.1} parent=79 // pred_check_branch
          %649 = sbr.rel (%p647) target = $region104
        $region103: #{neurotoken_transformer_forward.1} parent=79 // pred_region
          %650 = dma.done [#allocation12], 32
        $region104: #{neurotoken_transformer_forward.1} parent=79 // pred_fallthru
          _
        // Predicated region
        $region105: #{neurotoken_transformer_forward.1} parent=79 // pred_check
          %p651 = pneg %p193
        $region106: #{neurotoken_transformer_forward.1} parent=79 // pred_check_branch
          %653 = sbr.rel (%p651) target = $region108
        $region107: #{neurotoken_transformer_forward.1} parent=79 // pred_region
          %654 = dma.done [#allocation12], 32
        $region108: #{neurotoken_transformer_forward.1} parent=79 // pred_fallthru
          _
        // Predicated region
        $region109: #{neurotoken_transformer_forward.1} parent=79 // pred_check
          %p655 = pneg %p214
        $region110: #{neurotoken_transformer_forward.1} parent=79 // pred_check_branch
          %657 = sbr.rel (%p655) target = $region112
        $region111: #{neurotoken_transformer_forward.1} parent=79 // pred_region
          %658 = dma.done [#allocation15], 2048
        $region112: #{neurotoken_transformer_forward.1} parent=79 // pred_fallthru
          _
        // Predicated region
        $region113: #{neurotoken_transformer_forward.1} parent=79 // pred_check
          %p659 = pneg %p235
        $region114: #{neurotoken_transformer_forward.1} parent=79 // pred_check_branch
          %661 = sbr.rel (%p659) target = $region116
        $region115: #{neurotoken_transformer_forward.1} parent=79 // pred_region
          %662 = dma.done [#allocation15], 64
        $region116: #{neurotoken_transformer_forward.1} parent=79 // pred_fallthru
          _
        // Predicated region
        $region117: #{neurotoken_transformer_forward.1} parent=79 // pred_check
          %p663 = pneg %p256
        $region118: #{neurotoken_transformer_forward.1} parent=79 // pred_check_branch
          %665 = sbr.rel (%p663) target = $region120
        $region119: #{neurotoken_transformer_forward.1} parent=79 // pred_region
          %666 = dma.done [#allocation18], 4096
        $region120: #{neurotoken_transformer_forward.1} parent=79 // pred_fallthru
          _
        // Predicated region
        $region121: #{neurotoken_transformer_forward.1} parent=79 // pred_check
          %p667 = pneg %p277
        $region122: #{neurotoken_transformer_forward.1} parent=79 // pred_check_branch
          %669 = sbr.rel (%p667) target = $region124
        $region123: #{neurotoken_transformer_forward.1} parent=79 // pred_region
          %670 = dma.done [#allocation18], 32
        $region124: #{neurotoken_transformer_forward.1} parent=79 // pred_fallthru
          _
        // Predicated region
        $region125: #{neurotoken_transformer_forward.1} parent=79 // pred_check
          %p671 = pneg %p298
        $region126: #{neurotoken_transformer_forward.1} parent=79 // pred_check_branch
          %673 = sbr.rel (%p671) target = $region128
        $region127: #{neurotoken_transformer_forward.1} parent=79 // pred_region
          %674 = dma.done [#allocation21], 32
        $region128: #{neurotoken_transformer_forward.1} parent=79 // pred_fallthru
          _
        // Predicated region
        $region129: #{neurotoken_transformer_forward.1} parent=79 // pred_check
          %p675 = pneg %p319
        $region130: #{neurotoken_transformer_forward.1} parent=79 // pred_check_branch
          %677 = sbr.rel (%p675) target = $region132
        $region131: #{neurotoken_transformer_forward.1} parent=79 // pred_region
          %678 = dma.done [#allocation21], 32
        $region132: #{neurotoken_transformer_forward.1} parent=79 // pred_fallthru
          _
        // Predicated region
        $region133: #{neurotoken_transformer_forward.1} parent=79 // pred_check
          %p679 = pneg %p340
        $region134: #{neurotoken_transformer_forward.1} parent=79 // pred_check_branch
          %681 = sbr.rel (%p679) target = $region136
        $region135: #{neurotoken_transformer_forward.1} parent=79 // pred_region
          %682 = dma.done [#allocation24], 512
        $region136: #{neurotoken_transformer_forward.1} parent=79 // pred_fallthru
          _
        // Predicated region
        $region137: #{neurotoken_transformer_forward.1} parent=79 // pred_check
          %p683 = pneg %p361
        $region138: #{neurotoken_transformer_forward.1} parent=79 // pred_check_branch
          %685 = sbr.rel (%p683) target = $region140
        $region139: #{neurotoken_transformer_forward.1} parent=79 // pred_region
          %686 = dma.done [#allocation24], 16
        $region140: #{neurotoken_transformer_forward.1} parent=79 // pred_fallthru
          _
        %s687 = sand.u32 %s49, 1
        %s688 = scalar_lea.sflag [#allocation3], %s687
        %s689 = sand.u32 %s49, 1
        %s690 = smul.addr %s689, 8
        %s691 = scalar_lea.vmem [#allocation2], %s690
        %p692 = pneg %p62
        %p693 = pneg %p59
        %s694 = sand.u32 %s41, 1
        %s695 = scalar_lea.sflag [#allocation6], %s694
        %s696 = sand.u32 %s75, 1
        %s697 = scalar_lea.vmem [#allocation5], %s696
        %p698 = pneg %p88
        %p699 = pneg %p85
        %p700 = pneg %p109
        %p701 = pneg %p106
        %p702 = pneg %p130
        %p703 = pneg %p127
        %p704 = pneg %p151
        %p705 = pneg %p148
        %p706 = pneg %p172
        %p707 = pneg %p169
        %p708 = pneg %p193
        %p709 = pneg %p190
        %p710 = pneg %p214
        %p711 = pneg %p211
        %p712 = pneg %p235
        %p713 = pneg %p232
        %p714 = pneg %p256
        %p715 = pneg %p253
        %p716 = pneg %p277
        %p717 = pneg %p274
        %p718 = pneg %p298
        %p719 = pneg %p295
        %p720 = pneg %p319
        %p721 = pneg %p316
        %p722 = pneg %p340
        %p723 = pneg %p337
        %p724 = pneg %p361
        %p725 = pneg %p358
        %p726 = pneg %p387
        %p727 = pneg %p384
        %s728 = sand.u32 %s374, 1
        %s729 = scalar_lea.sflag [#allocation4], %s728
        %s730 = sand.u32 %s374, 1
        %s731 = scalar_lea.vmem [#allocation26], %s730
        %v733 = vld [vmem:[%s630] sm:$0x1]
        %v734 = vld [vmem:[%s622] sm:$0xf]
        %v735 = vld [vmem:[%s622 + $0x4] sm:$0xf]
        %v736 = vunpack.c.l.bf16 %v734
        %v737 = vunpack.c.l.bf16 %v735
        %v738 = vld [vmem:[#allocation7] sm:$0xff]
        %v739 = vld [vmem:[#allocation7 + $0x8] sm:$0xf]
        %v740 = vld [vmem:[#allocation7 + $0xc] sm:$0xff]
        %v741 = vld [vmem:[#allocation7 + $0x14] sm:$0xf]
        %v742 = vld [vmem:[#allocation7 + $0x18] sm:$0xff]
        %v743 = vld [vmem:[#allocation7 + $0x20] sm:$0xf]
        %v744 = vld [vmem:[#allocation7 + $0x24] sm:$0xff]
        %v745 = vld [vmem:[#allocation7 + $0x2c] sm:$0xf]
        %v746 = vld [vmem:[#allocation7 + $0x30] sm:$0xff]
        %v747 = vld [vmem:[#allocation7 + $0x38] sm:$0xf]
        %v748 = vld [vmem:[#allocation7 + $0x3c] sm:$0xff]
        %v749 = vld [vmem:[#allocation7 + $0x44] sm:$0xf]
        %v750 = vld [vmem:[#allocation7 + $0x48] sm:$0xff]
        %v751 = vld [vmem:[#allocation7 + $0x50] sm:$0xf]
        %v752 = vld [vmem:[#allocation7 + $0x54] sm:$0xff]
        %v753 = vld [vmem:[#allocation7 + $0x5c] sm:$0xf]
        %v754 = vld [vmem:[#allocation8] sm:$0x7]
        %v756 = vlaneseq
        %v757 = vshrl.u32 %v756, 7
        %v758 = vsub.s32 0, %v757
        %v759 = vrot.slane %v754, %v758
        %v760 = vlaneseq
        %v761 = vshrl.u32 %v760, 7
        %v762 = vsub.s32 1, %v761
        %v763 = vrot.slane %v754, %v762
        %v764 = vlaneseq
        %v765 = vshrl.u32 %v764, 7
        %v766 = vsub.s32 2, %v765
        %v767 = vrot.slane %v754, %v766
        %v773 = vunpack.c.l.b16 %v734
        %v774 = vunpack.c.l.b16 %v735
        %v775 = vpack.c.b16 %v774, %v773
        %v792 = vunpack.c.l.b16 %v738
        %v793 = vunpack.c.h.b16 %v738
        %v794 = vunpack.c.l.b16 %v739
        %v795 = vunpack.c.l.b16 %v740
        %v796 = vunpack.c.h.b16 %v740
        %v797 = vunpack.c.l.b16 %v741
        %v798 = vunpack.c.l.b16 %v742
        %v799 = vunpack.c.h.b16 %v742
        %v800 = vunpack.c.l.b16 %v743
        %v801 = vunpack.c.l.b16 %v744
        %v802 = vunpack.c.h.b16 %v744
        %v803 = vunpack.c.l.b16 %v745
        %v804 = vunpack.c.l.b16 %v746
        %v805 = vunpack.c.h.b16 %v746
        %v806 = vunpack.c.l.b16 %v747
        %v807 = vunpack.c.l.b16 %v748
        %v808 = vunpack.c.h.b16 %v748
        %v809 = vunpack.c.l.b16 %v749
        %v810 = vunpack.c.l.b16 %v750
        %v811 = vunpack.c.h.b16 %v750
        %v812 = vunpack.c.l.b16 %v751
        %v813 = vunpack.c.l.b16 %v752
        %v814 = vunpack.c.h.b16 %v752
        %v815 = vunpack.c.l.b16 %v753
        %v816 = vpack.c.b16 %v795, %v792
        %v817 = vpack.c.b16 %v796, %v793
        %v818 = vpack.c.b16 %v797, %v794
        %v819 = vpack.c.b16 %v801, %v798
        %v820 = vpack.c.b16 %v802, %v799
        %v821 = vpack.c.b16 %v803, %v800
        %v822 = vpack.c.b16 %v807, %v804
        %v823 = vpack.c.b16 %v808, %v805
        %v824 = vpack.c.b16 %v809, %v806
        %v825 = vpack.c.b16 %v813, %v810
        %v826 = vpack.c.b16 %v814, %v811
        %v827 = vpack.c.b16 %v815, %v812
        %vm840 = vcmask 523264
        %v842 = vsel %vm840, %v775, 0
        %844 = vmatprep.subr.bf16.mxu0 %v817
        %845 = vmatpush1.bf16.msra.mxu0 %v816
        %846 = vmatprep.subr.bf16.mxu0 %v820
        %847 = vmatpush1.bf16.msra.mxu0 %v819
        %848 = vmatprep.subr.bf16.mxu0 %v823
        %849 = vmatpush1.bf16.msra.mxu0 %v822
        %850 = vmatprep.subr.bf16.mxu0 %v826
        %851 = vmatpush1.bf16.msra.mxu0 %v825
        %852 = vmatprep.subr.bf16.mxu0 0
        %853 = vmatpush1.bf16.msra.mxu0 0
        %854 = vmatprep.subr.bf16.mxu0 0
        %855 = vmatpush1.bf16.msra.mxu0 0
        %856 = vmatprep.subr.bf16.mxu0 0
        %857 = vmatpush1.bf16.msra.mxu0 0
        %858 = vmatprep.subr.bf16.mxu0 0
        %859 = vmatpush1.bf16.msra.mxu0 0
        %860 = vmatprep.subr.bf16.mxu0 0
        %861 = vmatpush1.bf16.msra.mxu0 0
        %862 = vmatprep.subr.bf16.mxu0 0
        %863 = vmatpush1.bf16.msra.mxu0 0
        %864 = vmatprep.subr.bf16.mxu0 0
        %865 = vmatpush1.bf16.msra.mxu0 0
        %866 = vmatprep.subr.bf16.mxu0 0
        %867 = vmatpush1.bf16.msra.mxu0 0
        %868 = vmatprep.subr.bf16.mxu0 0
        %869 = vmatpush1.bf16.msra.mxu0 0
        %870 = vmatprep.subr.bf16.mxu0 0
        %871 = vmatpush1.bf16.msra.mxu0 0
        %872 = vmatprep.subr.bf16.mxu0 0
        %873 = vmatpush1.bf16.msra.mxu0 0
        %874 = vmatprep.subr.bf16.mxu0 0
        %875 = vmatpush1.bf16.msra.mxu0 0
        %876 = vmatprep.mubr.bf16.mxu0 0
        %877 = vmatmul.mubr.bf16.gmra.mrb[0].mxu0 %v842
        %v878 = vpop.f32.mrb[0].mxu0
        %v879 = vadd.f32 %v759, %v878
        %v880 = vpop.f32.mrb[0].mxu0
        %v881 = vadd.f32 %v763, %v880
        %v882 = vpop.f32.mrb[0].mxu0
        %v883 = vadd.f32 %v759, %v882
        %v884 = vpop.f32.mrb[0].mxu0
        %v885 = vadd.f32 %v763, %v884
        %886 = vdwg.mxu0
        %887 = vmatprep.subr.bf16.mxu0 0
        %888 = vmatpush1.bf16.msra.mxu0 %v818
        %889 = vmatprep.subr.bf16.mxu0 0
        %890 = vmatpush1.bf16.msra.mxu0 %v821
        %891 = vmatprep.subr.bf16.mxu0 0
        %892 = vmatpush1.bf16.msra.mxu0 %v824
        %893 = vmatprep.subr.bf16.mxu0 0
        %894 = vmatpush1.bf16.msra.mxu0 %v827
        %895 = vmatprep.subr.bf16.mxu0 0
        %896 = vmatpush1.bf16.msra.mxu0 0
        %897 = vmatprep.subr.bf16.mxu0 0
        %898 = vmatpush1.bf16.msra.mxu0 0
        %899 = vmatprep.subr.bf16.mxu0 0
        %900 = vmatpush1.bf16.msra.mxu0 0
        %901 = vmatprep.subr.bf16.mxu0 0
        %902 = vmatpush1.bf16.msra.mxu0 0
        %903 = vmatprep.subr.bf16.mxu0 0
        %904 = vmatpush1.bf16.msra.mxu0 0
        %905 = vmatprep.subr.bf16.mxu0 0
        %906 = vmatpush1.bf16.msra.mxu0 0
        %907 = vmatprep.subr.bf16.mxu0 0
        %908 = vmatpush1.bf16.msra.mxu0 0
        %909 = vmatprep.subr.bf16.mxu0 0
        %910 = vmatpush1.bf16.msra.mxu0 0
        %911 = vmatprep.subr.bf16.mxu0 0
        %912 = vmatpush1.bf16.msra.mxu0 0
        %913 = vmatprep.subr.bf16.mxu0 0
        %914 = vmatpush1.bf16.msra.mxu0 0
        %915 = vmatprep.subr.bf16.mxu0 0
        %916 = vmatpush1.bf16.msra.mxu0 0
        %917 = vmatprep.subr.bf16.mxu0 0
        %918 = vmatpush1.bf16.msra.mxu0 0
        %919 = vmatprep.mubr.bf16.mxu0 0
        %920 = vmatmul.mubr.bf16.gmra.mrb[0].mxu0 %v842
        %v921 = vpop.f32.mrb[0].mxu0
        %v922 = vadd.f32 %v767, %v921
        %v923 = vpop.f32.mrb[0].mxu0
        %v924 = vpop.f32.mrb[0].mxu0
        %v925 = vadd.f32 %v767, %v924
        %v926 = vpop.f32.mrb[0].mxu0
        %927 = vdwg.mxu0
        %v928 = vpack.c.bf16 %v883, %v879
        %v929 = vpack.c.bf16 %v885, %v881
        %v931 = vlaneseq
        %v932 = vshrl.u32 %v931, 7
        %v933 = vsub.s32 0, %v932
        %v934 = vrot.slane %v733, %v933
        %937 = vrot.lane.b32.xlu0 %v928, 64
        %v938 = vpop.permute.xlu0 %937
        %vm939 = vcmask 130048
        %v941 = vsel %vm939, %v928, 0
        %v944 = vsel %vm939, %v938, 0
        %946 = vmatprep.subr.bf16.mxu0 0
        %947 = vmatpush1.bf16.xpose.msra.mxu0 %v944
        %948 = vmatprep.subr.bf16.mxu0 0
        %949 = vmatpush1.bf16.xpose.msra.mxu0 0
        %950 = vmatprep.subr.bf16.mxu0 0
        %951 = vmatpush1.bf16.xpose.msra.mxu0 0
        %952 = vmatprep.subr.bf16.mxu0 0
        %953 = vmatpush1.bf16.xpose.msra.mxu0 0
        %954 = vmatprep.subr.bf16.mxu0 0
        %955 = vmatpush1.bf16.xpose.msra.mxu0 0
        %956 = vmatprep.subr.bf16.mxu0 0
        %957 = vmatpush1.bf16.xpose.msra.mxu0 0
        %958 = vmatprep.subr.bf16.mxu0 0
        %959 = vmatpush1.bf16.xpose.msra.mxu0 0
        %960 = vmatprep.subr.bf16.mxu0 0
        %961 = vmatpush1.bf16.xpose.msra.mxu0 0
        %962 = vmatprep.subr.bf16.mxu0 0
        %963 = vmatpush1.bf16.xpose.msra.mxu0 0
        %964 = vmatprep.subr.bf16.mxu0 0
        %965 = vmatpush1.bf16.xpose.msra.mxu0 0
        %966 = vmatprep.subr.bf16.mxu0 0
        %967 = vmatpush1.bf16.xpose.msra.mxu0 0
        %968 = vmatprep.subr.bf16.mxu0 0
        %969 = vmatpush1.bf16.xpose.msra.mxu0 0
        %970 = vmatprep.subr.bf16.mxu0 0
        %971 = vmatpush1.bf16.xpose.msra.mxu0 0
        %972 = vmatprep.subr.bf16.mxu0 0
        %973 = vmatpush1.bf16.xpose.msra.mxu0 0
        %974 = vmatprep.subr.bf16.mxu0 0
        %975 = vmatpush1.bf16.xpose.msra.mxu0 0
        %976 = vmatprep.subr.bf16.mxu0 0
        %977 = vmatpush1.bf16.xpose.msra.mxu0 0
        %978 = vmatprep.mubr.bf16.mxu0 0
        %979 = vmatmul.mubr.bf16.gmra.mrb[0].mxu0 %v941
        %v980 = vpop.f32.mrb[0].mxu0
        %v981 = vadd.f32 %v934, %v980
        %v982 = vpop.f32.mrb[0].mxu0
        %v983 = vpop.f32.mrb[0].mxu0
        %v984 = vadd.f32 %v934, %v983
        %v985 = vpop.f32.mrb[0].mxu0
        %986 = vdwg.mxu0
        %v987 = vsel %vm939, %v981, -inf
        %988 = vmax.xlane.f32.xlu0 %v987
        %v989 = vpop.xlane.xlu0 %988
        %v990 = vsel %vm939, %v984, -inf
        %991 = vmax.xlane.f32.xlu0 %v990
        %v992 = vpop.xlane.xlu0 %991
        %v993 = vsub.f32 %v981, %v989
        %v994 = vsub.f32 %v984, %v992
        %v995 = vmul.f32 %v993, 1.442695
        %v996 = vpow.pop %v995
        %v997 = vmul.f32 %v994, 1.442695
        %v998 = vpow.pop %v997
        %v999 = vsel %vm939, %v996, 0.0
        %1000 = vadd.xlane.f32.xlu0 %v999
        %v1001 = vpop.xlane.xlu0 %1000
        %v1002 = vsel %vm939, %v998, 0.0
        %1003 = vadd.xlane.f32.xlu0 %v1002
        %v1004 = vpop.xlane.xlu0 %1003
        %v1005 = vrcp.pop %v1001
        %v1006 = vrcp.pop %v1004
        %v1007 = vmul.f32 %v996, %v1005
        %v1008 = vmul.f32 %v998, %v1006
        %v1009 = vpack.c.bf16 %v1008, %v1007
        %1010 = vrot.lane.b32.xlu0 %v928, 112
        %v1011 = vpop.permute.xlu0 %1010
        %1012 = vrot.lane.b32.xlu0 %v928, 48
        %v1013 = vpop.permute.xlu0 %1012
        %v1015 = vsel %vm939, %v1011, 0
        %v1018 = vsel %vm939, %v1013, 0
        %1020 = vmatprep.subr.bf16.mxu0 0
        %1021 = vmatpush1.bf16.xpose.msra.mxu0 %v1018
        %1022 = vmatprep.subr.bf16.mxu0 0
        %1023 = vmatpush1.bf16.xpose.msra.mxu0 0
        %1024 = vmatprep.subr.bf16.mxu0 0
        %1025 = vmatpush1.bf16.xpose.msra.mxu0 0
        %1026 = vmatprep.subr.bf16.mxu0 0
        %1027 = vmatpush1.bf16.xpose.msra.mxu0 0
        %1028 = vmatprep.subr.bf16.mxu0 0
        %1029 = vmatpush1.bf16.xpose.msra.mxu0 0
        %1030 = vmatprep.subr.bf16.mxu0 0
        %1031 = vmatpush1.bf16.xpose.msra.mxu0 0
        %1032 = vmatprep.subr.bf16.mxu0 0
        %1033 = vmatpush1.bf16.xpose.msra.mxu0 0
        %1034 = vmatprep.subr.bf16.mxu0 0
        %1035 = vmatpush1.bf16.xpose.msra.mxu0 0
        %1036 = vmatprep.subr.bf16.mxu0 0
        %1037 = vmatpush1.bf16.xpose.msra.mxu0 0
        %1038 = vmatprep.subr.bf16.mxu0 0
        %1039 = vmatpush1.bf16.xpose.msra.mxu0 0
        %1040 = vmatprep.subr.bf16.mxu0 0
        %1041 = vmatpush1.bf16.xpose.msra.mxu0 0
        %1042 = vmatprep.subr.bf16.mxu0 0
        %1043 = vmatpush1.bf16.xpose.msra.mxu0 0
        %1044 = vmatprep.subr.bf16.mxu0 0
        %1045 = vmatpush1.bf16.xpose.msra.mxu0 0
        %1046 = vmatprep.subr.bf16.mxu0 0
        %1047 = vmatpush1.bf16.xpose.msra.mxu0 0
        %1048 = vmatprep.subr.bf16.mxu0 0
        %1049 = vmatpush1.bf16.xpose.msra.mxu0 0
        %1050 = vmatprep.subr.bf16.mxu0 0
        %1051 = vmatpush1.bf16.xpose.msra.mxu0 0
        %1052 = vmatprep.mubr.bf16.mxu0 0
        %1053 = vmatmul.mubr.bf16.gmra.mrb[0].mxu0 %v1015
        %v1054 = vpop.f32.mrb[0].mxu0
        %v1055 = vadd.f32 %v934, %v1054
        %v1056 = vpop.f32.mrb[0].mxu0
        %v1057 = vpop.f32.mrb[0].mxu0
        %v1058 = vadd.f32 %v934, %v1057
        %v1059 = vpop.f32.mrb[0].mxu0
        %1060 = vdwg.mxu0
        %v1061 = vsel %vm939, %v1055, -inf
        %1062 = vmax.xlane.f32.xlu0 %v1061
        %v1063 = vpop.xlane.xlu0 %1062
        %v1064 = vsel %vm939, %v1058, -inf
        %1065 = vmax.xlane.f32.xlu0 %v1064
        %v1066 = vpop.xlane.xlu0 %1065
        %v1067 = vsub.f32 %v1055, %v1063
        %v1068 = vsub.f32 %v1058, %v1066
        %v1069 = vmul.f32 %v1067, 1.442695
        %v1070 = vpow.pop %v1069
        %v1071 = vmul.f32 %v1068, 1.442695
        %v1072 = vpow.pop %v1071
        %v1073 = vsel %vm939, %v1070, 0.0
        %1074 = vadd.xlane.f32.xlu0 %v1073
        %v1075 = vpop.xlane.xlu0 %1074
        %v1076 = vsel %vm939, %v1072, 0.0
        %1077 = vadd.xlane.f32.xlu0 %v1076
        %v1078 = vpop.xlane.xlu0 %1077
        %v1079 = vrcp.pop %v1075
        %v1080 = vrcp.pop %v1078
        %v1081 = vmul.f32 %v1070, %v1079
        %v1082 = vmul.f32 %v1072, %v1080
        %v1083 = vpack.c.bf16 %v1082, %v1081
        %1085 = vrot.lane.b32.xlu0 %v929, 64
        %v1086 = vpop.permute.xlu0 %1085
        %v1089 = vsel %vm939, %v1083, 0
        %1091 = vmatprep.subr.bf16.mxu0 0
        %1092 = vmatpush1.bf16.msra.mxu0 %v1086
        %1093 = vmatprep.subr.bf16.mxu0 0
        %1094 = vmatpush1.bf16.msra.mxu0 0
        %1095 = vmatprep.subr.bf16.mxu0 0
        %1096 = vmatpush1.bf16.msra.mxu0 0
        %1097 = vmatprep.subr.bf16.mxu0 0
        %1098 = vmatpush1.bf16.msra.mxu0 0
        %1099 = vmatprep.subr.bf16.mxu0 0
        %1100 = vmatpush1.bf16.msra.mxu0 0
        %1101 = vmatprep.subr.bf16.mxu0 0
        %1102 = vmatpush1.bf16.msra.mxu0 0
        %1103 = vmatprep.subr.bf16.mxu0 0
        %1104 = vmatpush1.bf16.msra.mxu0 0
        %1105 = vmatprep.subr.bf16.mxu0 0
        %1106 = vmatpush1.bf16.msra.mxu0 0
        %1107 = vmatprep.subr.bf16.mxu0 0
        %1108 = vmatpush1.bf16.msra.mxu0 0
        %1109 = vmatprep.subr.bf16.mxu0 0
        %1110 = vmatpush1.bf16.msra.mxu0 0
        %1111 = vmatprep.subr.bf16.mxu0 0
        %1112 = vmatpush1.bf16.msra.mxu0 0
        %1113 = vmatprep.subr.bf16.mxu0 0
        %1114 = vmatpush1.bf16.msra.mxu0 0
        %1115 = vmatprep.subr.bf16.mxu0 0
        %1116 = vmatpush1.bf16.msra.mxu0 0
        %1117 = vmatprep.subr.bf16.mxu0 0
        %1118 = vmatpush1.bf16.msra.mxu0 0
        %1119 = vmatprep.subr.bf16.mxu0 0
        %1120 = vmatpush1.bf16.msra.mxu0 0
        %1121 = vmatprep.subr.bf16.mxu0 0
        %1122 = vmatpush1.bf16.msra.mxu0 0
        %1123 = vmatprep.mubr.bf16.mxu0 0
        %1124 = vmatmul.mubr.bf16.gmra.mrb[0].mxu0 %v1089
        %v1125 = vpop.f32.mrb[0].mxu0
        %v1126 = vadd.f32 0.0, %v1125
        %v1127 = vpop.f32.mrb[0].mxu0
        %v1128 = vpop.f32.mrb[0].mxu0
        %v1129 = vadd.f32 0.0, %v1128
        %v1130 = vpop.f32.mrb[0].mxu0
        %1131 = vdwg.mxu0
        %v1133 = vsel %vm939, %v1009, 0
        %1135 = vmatprep.subr.bf16.mxu0 0
        %1136 = vmatpush1.bf16.msra.mxu0 %v929
        %1137 = vmatprep.subr.bf16.mxu0 0
        %1138 = vmatpush1.bf16.msra.mxu0 0
        %1139 = vmatprep.subr.bf16.mxu0 0
        %1140 = vmatpush1.bf16.msra.mxu0 0
        %1141 = vmatprep.subr.bf16.mxu0 0
        %1142 = vmatpush1.bf16.msra.mxu0 0
        %1143 = vmatprep.subr.bf16.mxu0 0
        %1144 = vmatpush1.bf16.msra.mxu0 0
        %1145 = vmatprep.subr.bf16.mxu0 0
        %1146 = vmatpush1.bf16.msra.mxu0 0
        %1147 = vmatprep.subr.bf16.mxu0 0
        %1148 = vmatpush1.bf16.msra.mxu0 0
        %1149 = vmatprep.subr.bf16.mxu0 0
        %1150 = vmatpush1.bf16.msra.mxu0 0
        %1151 = vmatprep.subr.bf16.mxu0 0
        %1152 = vmatpush1.bf16.msra.mxu0 0
        %1153 = vmatprep.subr.bf16.mxu0 0
        %1154 = vmatpush1.bf16.msra.mxu0 0
        %1155 = vmatprep.subr.bf16.mxu0 0
        %1156 = vmatpush1.bf16.msra.mxu0 0
        %1157 = vmatprep.subr.bf16.mxu0 0
        %1158 = vmatpush1.bf16.msra.mxu0 0
        %1159 = vmatprep.subr.bf16.mxu0 0
        %1160 = vmatpush1.bf16.msra.mxu0 0
        %1161 = vmatprep.subr.bf16.mxu0 0
        %1162 = vmatpush1.bf16.msra.mxu0 0
        %1163 = vmatprep.subr.bf16.mxu0 0
        %1164 = vmatpush1.bf16.msra.mxu0 0
        %1165 = vmatprep.subr.bf16.mxu0 0
        %1166 = vmatpush1.bf16.msra.mxu0 0
        %1167 = vmatprep.mubr.bf16.mxu0 0
        %1168 = vmatmul.mubr.bf16.gmra.mrb[0].mxu0 %v1133
        %v1169 = vpop.f32.mrb[0].mxu0
        %v1170 = vadd.f32 %v1126, %v1169
        %v1171 = vpop.f32.mrb[0].mxu0
        %v1172 = vpop.f32.mrb[0].mxu0
        %v1173 = vadd.f32 %v1129, %v1172
        %v1174 = vpop.f32.mrb[0].mxu0
        %1175 = vdwg.mxu0
        %v1176 = vpack.c.bf16 %v925, %v922
        %1177 = vrot.lane.b32.xlu0 %v928, 96
        %v1178 = vpop.permute.xlu0 %1177
        %1179 = vrot.lane.b32.xlu0 %v928, 32
        %v1180 = vpop.permute.xlu0 %1179
        %v1182 = vsel %vm939, %v1178, 0
        %v1185 = vsel %vm939, %v1180, 0
        %1187 = vmatprep.subr.bf16.mxu0 0
        %1188 = vmatpush1.bf16.xpose.msra.mxu0 %v1185
        %1189 = vmatprep.subr.bf16.mxu0 0
        %1190 = vmatpush1.bf16.xpose.msra.mxu0 0
        %1191 = vmatprep.subr.bf16.mxu0 0
        %1192 = vmatpush1.bf16.xpose.msra.mxu0 0
        %1193 = vmatprep.subr.bf16.mxu0 0
        %1194 = vmatpush1.bf16.xpose.msra.mxu0 0
        %1195 = vmatprep.subr.bf16.mxu0 0
        %1196 = vmatpush1.bf16.xpose.msra.mxu0 0
        %1197 = vmatprep.subr.bf16.mxu0 0
        %1198 = vmatpush1.bf16.xpose.msra.mxu0 0
        %1199 = vmatprep.subr.bf16.mxu0 0
        %1200 = vmatpush1.bf16.xpose.msra.mxu0 0
        %1201 = vmatprep.subr.bf16.mxu0 0
        %1202 = vmatpush1.bf16.xpose.msra.mxu0 0
        %1203 = vmatprep.subr.bf16.mxu0 0
        %1204 = vmatpush1.bf16.xpose.msra.mxu0 0
        %1205 = vmatprep.subr.bf16.mxu0 0
        %1206 = vmatpush1.bf16.xpose.msra.mxu0 0
        %1207 = vmatprep.subr.bf16.mxu0 0
        %1208 = vmatpush1.bf16.xpose.msra.mxu0 0
        %1209 = vmatprep.subr.bf16.mxu0 0
        %1210 = vmatpush1.bf16.xpose.msra.mxu0 0
        %1211 = vmatprep.subr.bf16.mxu0 0
        %1212 = vmatpush1.bf16.xpose.msra.mxu0 0
        %1213 = vmatprep.subr.bf16.mxu0 0
        %1214 = vmatpush1.bf16.xpose.msra.mxu0 0
        %1215 = vmatprep.subr.bf16.mxu0 0
        %1216 = vmatpush1.bf16.xpose.msra.mxu0 0
        %1217 = vmatprep.subr.bf16.mxu0 0
        %1218 = vmatpush1.bf16.xpose.msra.mxu0 0
        %1219 = vmatprep.mubr.bf16.mxu0 0
        %1220 = vmatmul.mubr.bf16.gmra.mrb[0].mxu0 %v1182
        %v1221 = vpop.f32.mrb[0].mxu0
        %v1222 = vadd.f32 %v934, %v1221
        %v1223 = vpop.f32.mrb[0].mxu0
        %v1224 = vpop.f32.mrb[0].mxu0
        %v1225 = vadd.f32 %v934, %v1224
        %v1226 = vpop.f32.mrb[0].mxu0
        %1227 = vdwg.mxu0
        %v1228 = vsel %vm939, %v1222, -inf
        %1229 = vmax.xlane.f32.xlu0 %v1228
        %v1230 = vpop.xlane.xlu0 %1229
        %v1231 = vsel %vm939, %v1225, -inf
        %1232 = vmax.xlane.f32.xlu0 %v1231
        %v1233 = vpop.xlane.xlu0 %1232
        %v1234 = vsub.f32 %v1222, %v1230
        %v1235 = vsub.f32 %v1225, %v1233
        %v1236 = vmul.f32 %v1234, 1.442695
        %v1237 = vpow.pop %v1236
        %v1238 = vmul.f32 %v1235, 1.442695
        %v1239 = vpow.pop %v1238
        %v1240 = vsel %vm939, %v1237, 0.0
        %1241 = vadd.xlane.f32.xlu0 %v1240
        %v1242 = vpop.xlane.xlu0 %1241
        %v1243 = vsel %vm939, %v1239, 0.0
        %1244 = vadd.xlane.f32.xlu0 %v1243
        %v1245 = vpop.xlane.xlu0 %1244
        %v1246 = vrcp.pop %v1242
        %v1247 = vrcp.pop %v1245
        %v1248 = vmul.f32 %v1237, %v1246
        %v1249 = vmul.f32 %v1239, %v1247
        %v1250 = vpack.c.bf16 %v1249, %v1248
        %v1252 = vsel %vm939, %v1250, 0
        %1254 = vmatprep.subr.bf16.mxu0 0
        %1255 = vmatpush1.bf16.msra.mxu0 %v1176
        %1256 = vmatprep.subr.bf16.mxu0 0
        %1257 = vmatpush1.bf16.msra.mxu0 0
        %1258 = vmatprep.subr.bf16.mxu0 0
        %1259 = vmatpush1.bf16.msra.mxu0 0
        %1260 = vmatprep.subr.bf16.mxu0 0
        %1261 = vmatpush1.bf16.msra.mxu0 0
        %1262 = vmatprep.subr.bf16.mxu0 0
        %1263 = vmatpush1.bf16.msra.mxu0 0
        %1264 = vmatprep.subr.bf16.mxu0 0
        %1265 = vmatpush1.bf16.msra.mxu0 0
        %1266 = vmatprep.subr.bf16.mxu0 0
        %1267 = vmatpush1.bf16.msra.mxu0 0
        %1268 = vmatprep.subr.bf16.mxu0 0
        %1269 = vmatpush1.bf16.msra.mxu0 0
        %1270 = vmatprep.subr.bf16.mxu0 0
        %1271 = vmatpush1.bf16.msra.mxu0 0
        %1272 = vmatprep.subr.bf16.mxu0 0
        %1273 = vmatpush1.bf16.msra.mxu0 0
        %1274 = vmatprep.subr.bf16.mxu0 0
        %1275 = vmatpush1.bf16.msra.mxu0 0
        %1276 = vmatprep.subr.bf16.mxu0 0
        %1277 = vmatpush1.bf16.msra.mxu0 0
        %1278 = vmatprep.subr.bf16.mxu0 0
        %1279 = vmatpush1.bf16.msra.mxu0 0
        %1280 = vmatprep.subr.bf16.mxu0 0
        %1281 = vmatpush1.bf16.msra.mxu0 0
        %1282 = vmatprep.subr.bf16.mxu0 0
        %1283 = vmatpush1.bf16.msra.mxu0 0
        %1284 = vmatprep.subr.bf16.mxu0 0
        %1285 = vmatpush1.bf16.msra.mxu0 0
        %1286 = vmatprep.mubr.bf16.mxu0 0
        %1287 = vmatmul.mubr.bf16.gmra.mrb[0].mxu0 %v1252
        %v1288 = vpop.f32.mrb[0].mxu0
        %v1289 = vadd.f32 0.0, %v1288
        %v1290 = vpop.f32.mrb[0].mxu0
        %v1291 = vpop.f32.mrb[0].mxu0
        %v1292 = vadd.f32 0.0, %v1291
        %v1293 = vpop.f32.mrb[0].mxu0
        %1294 = vdwg.mxu0
        %v1295 = vadd.f32 %v1170, %v1289
        %v1296 = vadd.f32 %v1173, %v1292
        %1297 = vrot.lane.b32.xlu0 %v928, 80
        %v1298 = vpop.permute.xlu0 %1297
        %1299 = vrot.lane.b32.xlu0 %v928, 16
        %v1300 = vpop.permute.xlu0 %1299
        %v1302 = vsel %vm939, %v1298, 0
        %v1305 = vsel %vm939, %v1300, 0
        %1307 = vmatprep.subr.bf16.mxu0 0
        %1308 = vmatpush1.bf16.xpose.msra.mxu0 %v1305
        %1309 = vmatprep.subr.bf16.mxu0 0
        %1310 = vmatpush1.bf16.xpose.msra.mxu0 0
        %1311 = vmatprep.subr.bf16.mxu0 0
        %1312 = vmatpush1.bf16.xpose.msra.mxu0 0
        %1313 = vmatprep.subr.bf16.mxu0 0
        %1314 = vmatpush1.bf16.xpose.msra.mxu0 0
        %1315 = vmatprep.subr.bf16.mxu0 0
        %1316 = vmatpush1.bf16.xpose.msra.mxu0 0
        %1317 = vmatprep.subr.bf16.mxu0 0
        %1318 = vmatpush1.bf16.xpose.msra.mxu0 0
        %1319 = vmatprep.subr.bf16.mxu0 0
        %1320 = vmatpush1.bf16.xpose.msra.mxu0 0
        %1321 = vmatprep.subr.bf16.mxu0 0
        %1322 = vmatpush1.bf16.xpose.msra.mxu0 0
        %1323 = vmatprep.subr.bf16.mxu0 0
        %1324 = vmatpush1.bf16.xpose.msra.mxu0 0
        %1325 = vmatprep.subr.bf16.mxu0 0
        %1326 = vmatpush1.bf16.xpose.msra.mxu0 0
        %1327 = vmatprep.subr.bf16.mxu0 0
        %1328 = vmatpush1.bf16.xpose.msra.mxu0 0
        %1329 = vmatprep.subr.bf16.mxu0 0
        %1330 = vmatpush1.bf16.xpose.msra.mxu0 0
        %1331 = vmatprep.subr.bf16.mxu0 0
        %1332 = vmatpush1.bf16.xpose.msra.mxu0 0
        %1333 = vmatprep.subr.bf16.mxu0 0
        %1334 = vmatpush1.bf16.xpose.msra.mxu0 0
        %1335 = vmatprep.subr.bf16.mxu0 0
        %1336 = vmatpush1.bf16.xpose.msra.mxu0 0
        %1337 = vmatprep.subr.bf16.mxu0 0
        %1338 = vmatpush1.bf16.xpose.msra.mxu0 0
        %1339 = vmatprep.mubr.bf16.mxu0 0
        %1340 = vmatmul.mubr.bf16.gmra.mrb[0].mxu0 %v1302
        %v1341 = vpop.f32.mrb[0].mxu0
        %v1342 = vadd.f32 %v934, %v1341
        %v1343 = vpop.f32.mrb[0].mxu0
        %v1344 = vpop.f32.mrb[0].mxu0
        %v1345 = vadd.f32 %v934, %v1344
        %v1346 = vpop.f32.mrb[0].mxu0
        %1347 = vdwg.mxu0
        %v1348 = vsel %vm939, %v1342, -inf
        %1349 = vmax.xlane.f32.xlu0 %v1348
        %v1350 = vpop.xlane.xlu0 %1349
        %v1351 = vsel %vm939, %v1345, -inf
        %1352 = vmax.xlane.f32.xlu0 %v1351
        %v1353 = vpop.xlane.xlu0 %1352
        %v1354 = vsub.f32 %v1342, %v1350
        %v1355 = vsub.f32 %v1345, %v1353
        %v1356 = vmul.f32 %v1354, 1.442695
        %v1357 = vpow.pop %v1356
        %v1358 = vmul.f32 %v1355, 1.442695
        %v1359 = vpow.pop %v1358
        %v1360 = vsel %vm939, %v1357, 0.0
        %1361 = vadd.xlane.f32.xlu0 %v1360
        %v1362 = vpop.xlane.xlu0 %1361
        %v1363 = vsel %vm939, %v1359, 0.0
        %1364 = vadd.xlane.f32.xlu0 %v1363
        %v1365 = vpop.xlane.xlu0 %1364
        %v1366 = vrcp.pop %v1362
        %v1367 = vrcp.pop %v1365
        %v1368 = vmul.f32 %v1357, %v1366
        %v1369 = vmul.f32 %v1359, %v1367
        %v1370 = vpack.c.bf16 %v1369, %v1368
        %1372 = vrot.lane.b32.xlu0 %v1176, 64
        %v1373 = vpop.permute.xlu0 %1372
        %v1376 = vsel %vm939, %v1370, 0
        %1378 = vmatprep.subr.bf16.mxu0 0
        %1379 = vmatpush1.bf16.msra.mxu0 %v1373
        %1380 = vmatprep.subr.bf16.mxu0 0
        %1381 = vmatpush1.bf16.msra.mxu0 0
        %1382 = vmatprep.subr.bf16.mxu0 0
        %1383 = vmatpush1.bf16.msra.mxu0 0
        %1384 = vmatprep.subr.bf16.mxu0 0
        %1385 = vmatpush1.bf16.msra.mxu0 0
        %1386 = vmatprep.subr.bf16.mxu0 0
        %1387 = vmatpush1.bf16.msra.mxu0 0
        %1388 = vmatprep.subr.bf16.mxu0 0
        %1389 = vmatpush1.bf16.msra.mxu0 0
        %1390 = vmatprep.subr.bf16.mxu0 0
        %1391 = vmatpush1.bf16.msra.mxu0 0
        %1392 = vmatprep.subr.bf16.mxu0 0
        %1393 = vmatpush1.bf16.msra.mxu0 0
        %1394 = vmatprep.subr.bf16.mxu0 0
        %1395 = vmatpush1.bf16.msra.mxu0 0
        %1396 = vmatprep.subr.bf16.mxu0 0
        %1397 = vmatpush1.bf16.msra.mxu0 0
        %1398 = vmatprep.subr.bf16.mxu0 0
        %1399 = vmatpush1.bf16.msra.mxu0 0
        %1400 = vmatprep.subr.bf16.mxu0 0
        %1401 = vmatpush1.bf16.msra.mxu0 0
        %1402 = vmatprep.subr.bf16.mxu0 0
        %1403 = vmatpush1.bf16.msra.mxu0 0
        %1404 = vmatprep.subr.bf16.mxu0 0
        %1405 = vmatpush1.bf16.msra.mxu0 0
        %1406 = vmatprep.subr.bf16.mxu0 0
        %1407 = vmatpush1.bf16.msra.mxu0 0
        %1408 = vmatprep.subr.bf16.mxu0 0
        %1409 = vmatpush1.bf16.msra.mxu0 0
        %1410 = vmatprep.mubr.bf16.mxu0 0
        %1411 = vmatmul.mubr.bf16.gmra.mrb[0].mxu0 %v1376
        %v1412 = vpop.f32.mrb[0].mxu0
        %v1413 = vadd.f32 0.0, %v1412
        %v1414 = vpop.f32.mrb[0].mxu0
        %v1415 = vpop.f32.mrb[0].mxu0
        %v1416 = vadd.f32 0.0, %v1415
        %v1417 = vpop.f32.mrb[0].mxu0
        %1418 = vdwg.mxu0
        %v1419 = vadd.f32 %v1295, %v1413
        %v1420 = vadd.f32 %v1296, %v1416
        %v1421 = vld [vmem:[#allocation10] sm:$0x1]
        %v1423 = vlaneseq
        %v1424 = vshrl.u32 %v1423, 7
        %v1425 = vsub.s32 0, %v1424
        %v1426 = vrot.slane %v1421, %v1425
        %v1428 = vadd.f32 %v1419, %v1426
        %v1429 = vadd.f32 %v1420, %v1426
        %v1430 = vadd.f32 %v736, %v1428
        %v1431 = vadd.f32 %v737, %v1429
        %v1432 = vld [vmem:[#allocation11] sm:$0x1]
        %v1433 = vld [vmem:[#allocation13] sm:$0x1]
        %v1434 = vsel %vm840, %v1430, 0.0
        %1435 = vadd.xlane.f32.xlu0 %v1434
        %v1436 = vpop.xlane.xlu0 %1435
        %v1437 = vsel %vm840, %v1431, 0.0
        %1438 = vadd.xlane.f32.xlu0 %v1437
        %v1439 = vpop.xlane.xlu0 %1438
        %v1440 = vrcp.pop 64.0
        %v1441 = vmul.f32 %v1436, %v1440
        %v1442 = vmul.f32 %v1439, %v1440
        %v1443 = vsub.f32 %v1430, %v1441
        %v1444 = vsub.f32 %v1431, %v1442
        %v1445 = vmul.f32 %v1443, %v1443
        %v1446 = vmul.f32 %v1444, %v1444
        %v1447 = vsel %vm840, %v1445, 0.0
        %1448 = vadd.xlane.f32.xlu0 %v1447
        %v1449 = vpop.xlane.xlu0 %1448
        %v1450 = vsel %vm840, %v1446, 0.0
        %1451 = vadd.xlane.f32.xlu0 %v1450
        %v1452 = vpop.xlane.xlu0 %1451
        %v1453 = vmul.f32 %v1449, %v1440
        %v1454 = vmul.f32 %v1452, %v1440
        %v1455 = vadd.f32 %v1453, 1e-05
        %v1456 = vadd.f32 %v1454, 1e-05
        %v1457 = vrsqrt.pop %v1455
        %v1458 = vrsqrt.pop %v1456
        %v1459 = vmul.f32 %v1443, %v1457
        %v1460 = vmul.f32 %v1444, %v1458
        %v1462 = vlaneseq
        %v1463 = vshrl.u32 %v1462, 7
        %v1464 = vsub.s32 0, %v1463
        %v1465 = vrot.slane %v1432, %v1464
        %v1467 = vmul.f32 %v1459, %v1465
        %v1468 = vmul.f32 %v1460, %v1465
        %v1470 = vlaneseq
        %v1471 = vshrl.u32 %v1470, 7
        %v1472 = vsub.s32 0, %v1471
        %v1473 = vrot.slane %v1433, %v1472
        %v1475 = vadd.f32 %v1467, %v1473
        %v1476 = vadd.f32 %v1468, %v1473
        %v1477 = vpack.c.bf16 %v1476, %v1475
        %v1478 = vld [vmem:[#allocation14] sm:$0xff]
        %v1479 = vld [vmem:[#allocation14 + $0x8] sm:$0xff]
        %v1480 = vld [vmem:[#allocation14 + $0x10] sm:$0xff]
        %v1481 = vld [vmem:[#allocation14 + $0x18] sm:$0xff]
        %v1482 = vld [vmem:[#allocation14 + $0x20] sm:$0xff]
        %v1483 = vld [vmem:[#allocation14 + $0x28] sm:$0xff]
        %v1484 = vld [vmem:[#allocation14 + $0x30] sm:$0xff]
        %v1485 = vld [vmem:[#allocation14 + $0x38] sm:$0xff]
        %v1486 = vld [vmem:[#allocation16] sm:$0x3]
        %v1488 = vlaneseq
        %v1489 = vshrl.u32 %v1488, 7
        %v1490 = vsub.s32 0, %v1489
        %v1491 = vrot.slane %v1486, %v1490
        %v1492 = vlaneseq
        %v1493 = vshrl.u32 %v1492, 7
        %v1494 = vsub.s32 1, %v1493
        %v1495 = vrot.slane %v1486, %v1494
        %v1506 = vunpack.c.l.b16 %v1478
        %v1507 = vunpack.c.h.b16 %v1478
        %v1508 = vunpack.c.l.b16 %v1479
        %v1509 = vunpack.c.h.b16 %v1479
        %v1510 = vunpack.c.l.b16 %v1480
        %v1511 = vunpack.c.h.b16 %v1480
        %v1512 = vunpack.c.l.b16 %v1481
        %v1513 = vunpack.c.h.b16 %v1481
        %v1514 = vunpack.c.l.b16 %v1482
        %v1515 = vunpack.c.h.b16 %v1482
        %v1516 = vunpack.c.l.b16 %v1483
        %v1517 = vunpack.c.h.b16 %v1483
        %v1518 = vunpack.c.l.b16 %v1484
        %v1519 = vunpack.c.h.b16 %v1484
        %v1520 = vunpack.c.l.b16 %v1485
        %v1521 = vunpack.c.h.b16 %v1485
        %v1522 = vpack.c.b16 %v1508, %v1506
        %v1523 = vpack.c.b16 %v1509, %v1507
        %v1524 = vpack.c.b16 %v1512, %v1510
        %v1525 = vpack.c.b16 %v1513, %v1511
        %v1526 = vpack.c.b16 %v1516, %v1514
        %v1527 = vpack.c.b16 %v1517, %v1515
        %v1528 = vpack.c.b16 %v1520, %v1518
        %v1529 = vpack.c.b16 %v1521, %v1519
        %v1539 = vsel %vm840, %v1477, 0
        %1541 = vmatprep.subr.bf16.mxu0 %v1523
        %1542 = vmatpush1.bf16.msra.mxu0 %v1522
        %1543 = vmatprep.subr.bf16.mxu0 %v1525
        %1544 = vmatpush1.bf16.msra.mxu0 %v1524
        %1545 = vmatprep.subr.bf16.mxu0 %v1527
        %1546 = vmatpush1.bf16.msra.mxu0 %v1526
        %1547 = vmatprep.subr.bf16.mxu0 %v1529
        %1548 = vmatpush1.bf16.msra.mxu0 %v1528
        %1549 = vmatprep.subr.bf16.mxu0 0
        %1550 = vmatpush1.bf16.msra.mxu0 0
        %1551 = vmatprep.subr.bf16.mxu0 0
        %1552 = vmatpush1.bf16.msra.mxu0 0
        %1553 = vmatprep.subr.bf16.mxu0 0
        %1554 = vmatpush1.bf16.msra.mxu0 0
        %1555 = vmatprep.subr.bf16.mxu0 0
        %1556 = vmatpush1.bf16.msra.mxu0 0
        %1557 = vmatprep.subr.bf16.mxu0 0
        %1558 = vmatpush1.bf16.msra.mxu0 0
        %1559 = vmatprep.subr.bf16.mxu0 0
        %1560 = vmatpush1.bf16.msra.mxu0 0
        %1561 = vmatprep.subr.bf16.mxu0 0
        %1562 = vmatpush1.bf16.msra.mxu0 0
        %1563 = vmatprep.subr.bf16.mxu0 0
        %1564 = vmatpush1.bf16.msra.mxu0 0
        %1565 = vmatprep.subr.bf16.mxu0 0
        %1566 = vmatpush1.bf16.msra.mxu0 0
        %1567 = vmatprep.subr.bf16.mxu0 0
        %1568 = vmatpush1.bf16.msra.mxu0 0
        %1569 = vmatprep.subr.bf16.mxu0 0
        %1570 = vmatpush1.bf16.msra.mxu0 0
        %1571 = vmatprep.subr.bf16.mxu0 0
        %1572 = vmatpush1.bf16.msra.mxu0 0
        %1573 = vmatprep.mubr.bf16.mxu0 0
        %1574 = vmatmul.mubr.bf16.gmra.mrb[0].mxu0 %v1539
        %v1575 = vpop.f32.mrb[0].mxu0
        %v1576 = vadd.f32 %v1491, %v1575
        %v1577 = vpop.f32.mrb[0].mxu0
        %v1578 = vadd.f32 %v1495, %v1577
        %v1579 = vpop.f32.mrb[0].mxu0
        %v1580 = vadd.f32 %v1491, %v1579
        %v1581 = vpop.f32.mrb[0].mxu0
        %v1582 = vadd.f32 %v1495, %v1581
        %1583 = vdwg.mxu0
        %v1584 = vmax.f32 %v1576, 0.0
        %v1585 = vmax.f32 %v1578, 0.0
        %v1586 = vmax.f32 %v1580, 0.0
        %v1587 = vmax.f32 %v1582, 0.0
        %v1588 = vpack.c.bf16 %v1586, %v1584
        %v1589 = vpack.c.bf16 %v1587, %v1585
        %v1590 = vld [vmem:[#allocation17] sm:$0xf]
        %v1591 = vld [vmem:[#allocation17 + $0x4] sm:$0xf]
        %v1592 = vld [vmem:[#allocation17 + $0x8] sm:$0xf]
        %v1593 = vld [vmem:[#allocation17 + $0xc] sm:$0xf]
        %v1594 = vld [vmem:[#allocation17 + $0x10] sm:$0xf]
        %v1595 = vld [vmem:[#allocation17 + $0x14] sm:$0xf]
        %v1596 = vld [vmem:[#allocation17 + $0x18] sm:$0xf]
        %v1597 = vld [vmem:[#allocation17 + $0x1c] sm:$0xf]
        %v1598 = vld [vmem:[#allocation17 + $0x20] sm:$0xf]
        %v1599 = vld [vmem:[#allocation17 + $0x24] sm:$0xf]
        %v1600 = vld [vmem:[#allocation17 + $0x28] sm:$0xf]
        %v1601 = vld [vmem:[#allocation17 + $0x2c] sm:$0xf]
        %v1602 = vld [vmem:[#allocation17 + $0x30] sm:$0xf]
        %v1603 = vld [vmem:[#allocation17 + $0x34] sm:$0xf]
        %v1604 = vld [vmem:[#allocation17 + $0x38] sm:$0xf]
        %v1605 = vld [vmem:[#allocation17 + $0x3c] sm:$0xf]
        %v1606 = vld [vmem:[#allocation17 + $0x40] sm:$0xf]
        %v1607 = vld [vmem:[#allocation17 + $0x44] sm:$0xf]
        %v1608 = vld [vmem:[#allocation17 + $0x48] sm:$0xf]
        %v1609 = vld [vmem:[#allocation17 + $0x4c] sm:$0xf]
        %v1610 = vld [vmem:[#allocation17 + $0x50] sm:$0xf]
        %v1611 = vld [vmem:[#allocation17 + $0x54] sm:$0xf]
        %v1612 = vld [vmem:[#allocation17 + $0x58] sm:$0xf]
        %v1613 = vld [vmem:[#allocation17 + $0x5c] sm:$0xf]
        %v1614 = vld [vmem:[#allocation17 + $0x60] sm:$0xf]
        %v1615 = vld [vmem:[#allocation17 + $0x64] sm:$0xf]
        %v1616 = vld [vmem:[#allocation17 + $0x68] sm:$0xf]
        %v1617 = vld [vmem:[#allocation17 + $0x6c] sm:$0xf]
        %v1618 = vld [vmem:[#allocation17 + $0x70] sm:$0xf]
        %v1619 = vld [vmem:[#allocation17 + $0x74] sm:$0xf]
        %v1620 = vld [vmem:[#allocation17 + $0x78] sm:$0xf]
        %v1621 = vld [vmem:[#allocation17 + $0x7c] sm:$0xf]
        %v1622 = vld [vmem:[#allocation19] sm:$0x1]
        %v1624 = vlaneseq
        %v1625 = vshrl.u32 %v1624, 7
        %v1626 = vsub.s32 0, %v1625
        %v1627 = vrot.slane %v1622, %v1626
        %v1661 = vunpack.c.l.b16 %v1590
        %v1662 = vunpack.c.l.b16 %v1591
        %v1663 = vunpack.c.l.b16 %v1592
        %v1664 = vunpack.c.l.b16 %v1593
        %v1665 = vunpack.c.l.b16 %v1594
        %v1666 = vunpack.c.l.b16 %v1595
        %v1667 = vunpack.c.l.b16 %v1596
        %v1668 = vunpack.c.l.b16 %v1597
        %v1669 = vunpack.c.l.b16 %v1598
        %v1670 = vunpack.c.l.b16 %v1599
        %v1671 = vunpack.c.l.b16 %v1600
        %v1672 = vunpack.c.l.b16 %v1601
        %v1673 = vunpack.c.l.b16 %v1602
        %v1674 = vunpack.c.l.b16 %v1603
        %v1675 = vunpack.c.l.b16 %v1604
        %v1676 = vunpack.c.l.b16 %v1605
        %v1677 = vunpack.c.l.b16 %v1606
        %v1678 = vunpack.c.l.b16 %v1607
        %v1679 = vunpack.c.l.b16 %v1608
        %v1680 = vunpack.c.l.b16 %v1609
        %v1681 = vunpack.c.l.b16 %v1610
        %v1682 = vunpack.c.l.b16 %v1611
        %v1683 = vunpack.c.l.b16 %v1612
        %v1684 = vunpack.c.l.b16 %v1613
        %v1685 = vunpack.c.l.b16 %v1614
        %v1686 = vunpack.c.l.b16 %v1615
        %v1687 = vunpack.c.l.b16 %v1616
        %v1688 = vunpack.c.l.b16 %v1617
        %v1689 = vunpack.c.l.b16 %v1618
        %v1690 = vunpack.c.l.b16 %v1619
        %v1691 = vunpack.c.l.b16 %v1620
        %v1692 = vunpack.c.l.b16 %v1621
        %v1693 = vpack.c.b16 %v1662, %v1661
        %v1694 = vpack.c.b16 %v1664, %v1663
        %v1695 = vpack.c.b16 %v1666, %v1665
        %v1696 = vpack.c.b16 %v1668, %v1667
        %v1697 = vpack.c.b16 %v1670, %v1669
        %v1698 = vpack.c.b16 %v1672, %v1671
        %v1699 = vpack.c.b16 %v1674, %v1673
        %v1700 = vpack.c.b16 %v1676, %v1675
        %v1701 = vpack.c.b16 %v1678, %v1677
        %v1702 = vpack.c.b16 %v1680, %v1679
        %v1703 = vpack.c.b16 %v1682, %v1681
        %v1704 = vpack.c.b16 %v1684, %v1683
        %v1705 = vpack.c.b16 %v1686, %v1685
        %v1706 = vpack.c.b16 %v1688, %v1687
        %v1707 = vpack.c.b16 %v1690, %v1689
        %v1708 = vpack.c.b16 %v1692, %v1691
        %1725 = vmatprep.subr.bf16.mxu0 0
        %1726 = vmatpush1.bf16.msra.mxu0 %v1693
        %1727 = vmatprep.subr.bf16.mxu0 0
        %1728 = vmatpush1.bf16.msra.mxu0 %v1694
        %1729 = vmatprep.subr.bf16.mxu0 0
        %1730 = vmatpush1.bf16.msra.mxu0 %v1695
        %1731 = vmatprep.subr.bf16.mxu0 0
        %1732 = vmatpush1.bf16.msra.mxu0 %v1696
        %1733 = vmatprep.subr.bf16.mxu0 0
        %1734 = vmatpush1.bf16.msra.mxu0 %v1697
        %1735 = vmatprep.subr.bf16.mxu0 0
        %1736 = vmatpush1.bf16.msra.mxu0 %v1698
        %1737 = vmatprep.subr.bf16.mxu0 0
        %1738 = vmatpush1.bf16.msra.mxu0 %v1699
        %1739 = vmatprep.subr.bf16.mxu0 0
        %1740 = vmatpush1.bf16.msra.mxu0 %v1700
        %1741 = vmatprep.subr.bf16.mxu0 0
        %1742 = vmatpush1.bf16.msra.mxu0 %v1701
        %1743 = vmatprep.subr.bf16.mxu0 0
        %1744 = vmatpush1.bf16.msra.mxu0 %v1702
        %1745 = vmatprep.subr.bf16.mxu0 0
        %1746 = vmatpush1.bf16.msra.mxu0 %v1703
        %1747 = vmatprep.subr.bf16.mxu0 0
        %1748 = vmatpush1.bf16.msra.mxu0 %v1704
        %1749 = vmatprep.subr.bf16.mxu0 0
        %1750 = vmatpush1.bf16.msra.mxu0 %v1705
        %1751 = vmatprep.subr.bf16.mxu0 0
        %1752 = vmatpush1.bf16.msra.mxu0 %v1706
        %1753 = vmatprep.subr.bf16.mxu0 0
        %1754 = vmatpush1.bf16.msra.mxu0 %v1707
        %1755 = vmatprep.subr.bf16.mxu0 0
        %1756 = vmatpush1.bf16.msra.mxu0 %v1708
        %1757 = vmatprep.mubr.bf16.mxu0 %v1589
        %1758 = vmatmul.mubr.bf16.gmra.mrb[0].mxu0 %v1588
        %v1759 = vpop.f32.mrb[0].mxu0
        %v1760 = vadd.f32 %v1627, %v1759
        %v1761 = vpop.f32.mrb[0].mxu0
        %v1762 = vpop.f32.mrb[0].mxu0
        %v1763 = vadd.f32 %v1627, %v1762
        %v1764 = vpop.f32.mrb[0].mxu0
        %1765 = vdwg.mxu0
        %v1766 = vadd.f32 %v1475, %v1760
        %v1767 = vadd.f32 %v1476, %v1763
        %v1768 = vld [vmem:[#allocation20] sm:$0x1]
        %v1769 = vld [vmem:[#allocation22] sm:$0x1]
        %v1770 = vsel %vm840, %v1766, 0.0
        %1771 = vadd.xlane.f32.xlu0 %v1770
        %v1772 = vpop.xlane.xlu0 %1771
        %v1773 = vsel %vm840, %v1767, 0.0
        %1774 = vadd.xlane.f32.xlu0 %v1773
        %v1775 = vpop.xlane.xlu0 %1774
        %v1776 = vmul.f32 %v1772, %v1440
        %v1777 = vmul.f32 %v1775, %v1440
        %v1778 = vsub.f32 %v1766, %v1776
        %v1779 = vsub.f32 %v1767, %v1777
        %v1780 = vmul.f32 %v1778, %v1778
        %v1781 = vmul.f32 %v1779, %v1779
        %v1782 = vsel %vm840, %v1780, 0.0
        %1783 = vadd.xlane.f32.xlu0 %v1782
        %v1784 = vpop.xlane.xlu0 %1783
        %v1785 = vsel %vm840, %v1781, 0.0
        %1786 = vadd.xlane.f32.xlu0 %v1785
        %v1787 = vpop.xlane.xlu0 %1786
        %v1788 = vmul.f32 %v1784, %v1440
        %v1789 = vmul.f32 %v1787, %v1440
        %v1790 = vadd.f32 %v1788, 1e-05
        %v1791 = vadd.f32 %v1789, 1e-05
        %v1792 = vrsqrt.pop %v1790
        %v1793 = vrsqrt.pop %v1791
        %v1794 = vmul.f32 %v1778, %v1792
        %v1795 = vmul.f32 %v1779, %v1793
        %v1797 = vlaneseq
        %v1798 = vshrl.u32 %v1797, 7
        %v1799 = vsub.s32 0, %v1798
        %v1800 = vrot.slane %v1768, %v1799
        %v1802 = vmul.f32 %v1794, %v1800
        %v1803 = vmul.f32 %v1795, %v1800
        %v1805 = vlaneseq
        %v1806 = vshrl.u32 %v1805, 7
        %v1807 = vsub.s32 0, %v1806
        %v1808 = vrot.slane %v1769, %v1807
        %v1810 = vadd.f32 %v1802, %v1808
        %v1811 = vadd.f32 %v1803, %v1808
        %v1812 = vpack.c.bf16 %v1811, %v1810
        %s1813 = scalar_lea.vmem [#allocation7], 96
        %v1814 = vld [vmem:[%s1813] sm:$0xff]
        %v1815 = vld [vmem:[%s1813 + $0x8] sm:$0xf]
        %v1816 = vld [vmem:[%s1813 + $0xc] sm:$0xff]
        %v1817 = vld [vmem:[%s1813 + $0x14] sm:$0xf]
        %v1818 = vld [vmem:[%s1813 + $0x18] sm:$0xff]
        %v1819 = vld [vmem:[%s1813 + $0x20] sm:$0xf]
        %v1820 = vld [vmem:[%s1813 + $0x24] sm:$0xff]
        %v1821 = vld [vmem:[%s1813 + $0x2c] sm:$0xf]
        %v1822 = vld [vmem:[%s1813 + $0x30] sm:$0xff]
        %v1823 = vld [vmem:[%s1813 + $0x38] sm:$0xf]
        %v1824 = vld [vmem:[%s1813 + $0x3c] sm:$0xff]
        %v1825 = vld [vmem:[%s1813 + $0x44] sm:$0xf]
        %v1826 = vld [vmem:[%s1813 + $0x48] sm:$0xff]
        %v1827 = vld [vmem:[%s1813 + $0x50] sm:$0xf]
        %v1828 = vld [vmem:[%s1813 + $0x54] sm:$0xff]
        %v1829 = vld [vmem:[%s1813 + $0x5c] sm:$0xf]
        %s1830 = scalar_lea.vmem [#allocation8], 3
        %v1831 = vld [vmem:[%s1830] sm:$0x7]
        %v1833 = vlaneseq
        %v1834 = vshrl.u32 %v1833, 7
        %v1835 = vsub.s32 0, %v1834
        %v1836 = vrot.slane %v1831, %v1835
        %v1837 = vlaneseq
        %v1838 = vshrl.u32 %v1837, 7
        %v1839 = vsub.s32 1, %v1838
        %v1840 = vrot.slane %v1831, %v1839
        %v1841 = vlaneseq
        %v1842 = vshrl.u32 %v1841, 7
        %v1843 = vsub.s32 2, %v1842
        %v1844 = vrot.slane %v1831, %v1843
        %v1864 = vunpack.c.l.b16 %v1814
        %v1865 = vunpack.c.h.b16 %v1814
        %v1866 = vunpack.c.l.b16 %v1815
        %v1867 = vunpack.c.l.b16 %v1816
        %v1868 = vunpack.c.h.b16 %v1816
        %v1869 = vunpack.c.l.b16 %v1817
        %v1870 = vunpack.c.l.b16 %v1818
        %v1871 = vunpack.c.h.b16 %v1818
        %v1872 = vunpack.c.l.b16 %v1819
        %v1873 = vunpack.c.l.b16 %v1820
        %v1874 = vunpack.c.h.b16 %v1820
        %v1875 = vunpack.c.l.b16 %v1821
        %v1876 = vunpack.c.l.b16 %v1822
        %v1877 = vunpack.c.h.b16 %v1822
        %v1878 = vunpack.c.l.b16 %v1823
        %v1879 = vunpack.c.l.b16 %v1824
        %v1880 = vunpack.c.h.b16 %v1824
        %v1881 = vunpack.c.l.b16 %v1825
        %v1882 = vunpack.c.l.b16 %v1826
        %v1883 = vunpack.c.h.b16 %v1826
        %v1884 = vunpack.c.l.b16 %v1827
        %v1885 = vunpack.c.l.b16 %v1828
        %v1886 = vunpack.c.h.b16 %v1828
        %v1887 = vunpack.c.l.b16 %v1829
        %v1888 = vpack.c.b16 %v1867, %v1864
        %v1889 = vpack.c.b16 %v1868, %v1865
        %v1890 = vpack.c.b16 %v1869, %v1866
        %v1891 = vpack.c.b16 %v1873, %v1870
        %v1892 = vpack.c.b16 %v1874, %v1871
        %v1893 = vpack.c.b16 %v1875, %v1872
        %v1894 = vpack.c.b16 %v1879, %v1876
        %v1895 = vpack.c.b16 %v1880, %v1877
        %v1896 = vpack.c.b16 %v1881, %v1878
        %v1897 = vpack.c.b16 %v1885, %v1882
        %v1898 = vpack.c.b16 %v1886, %v1883
        %v1899 = vpack.c.b16 %v1887, %v1884
        %v1913 = vsel %vm840, %v1812, 0
        %1915 = vmatprep.subr.bf16.mxu0 %v1889
        %1916 = vmatpush1.bf16.msra.mxu0 %v1888
        %1917 = vmatprep.subr.bf16.mxu0 %v1892
        %1918 = vmatpush1.bf16.msra.mxu0 %v1891
        %1919 = vmatprep.subr.bf16.mxu0 %v1895
        %1920 = vmatpush1.bf16.msra.mxu0 %v1894
        %1921 = vmatprep.subr.bf16.mxu0 %v1898
        %1922 = vmatpush1.bf16.msra.mxu0 %v1897
        %1923 = vmatprep.subr.bf16.mxu0 0
        %1924 = vmatpush1.bf16.msra.mxu0 0
        %1925 = vmatprep.subr.bf16.mxu0 0
        %1926 = vmatpush1.bf16.msra.mxu0 0
        %1927 = vmatprep.subr.bf16.mxu0 0
        %1928 = vmatpush1.bf16.msra.mxu0 0
        %1929 = vmatprep.subr.bf16.mxu0 0
        %1930 = vmatpush1.bf16.msra.mxu0 0
        %1931 = vmatprep.subr.bf16.mxu0 0
        %1932 = vmatpush1.bf16.msra.mxu0 0
        %1933 = vmatprep.subr.bf16.mxu0 0
        %1934 = vmatpush1.bf16.msra.mxu0 0
        %1935 = vmatprep.subr.bf16.mxu0 0
        %1936 = vmatpush1.bf16.msra.mxu0 0
        %1937 = vmatprep.subr.bf16.mxu0 0
        %1938 = vmatpush1.bf16.msra.mxu0 0
        %1939 = vmatprep.subr.bf16.mxu0 0
        %1940 = vmatpush1.bf16.msra.mxu0 0
        %1941 = vmatprep.subr.bf16.mxu0 0
        %1942 = vmatpush1.bf16.msra.mxu0 0
        %1943 = vmatprep.subr.bf16.mxu0 0
        %1944 = vmatpush1.bf16.msra.mxu0 0
        %1945 = vmatprep.subr.bf16.mxu0 0
        %1946 = vmatpush1.bf16.msra.mxu0 0
        %1947 = vmatprep.mubr.bf16.mxu0 0
        %1948 = vmatmul.mubr.bf16.gmra.mrb[0].mxu0 %v1913
        %v1949 = vpop.f32.mrb[0].mxu0
        %v1950 = vadd.f32 %v1836, %v1949
        %v1951 = vpop.f32.mrb[0].mxu0
        %v1952 = vadd.f32 %v1840, %v1951
        %v1953 = vpop.f32.mrb[0].mxu0
        %v1954 = vadd.f32 %v1836, %v1953
        %v1955 = vpop.f32.mrb[0].mxu0
        %v1956 = vadd.f32 %v1840, %v1955
        %1957 = vdwg.mxu0
        %1958 = vmatprep.subr.bf16.mxu0 0
        %1959 = vmatpush1.bf16.msra.mxu0 %v1890
        %1960 = vmatprep.subr.bf16.mxu0 0
        %1961 = vmatpush1.bf16.msra.mxu0 %v1893
        %1962 = vmatprep.subr.bf16.mxu0 0
        %1963 = vmatpush1.bf16.msra.mxu0 %v1896
        %1964 = vmatprep.subr.bf16.mxu0 0
        %1965 = vmatpush1.bf16.msra.mxu0 %v1899
        %1966 = vmatprep.subr.bf16.mxu0 0
        %1967 = vmatpush1.bf16.msra.mxu0 0
        %1968 = vmatprep.subr.bf16.mxu0 0
        %1969 = vmatpush1.bf16.msra.mxu0 0
        %1970 = vmatprep.subr.bf16.mxu0 0
        %1971 = vmatpush1.bf16.msra.mxu0 0
        %1972 = vmatprep.subr.bf16.mxu0 0
        %1973 = vmatpush1.bf16.msra.mxu0 0
        %1974 = vmatprep.subr.bf16.mxu0 0
        %1975 = vmatpush1.bf16.msra.mxu0 0
        %1976 = vmatprep.subr.bf16.mxu0 0
        %1977 = vmatpush1.bf16.msra.mxu0 0
        %1978 = vmatprep.subr.bf16.mxu0 0
        %1979 = vmatpush1.bf16.msra.mxu0 0
        %1980 = vmatprep.subr.bf16.mxu0 0
        %1981 = vmatpush1.bf16.msra.mxu0 0
        %1982 = vmatprep.subr.bf16.mxu0 0
        %1983 = vmatpush1.bf16.msra.mxu0 0
        %1984 = vmatprep.subr.bf16.mxu0 0
        %1985 = vmatpush1.bf16.msra.mxu0 0
        %1986 = vmatprep.subr.bf16.mxu0 0
        %1987 = vmatpush1.bf16.msra.mxu0 0
        %1988 = vmatprep.subr.bf16.mxu0 0
        %1989 = vmatpush1.bf16.msra.mxu0 0
        %1990 = vmatprep.mubr.bf16.mxu0 0
        %1991 = vmatmul.mubr.bf16.gmra.mrb[0].mxu0 %v1913
        %v1992 = vpop.f32.mrb[0].mxu0
        %v1993 = vadd.f32 %v1844, %v1992
        %v1994 = vpop.f32.mrb[0].mxu0
        %v1995 = vpop.f32.mrb[0].mxu0
        %v1996 = vadd.f32 %v1844, %v1995
        %v1997 = vpop.f32.mrb[0].mxu0
        %1998 = vdwg.mxu0
        %v1999 = vpack.c.bf16 %v1954, %v1950
        %v2000 = vpack.c.bf16 %v1956, %v1952
        %2002 = vrot.lane.b32.xlu0 %v1999, 64
        %v2003 = vpop.permute.xlu0 %2002
        %v2005 = vsel %vm939, %v1999, 0
        %v2008 = vsel %vm939, %v2003, 0
        %2010 = vmatprep.subr.bf16.mxu0 0
        %2011 = vmatpush1.bf16.xpose.msra.mxu0 %v2008
        %2012 = vmatprep.subr.bf16.mxu0 0
        %2013 = vmatpush1.bf16.xpose.msra.mxu0 0
        %2014 = vmatprep.subr.bf16.mxu0 0
        %2015 = vmatpush1.bf16.xpose.msra.mxu0 0
        %2016 = vmatprep.subr.bf16.mxu0 0
        %2017 = vmatpush1.bf16.xpose.msra.mxu0 0
        %2018 = vmatprep.subr.bf16.mxu0 0
        %2019 = vmatpush1.bf16.xpose.msra.mxu0 0
        %2020 = vmatprep.subr.bf16.mxu0 0
        %2021 = vmatpush1.bf16.xpose.msra.mxu0 0
        %2022 = vmatprep.subr.bf16.mxu0 0
        %2023 = vmatpush1.bf16.xpose.msra.mxu0 0
        %2024 = vmatprep.subr.bf16.mxu0 0
        %2025 = vmatpush1.bf16.xpose.msra.mxu0 0
        %2026 = vmatprep.subr.bf16.mxu0 0
        %2027 = vmatpush1.bf16.xpose.msra.mxu0 0
        %2028 = vmatprep.subr.bf16.mxu0 0
        %2029 = vmatpush1.bf16.xpose.msra.mxu0 0
        %2030 = vmatprep.subr.bf16.mxu0 0
        %2031 = vmatpush1.bf16.xpose.msra.mxu0 0
        %2032 = vmatprep.subr.bf16.mxu0 0
        %2033 = vmatpush1.bf16.xpose.msra.mxu0 0
        %2034 = vmatprep.subr.bf16.mxu0 0
        %2035 = vmatpush1.bf16.xpose.msra.mxu0 0
        %2036 = vmatprep.subr.bf16.mxu0 0
        %2037 = vmatpush1.bf16.xpose.msra.mxu0 0
        %2038 = vmatprep.subr.bf16.mxu0 0
        %2039 = vmatpush1.bf16.xpose.msra.mxu0 0
        %2040 = vmatprep.subr.bf16.mxu0 0
        %2041 = vmatpush1.bf16.xpose.msra.mxu0 0
        %2042 = vmatprep.mubr.bf16.mxu0 0
        %2043 = vmatmul.mubr.bf16.gmra.mrb[0].mxu0 %v2005
        %v2044 = vpop.f32.mrb[0].mxu0
        %v2045 = vadd.f32 %v934, %v2044
        %v2046 = vpop.f32.mrb[0].mxu0
        %v2047 = vpop.f32.mrb[0].mxu0
        %v2048 = vadd.f32 %v934, %v2047
        %v2049 = vpop.f32.mrb[0].mxu0
        %2050 = vdwg.mxu0
        %v2051 = vsel %vm939, %v2045, -inf
        %2052 = vmax.xlane.f32.xlu0 %v2051
        %v2053 = vpop.xlane.xlu0 %2052
        %v2054 = vsel %vm939, %v2048, -inf
        %2055 = vmax.xlane.f32.xlu0 %v2054
        %v2056 = vpop.xlane.xlu0 %2055
        %v2057 = vsub.f32 %v2045, %v2053
        %v2058 = vsub.f32 %v2048, %v2056
        %v2059 = vmul.f32 %v2057, 1.442695
        %v2060 = vpow.pop %v2059
        %v2061 = vmul.f32 %v2058, 1.442695
        %v2062 = vpow.pop %v2061
        %v2063 = vsel %vm939, %v2060, 0.0
        %2064 = vadd.xlane.f32.xlu0 %v2063
        %v2065 = vpop.xlane.xlu0 %2064
        %v2066 = vsel %vm939, %v2062, 0.0
        %2067 = vadd.xlane.f32.xlu0 %v2066
        %v2068 = vpop.xlane.xlu0 %2067
        %v2069 = vrcp.pop %v2065
        %v2070 = vrcp.pop %v2068
        %v2071 = vmul.f32 %v2060, %v2069
        %v2072 = vmul.f32 %v2062, %v2070
        %v2073 = vpack.c.bf16 %v2072, %v2071
        %2074 = vrot.lane.b32.xlu0 %v1999, 112
        %v2075 = vpop.permute.xlu0 %2074
        %2076 = vrot.lane.b32.xlu0 %v1999, 48
        %v2077 = vpop.permute.xlu0 %2076
        %v2079 = vsel %vm939, %v2075, 0
        %v2082 = vsel %vm939, %v2077, 0
        %2084 = vmatprep.subr.bf16.mxu0 0
        %2085 = vmatpush1.bf16.xpose.msra.mxu0 %v2082
        %2086 = vmatprep.subr.bf16.mxu0 0
        %2087 = vmatpush1.bf16.xpose.msra.mxu0 0
        %2088 = vmatprep.subr.bf16.mxu0 0
        %2089 = vmatpush1.bf16.xpose.msra.mxu0 0
        %2090 = vmatprep.subr.bf16.mxu0 0
        %2091 = vmatpush1.bf16.xpose.msra.mxu0 0
        %2092 = vmatprep.subr.bf16.mxu0 0
        %2093 = vmatpush1.bf16.xpose.msra.mxu0 0
        %2094 = vmatprep.subr.bf16.mxu0 0
        %2095 = vmatpush1.bf16.xpose.msra.mxu0 0
        %2096 = vmatprep.subr.bf16.mxu0 0
        %2097 = vmatpush1.bf16.xpose.msra.mxu0 0
        %2098 = vmatprep.subr.bf16.mxu0 0
        %2099 = vmatpush1.bf16.xpose.msra.mxu0 0
        %2100 = vmatprep.subr.bf16.mxu0 0
        %2101 = vmatpush1.bf16.xpose.msra.mxu0 0
        %2102 = vmatprep.subr.bf16.mxu0 0
        %2103 = vmatpush1.bf16.xpose.msra.mxu0 0
        %2104 = vmatprep.subr.bf16.mxu0 0
        %2105 = vmatpush1.bf16.xpose.msra.mxu0 0
        %2106 = vmatprep.subr.bf16.mxu0 0
        %2107 = vmatpush1.bf16.xpose.msra.mxu0 0
        %2108 = vmatprep.subr.bf16.mxu0 0
        %2109 = vmatpush1.bf16.xpose.msra.mxu0 0
        %2110 = vmatprep.subr.bf16.mxu0 0
        %2111 = vmatpush1.bf16.xpose.msra.mxu0 0
        %2112 = vmatprep.subr.bf16.mxu0 0
        %2113 = vmatpush1.bf16.xpose.msra.mxu0 0
        %2114 = vmatprep.subr.bf16.mxu0 0
        %2115 = vmatpush1.bf16.xpose.msra.mxu0 0
        %2116 = vmatprep.mubr.bf16.mxu0 0
        %2117 = vmatmul.mubr.bf16.gmra.mrb[0].mxu0 %v2079
        %v2118 = vpop.f32.mrb[0].mxu0
        %v2119 = vadd.f32 %v934, %v2118
        %v2120 = vpop.f32.mrb[0].mxu0
        %v2121 = vpop.f32.mrb[0].mxu0
        %v2122 = vadd.f32 %v934, %v2121
        %v2123 = vpop.f32.mrb[0].mxu0
        %2124 = vdwg.mxu0
        %v2125 = vsel %vm939, %v2119, -inf
        %2126 = vmax.xlane.f32.xlu0 %v2125
        %v2127 = vpop.xlane.xlu0 %2126
        %v2128 = vsel %vm939, %v2122, -inf
        %2129 = vmax.xlane.f32.xlu0 %v2128
        %v2130 = vpop.xlane.xlu0 %2129
        %v2131 = vsub.f32 %v2119, %v2127
        %v2132 = vsub.f32 %v2122, %v2130
        %v2133 = vmul.f32 %v2131, 1.442695
        %v2134 = vpow.pop %v2133
        %v2135 = vmul.f32 %v2132, 1.442695
        %v2136 = vpow.pop %v2135
        %v2137 = vsel %vm939, %v2134, 0.0
        %2138 = vadd.xlane.f32.xlu0 %v2137
        %v2139 = vpop.xlane.xlu0 %2138
        %v2140 = vsel %vm939, %v2136, 0.0
        %2141 = vadd.xlane.f32.xlu0 %v2140
        %v2142 = vpop.xlane.xlu0 %2141
        %v2143 = vrcp.pop %v2139
        %v2144 = vrcp.pop %v2142
        %v2145 = vmul.f32 %v2134, %v2143
        %v2146 = vmul.f32 %v2136, %v2144
        %v2147 = vpack.c.bf16 %v2146, %v2145
        %2149 = vrot.lane.b32.xlu0 %v2000, 64
        %v2150 = vpop.permute.xlu0 %2149
        %v2153 = vsel %vm939, %v2147, 0
        %2155 = vmatprep.subr.bf16.mxu0 0
        %2156 = vmatpush1.bf16.msra.mxu0 %v2150
        %2157 = vmatprep.subr.bf16.mxu0 0
        %2158 = vmatpush1.bf16.msra.mxu0 0
        %2159 = vmatprep.subr.bf16.mxu0 0
        %2160 = vmatpush1.bf16.msra.mxu0 0
        %2161 = vmatprep.subr.bf16.mxu0 0
        %2162 = vmatpush1.bf16.msra.mxu0 0
        %2163 = vmatprep.subr.bf16.mxu0 0
        %2164 = vmatpush1.bf16.msra.mxu0 0
        %2165 = vmatprep.subr.bf16.mxu0 0
        %2166 = vmatpush1.bf16.msra.mxu0 0
        %2167 = vmatprep.subr.bf16.mxu0 0
        %2168 = vmatpush1.bf16.msra.mxu0 0
        %2169 = vmatprep.subr.bf16.mxu0 0
        %2170 = vmatpush1.bf16.msra.mxu0 0
        %2171 = vmatprep.subr.bf16.mxu0 0
        %2172 = vmatpush1.bf16.msra.mxu0 0
        %2173 = vmatprep.subr.bf16.mxu0 0
        %2174 = vmatpush1.bf16.msra.mxu0 0
        %2175 = vmatprep.subr.bf16.mxu0 0
        %2176 = vmatpush1.bf16.msra.mxu0 0
        %2177 = vmatprep.subr.bf16.mxu0 0
        %2178 = vmatpush1.bf16.msra.mxu0 0
        %2179 = vmatprep.subr.bf16.mxu0 0
        %2180 = vmatpush1.bf16.msra.mxu0 0
        %2181 = vmatprep.subr.bf16.mxu0 0
        %2182 = vmatpush1.bf16.msra.mxu0 0
        %2183 = vmatprep.subr.bf16.mxu0 0
        %2184 = vmatpush1.bf16.msra.mxu0 0
        %2185 = vmatprep.subr.bf16.mxu0 0
        %2186 = vmatpush1.bf16.msra.mxu0 0
        %2187 = vmatprep.mubr.bf16.mxu0 0
        %2188 = vmatmul.mubr.bf16.gmra.mrb[0].mxu0 %v2153
        %v2189 = vpop.f32.mrb[0].mxu0
        %v2190 = vadd.f32 0.0, %v2189
        %v2191 = vpop.f32.mrb[0].mxu0
        %v2192 = vpop.f32.mrb[0].mxu0
        %v2193 = vadd.f32 0.0, %v2192
        %v2194 = vpop.f32.mrb[0].mxu0
        %2195 = vdwg.mxu0
        %v2197 = vsel %vm939, %v2073, 0
        %2199 = vmatprep.subr.bf16.mxu0 0
        %2200 = vmatpush1.bf16.msra.mxu0 %v2000
        %2201 = vmatprep.subr.bf16.mxu0 0
        %2202 = vmatpush1.bf16.msra.mxu0 0
        %2203 = vmatprep.subr.bf16.mxu0 0
        %2204 = vmatpush1.bf16.msra.mxu0 0
        %2205 = vmatprep.subr.bf16.mxu0 0
        %2206 = vmatpush1.bf16.msra.mxu0 0
        %2207 = vmatprep.subr.bf16.mxu0 0
        %2208 = vmatpush1.bf16.msra.mxu0 0
        %2209 = vmatprep.subr.bf16.mxu0 0
        %2210 = vmatpush1.bf16.msra.mxu0 0
        %2211 = vmatprep.subr.bf16.mxu0 0
        %2212 = vmatpush1.bf16.msra.mxu0 0
        %2213 = vmatprep.subr.bf16.mxu0 0
        %2214 = vmatpush1.bf16.msra.mxu0 0
        %2215 = vmatprep.subr.bf16.mxu0 0
        %2216 = vmatpush1.bf16.msra.mxu0 0
        %2217 = vmatprep.subr.bf16.mxu0 0
        %2218 = vmatpush1.bf16.msra.mxu0 0
        %2219 = vmatprep.subr.bf16.mxu0 0
        %2220 = vmatpush1.bf16.msra.mxu0 0
        %2221 = vmatprep.subr.bf16.mxu0 0
        %2222 = vmatpush1.bf16.msra.mxu0 0
        %2223 = vmatprep.subr.bf16.mxu0 0
        %2224 = vmatpush1.bf16.msra.mxu0 0
        %2225 = vmatprep.subr.bf16.mxu0 0
        %2226 = vmatpush1.bf16.msra.mxu0 0
        %2227 = vmatprep.subr.bf16.mxu0 0
        %2228 = vmatpush1.bf16.msra.mxu0 0
        %2229 = vmatprep.subr.bf16.mxu0 0
        %2230 = vmatpush1.bf16.msra.mxu0 0
        %2231 = vmatprep.mubr.bf16.mxu0 0
        %2232 = vmatmul.mubr.bf16.gmra.mrb[0].mxu0 %v2197
        %v2233 = vpop.f32.mrb[0].mxu0
        %v2234 = vadd.f32 %v2190, %v2233
        %v2235 = vpop.f32.mrb[0].mxu0
        %v2236 = vpop.f32.mrb[0].mxu0
        %v2237 = vadd.f32 %v2193, %v2236
        %v2238 = vpop.f32.mrb[0].mxu0
        %2239 = vdwg.mxu0
        %v2240 = vpack.c.bf16 %v1996, %v1993
        %2241 = vrot.lane.b32.xlu0 %v1999, 96
        %v2242 = vpop.permute.xlu0 %2241
        %2243 = vrot.lane.b32.xlu0 %v1999, 32
        %v2244 = vpop.permute.xlu0 %2243
        %v2246 = vsel %vm939, %v2242, 0
        %v2249 = vsel %vm939, %v2244, 0
        %2251 = vmatprep.subr.bf16.mxu0 0
        %2252 = vmatpush1.bf16.xpose.msra.mxu0 %v2249
        %2253 = vmatprep.subr.bf16.mxu0 0
        %2254 = vmatpush1.bf16.xpose.msra.mxu0 0
        %2255 = vmatprep.subr.bf16.mxu0 0
        %2256 = vmatpush1.bf16.xpose.msra.mxu0 0
        %2257 = vmatprep.subr.bf16.mxu0 0
        %2258 = vmatpush1.bf16.xpose.msra.mxu0 0
        %2259 = vmatprep.subr.bf16.mxu0 0
        %2260 = vmatpush1.bf16.xpose.msra.mxu0 0
        %2261 = vmatprep.subr.bf16.mxu0 0
        %2262 = vmatpush1.bf16.xpose.msra.mxu0 0
        %2263 = vmatprep.subr.bf16.mxu0 0
        %2264 = vmatpush1.bf16.xpose.msra.mxu0 0
        %2265 = vmatprep.subr.bf16.mxu0 0
        %2266 = vmatpush1.bf16.xpose.msra.mxu0 0
        %2267 = vmatprep.subr.bf16.mxu0 0
        %2268 = vmatpush1.bf16.xpose.msra.mxu0 0
        %2269 = vmatprep.subr.bf16.mxu0 0
        %2270 = vmatpush1.bf16.xpose.msra.mxu0 0
        %2271 = vmatprep.subr.bf16.mxu0 0
        %2272 = vmatpush1.bf16.xpose.msra.mxu0 0
        %2273 = vmatprep.subr.bf16.mxu0 0
        %2274 = vmatpush1.bf16.xpose.msra.mxu0 0
        %2275 = vmatprep.subr.bf16.mxu0 0
        %2276 = vmatpush1.bf16.xpose.msra.mxu0 0
        %2277 = vmatprep.subr.bf16.mxu0 0
        %2278 = vmatpush1.bf16.xpose.msra.mxu0 0
        %2279 = vmatprep.subr.bf16.mxu0 0
        %2280 = vmatpush1.bf16.xpose.msra.mxu0 0
        %2281 = vmatprep.subr.bf16.mxu0 0
        %2282 = vmatpush1.bf16.xpose.msra.mxu0 0
        %2283 = vmatprep.mubr.bf16.mxu0 0
        %2284 = vmatmul.mubr.bf16.gmra.mrb[0].mxu0 %v2246
        %v2285 = vpop.f32.mrb[0].mxu0
        %v2286 = vadd.f32 %v934, %v2285
        %v2287 = vpop.f32.mrb[0].mxu0
        %v2288 = vpop.f32.mrb[0].mxu0
        %v2289 = vadd.f32 %v934, %v2288
        %v2290 = vpop.f32.mrb[0].mxu0
        %2291 = vdwg.mxu0
        %v2292 = vsel %vm939, %v2286, -inf
        %2293 = vmax.xlane.f32.xlu0 %v2292
        %v2294 = vpop.xlane.xlu0 %2293
        %v2295 = vsel %vm939, %v2289, -inf
        %2296 = vmax.xlane.f32.xlu0 %v2295
        %v2297 = vpop.xlane.xlu0 %2296
        %v2298 = vsub.f32 %v2286, %v2294
        %v2299 = vsub.f32 %v2289, %v2297
        %v2300 = vmul.f32 %v2298, 1.442695
        %v2301 = vpow.pop %v2300
        %v2302 = vmul.f32 %v2299, 1.442695
        %v2303 = vpow.pop %v2302
        %v2304 = vsel %vm939, %v2301, 0.0
        %2305 = vadd.xlane.f32.xlu0 %v2304
        %v2306 = vpop.xlane.xlu0 %2305
        %v2307 = vsel %vm939, %v2303, 0.0
        %2308 = vadd.xlane.f32.xlu0 %v2307
        %v2309 = vpop.xlane.xlu0 %2308
        %v2310 = vrcp.pop %v2306
        %v2311 = vrcp.pop %v2309
        %v2312 = vmul.f32 %v2301, %v2310
        %v2313 = vmul.f32 %v2303, %v2311
        %v2314 = vpack.c.bf16 %v2313, %v2312
        %v2316 = vsel %vm939, %v2314, 0
        %2318 = vmatprep.subr.bf16.mxu0 0
        %2319 = vmatpush1.bf16.msra.mxu0 %v2240
        %2320 = vmatprep.subr.bf16.mxu0 0
        %2321 = vmatpush1.bf16.msra.mxu0 0
        %2322 = vmatprep.subr.bf16.mxu0 0
        %2323 = vmatpush1.bf16.msra.mxu0 0
        %2324 = vmatprep.subr.bf16.mxu0 0
        %2325 = vmatpush1.bf16.msra.mxu0 0
        %2326 = vmatprep.subr.bf16.mxu0 0
        %2327 = vmatpush1.bf16.msra.mxu0 0
        %2328 = vmatprep.subr.bf16.mxu0 0
        %2329 = vmatpush1.bf16.msra.mxu0 0
        %2330 = vmatprep.subr.bf16.mxu0 0
        %2331 = vmatpush1.bf16.msra.mxu0 0
        %2332 = vmatprep.subr.bf16.mxu0 0
        %2333 = vmatpush1.bf16.msra.mxu0 0
        %2334 = vmatprep.subr.bf16.mxu0 0
        %2335 = vmatpush1.bf16.msra.mxu0 0
        %2336 = vmatprep.subr.bf16.mxu0 0
        %2337 = vmatpush1.bf16.msra.mxu0 0
        %2338 = vmatprep.subr.bf16.mxu0 0
        %2339 = vmatpush1.bf16.msra.mxu0 0
        %2340 = vmatprep.subr.bf16.mxu0 0
        %2341 = vmatpush1.bf16.msra.mxu0 0
        %2342 = vmatprep.subr.bf16.mxu0 0
        %2343 = vmatpush1.bf16.msra.mxu0 0
        %2344 = vmatprep.subr.bf16.mxu0 0
        %2345 = vmatpush1.bf16.msra.mxu0 0
        %2346 = vmatprep.subr.bf16.mxu0 0
        %2347 = vmatpush1.bf16.msra.mxu0 0
        %2348 = vmatprep.subr.bf16.mxu0 0
        %2349 = vmatpush1.bf16.msra.mxu0 0
        %2350 = vmatprep.mubr.bf16.mxu0 0
        %2351 = vmatmul.mubr.bf16.gmra.mrb[0].mxu0 %v2316
        %v2352 = vpop.f32.mrb[0].mxu0
        %v2353 = vadd.f32 0.0, %v2352
        %v2354 = vpop.f32.mrb[0].mxu0
        %v2355 = vpop.f32.mrb[0].mxu0
        %v2356 = vadd.f32 0.0, %v2355
        %v2357 = vpop.f32.mrb[0].mxu0
        %2358 = vdwg.mxu0
        %v2359 = vadd.f32 %v2234, %v2353
        %v2360 = vadd.f32 %v2237, %v2356
        %2361 = vrot.lane.b32.xlu0 %v1999, 80
        %v2362 = vpop.permute.xlu0 %2361
        %2363 = vrot.lane.b32.xlu0 %v1999, 16
        %v2364 = vpop.permute.xlu0 %2363
        %v2366 = vsel %vm939, %v2362, 0
        %v2369 = vsel %vm939, %v2364, 0
        %2371 = vmatprep.subr.bf16.mxu0 0
        %2372 = vmatpush1.bf16.xpose.msra.mxu0 %v2369
        %2373 = vmatprep.subr.bf16.mxu0 0
        %2374 = vmatpush1.bf16.xpose.msra.mxu0 0
        %2375 = vmatprep.subr.bf16.mxu0 0
        %2376 = vmatpush1.bf16.xpose.msra.mxu0 0
        %2377 = vmatprep.subr.bf16.mxu0 0
        %2378 = vmatpush1.bf16.xpose.msra.mxu0 0
        %2379 = vmatprep.subr.bf16.mxu0 0
        %2380 = vmatpush1.bf16.xpose.msra.mxu0 0
        %2381 = vmatprep.subr.bf16.mxu0 0
        %2382 = vmatpush1.bf16.xpose.msra.mxu0 0
        %2383 = vmatprep.subr.bf16.mxu0 0
        %2384 = vmatpush1.bf16.xpose.msra.mxu0 0
        %2385 = vmatprep.subr.bf16.mxu0 0
        %2386 = vmatpush1.bf16.xpose.msra.mxu0 0
        %2387 = vmatprep.subr.bf16.mxu0 0
        %2388 = vmatpush1.bf16.xpose.msra.mxu0 0
        %2389 = vmatprep.subr.bf16.mxu0 0
        %2390 = vmatpush1.bf16.xpose.msra.mxu0 0
        %2391 = vmatprep.subr.bf16.mxu0 0
        %2392 = vmatpush1.bf16.xpose.msra.mxu0 0
        %2393 = vmatprep.subr.bf16.mxu0 0
        %2394 = vmatpush1.bf16.xpose.msra.mxu0 0
        %2395 = vmatprep.subr.bf16.mxu0 0
        %2396 = vmatpush1.bf16.xpose.msra.mxu0 0
        %2397 = vmatprep.subr.bf16.mxu0 0
        %2398 = vmatpush1.bf16.xpose.msra.mxu0 0
        %2399 = vmatprep.subr.bf16.mxu0 0
        %2400 = vmatpush1.bf16.xpose.msra.mxu0 0
        %2401 = vmatprep.subr.bf16.mxu0 0
        %2402 = vmatpush1.bf16.xpose.msra.mxu0 0
        %2403 = vmatprep.mubr.bf16.mxu0 0
        %2404 = vmatmul.mubr.bf16.gmra.mrb[0].mxu0 %v2366
        %v2405 = vpop.f32.mrb[0].mxu0
        %v2406 = vadd.f32 %v934, %v2405
        %v2407 = vpop.f32.mrb[0].mxu0
        %v2408 = vpop.f32.mrb[0].mxu0
        %v2409 = vadd.f32 %v934, %v2408
        %v2410 = vpop.f32.mrb[0].mxu0
        %2411 = vdwg.mxu0
        %v2412 = vsel %vm939, %v2406, -inf
        %2413 = vmax.xlane.f32.xlu0 %v2412
        %v2414 = vpop.xlane.xlu0 %2413
        %v2415 = vsel %vm939, %v2409, -inf
        %2416 = vmax.xlane.f32.xlu0 %v2415
        %v2417 = vpop.xlane.xlu0 %2416
        %v2418 = vsub.f32 %v2406, %v2414
        %v2419 = vsub.f32 %v2409, %v2417
        %v2420 = vmul.f32 %v2418, 1.442695
        %v2421 = vpow.pop %v2420
        %v2422 = vmul.f32 %v2419, 1.442695
        %v2423 = vpow.pop %v2422
        %v2424 = vsel %vm939, %v2421, 0.0
        %2425 = vadd.xlane.f32.xlu0 %v2424
        %v2426 = vpop.xlane.xlu0 %2425
        %v2427 = vsel %vm939, %v2423, 0.0
        %2428 = vadd.xlane.f32.xlu0 %v2427
        %v2429 = vpop.xlane.xlu0 %2428
        %v2430 = vrcp.pop %v2426
        %v2431 = vrcp.pop %v2429
        %v2432 = vmul.f32 %v2421, %v2430
        %v2433 = vmul.f32 %v2423, %v2431
        %v2434 = vpack.c.bf16 %v2433, %v2432
        %2436 = vrot.lane.b32.xlu0 %v2240, 64
        %v2437 = vpop.permute.xlu0 %2436
        %v2440 = vsel %vm939, %v2434, 0
        %2442 = vmatprep.subr.bf16.mxu0 0
        %2443 = vmatpush1.bf16.msra.mxu0 %v2437
        %2444 = vmatprep.subr.bf16.mxu0 0
        %2445 = vmatpush1.bf16.msra.mxu0 0
        %2446 = vmatprep.subr.bf16.mxu0 0
        %2447 = vmatpush1.bf16.msra.mxu0 0
        %2448 = vmatprep.subr.bf16.mxu0 0
        %2449 = vmatpush1.bf16.msra.mxu0 0
        %2450 = vmatprep.subr.bf16.mxu0 0
        %2451 = vmatpush1.bf16.msra.mxu0 0
        %2452 = vmatprep.subr.bf16.mxu0 0
        %2453 = vmatpush1.bf16.msra.mxu0 0
        %2454 = vmatprep.subr.bf16.mxu0 0
        %2455 = vmatpush1.bf16.msra.mxu0 0
        %2456 = vmatprep.subr.bf16.mxu0 0
        %2457 = vmatpush1.bf16.msra.mxu0 0
        %2458 = vmatprep.subr.bf16.mxu0 0
        %2459 = vmatpush1.bf16.msra.mxu0 0
        %2460 = vmatprep.subr.bf16.mxu0 0
        %2461 = vmatpush1.bf16.msra.mxu0 0
        %2462 = vmatprep.subr.bf16.mxu0 0
        %2463 = vmatpush1.bf16.msra.mxu0 0
        %2464 = vmatprep.subr.bf16.mxu0 0
        %2465 = vmatpush1.bf16.msra.mxu0 0
        %2466 = vmatprep.subr.bf16.mxu0 0
        %2467 = vmatpush1.bf16.msra.mxu0 0
        %2468 = vmatprep.subr.bf16.mxu0 0
        %2469 = vmatpush1.bf16.msra.mxu0 0
        %2470 = vmatprep.subr.bf16.mxu0 0
        %2471 = vmatpush1.bf16.msra.mxu0 0
        %2472 = vmatprep.subr.bf16.mxu0 0
        %2473 = vmatpush1.bf16.msra.mxu0 0
        %2474 = vmatprep.mubr.bf16.mxu0 0
        %2475 = vmatmul.mubr.bf16.gmra.mrb[0].mxu0 %v2440
        %v2476 = vpop.f32.mrb[0].mxu0
        %v2477 = vadd.f32 0.0, %v2476
        %v2478 = vpop.f32.mrb[0].mxu0
        %v2479 = vpop.f32.mrb[0].mxu0
        %v2480 = vadd.f32 0.0, %v2479
        %v2481 = vpop.f32.mrb[0].mxu0
        %2482 = vdwg.mxu0
        %v2483 = vadd.f32 %v2359, %v2477
        %v2484 = vadd.f32 %v2360, %v2480
        %s2485 = scalar_lea.vmem [#allocation10], 1
        %v2486 = vld [vmem:[%s2485] sm:$0x1]
        %v2488 = vlaneseq
        %v2489 = vshrl.u32 %v2488, 7
        %v2490 = vsub.s32 0, %v2489
        %v2491 = vrot.slane %v2486, %v2490
        %v2493 = vadd.f32 %v2483, %v2491
        %v2494 = vadd.f32 %v2484, %v2491
        %v2495 = vadd.f32 %v1810, %v2493
        %v2496 = vadd.f32 %v1811, %v2494
        %s2497 = scalar_lea.vmem [#allocation11], 1
        %v2498 = vld [vmem:[%s2497] sm:$0x1]
        %s2499 = scalar_lea.vmem [#allocation13], 1
        %v2500 = vld [vmem:[%s2499] sm:$0x1]
        %v2501 = vsel %vm840, %v2495, 0.0
        %2502 = vadd.xlane.f32.xlu0 %v2501
        %v2503 = vpop.xlane.xlu0 %2502
        %v2504 = vsel %vm840, %v2496, 0.0
        %2505 = vadd.xlane.f32.xlu0 %v2504
        %v2506 = vpop.xlane.xlu0 %2505
        %v2507 = vmul.f32 %v2503, %v1440
        %v2508 = vmul.f32 %v2506, %v1440
        %v2509 = vsub.f32 %v2495, %v2507
        %v2510 = vsub.f32 %v2496, %v2508
        %v2511 = vmul.f32 %v2509, %v2509
        %v2512 = vmul.f32 %v2510, %v2510
        %v2513 = vsel %vm840, %v2511, 0.0
        %2514 = vadd.xlane.f32.xlu0 %v2513
        %v2515 = vpop.xlane.xlu0 %2514
        %v2516 = vsel %vm840, %v2512, 0.0
        %2517 = vadd.xlane.f32.xlu0 %v2516
        %v2518 = vpop.xlane.xlu0 %2517
        %v2519 = vmul.f32 %v2515, %v1440
        %v2520 = vmul.f32 %v2518, %v1440
        %v2521 = vadd.f32 %v2519, 1e-05
        %v2522 = vadd.f32 %v2520, 1e-05
        %v2523 = vrsqrt.pop %v2521
        %v2524 = vrsqrt.pop %v2522
        %v2525 = vmul.f32 %v2509, %v2523
        %v2526 = vmul.f32 %v2510, %v2524
        %v2528 = vlaneseq
        %v2529 = vshrl.u32 %v2528, 7
        %v2530 = vsub.s32 0, %v2529
        %v2531 = vrot.slane %v2498, %v2530
        %v2533 = vmul.f32 %v2525, %v2531
        %v2534 = vmul.f32 %v2526, %v2531
        %v2536 = vlaneseq
        %v2537 = vshrl.u32 %v2536, 7
        %v2538 = vsub.s32 0, %v2537
        %v2539 = vrot.slane %v2500, %v2538
        %v2541 = vadd.f32 %v2533, %v2539
        %v2542 = vadd.f32 %v2534, %v2539
        %v2543 = vpack.c.bf16 %v2542, %v2541
        %s2544 = scalar_lea.vmem [#allocation14], 64
        %v2545 = vld [vmem:[%s2544] sm:$0xff]
        %v2546 = vld [vmem:[%s2544 + $0x8] sm:$0xff]
        %v2547 = vld [vmem:[%s2544 + $0x10] sm:$0xff]
        %v2548 = vld [vmem:[%s2544 + $0x18] sm:$0xff]
        %v2549 = vld [vmem:[%s2544 + $0x20] sm:$0xff]
        %v2550 = vld [vmem:[%s2544 + $0x28] sm:$0xff]
        %v2551 = vld [vmem:[%s2544 + $0x30] sm:$0xff]
        %v2552 = vld [vmem:[%s2544 + $0x38] sm:$0xff]
        %s2553 = scalar_lea.vmem [#allocation16], 2
        %v2554 = vld [vmem:[%s2553] sm:$0x3]
        %v2556 = vlaneseq
        %v2557 = vshrl.u32 %v2556, 7
        %v2558 = vsub.s32 0, %v2557
        %v2559 = vrot.slane %v2554, %v2558
        %v2560 = vlaneseq
        %v2561 = vshrl.u32 %v2560, 7
        %v2562 = vsub.s32 1, %v2561
        %v2563 = vrot.slane %v2554, %v2562
        %v2574 = vunpack.c.l.b16 %v2545
        %v2575 = vunpack.c.h.b16 %v2545
        %v2576 = vunpack.c.l.b16 %v2546
        %v2577 = vunpack.c.h.b16 %v2546
        %v2578 = vunpack.c.l.b16 %v2547
        %v2579 = vunpack.c.h.b16 %v2547
        %v2580 = vunpack.c.l.b16 %v2548
        %v2581 = vunpack.c.h.b16 %v2548
        %v2582 = vunpack.c.l.b16 %v2549
        %v2583 = vunpack.c.h.b16 %v2549
        %v2584 = vunpack.c.l.b16 %v2550
        %v2585 = vunpack.c.h.b16 %v2550
        %v2586 = vunpack.c.l.b16 %v2551
        %v2587 = vunpack.c.h.b16 %v2551
        %v2588 = vunpack.c.l.b16 %v2552
        %v2589 = vunpack.c.h.b16 %v2552
        %v2590 = vpack.c.b16 %v2576, %v2574
        %v2591 = vpack.c.b16 %v2577, %v2575
        %v2592 = vpack.c.b16 %v2580, %v2578
        %v2593 = vpack.c.b16 %v2581, %v2579
        %v2594 = vpack.c.b16 %v2584, %v2582
        %v2595 = vpack.c.b16 %v2585, %v2583
        %v2596 = vpack.c.b16 %v2588, %v2586
        %v2597 = vpack.c.b16 %v2589, %v2587
        %v2607 = vsel %vm840, %v2543, 0
        %2609 = vmatprep.subr.bf16.mxu0 %v2591
        %2610 = vmatpush1.bf16.msra.mxu0 %v2590
        %2611 = vmatprep.subr.bf16.mxu0 %v2593
        %2612 = vmatpush1.bf16.msra.mxu0 %v2592
        %2613 = vmatprep.subr.bf16.mxu0 %v2595
        %2614 = vmatpush1.bf16.msra.mxu0 %v2594
        %2615 = vmatprep.subr.bf16.mxu0 %v2597
        %2616 = vmatpush1.bf16.msra.mxu0 %v2596
        %2617 = vmatprep.subr.bf16.mxu0 0
        %2618 = vmatpush1.bf16.msra.mxu0 0
        %2619 = vmatprep.subr.bf16.mxu0 0
        %2620 = vmatpush1.bf16.msra.mxu0 0
        %2621 = vmatprep.subr.bf16.mxu0 0
        %2622 = vmatpush1.bf16.msra.mxu0 0
        %2623 = vmatprep.subr.bf16.mxu0 0
        %2624 = vmatpush1.bf16.msra.mxu0 0
        %2625 = vmatprep.subr.bf16.mxu0 0
        %2626 = vmatpush1.bf16.msra.mxu0 0
        %2627 = vmatprep.subr.bf16.mxu0 0
        %2628 = vmatpush1.bf16.msra.mxu0 0
        %2629 = vmatprep.subr.bf16.mxu0 0
        %2630 = vmatpush1.bf16.msra.mxu0 0
        %2631 = vmatprep.subr.bf16.mxu0 0
        %2632 = vmatpush1.bf16.msra.mxu0 0
        %2633 = vmatprep.subr.bf16.mxu0 0
        %2634 = vmatpush1.bf16.msra.mxu0 0
        %2635 = vmatprep.subr.bf16.mxu0 0
        %2636 = vmatpush1.bf16.msra.mxu0 0
        %2637 = vmatprep.subr.bf16.mxu0 0
        %2638 = vmatpush1.bf16.msra.mxu0 0
        %2639 = vmatprep.subr.bf16.mxu0 0
        %2640 = vmatpush1.bf16.msra.mxu0 0
        %2641 = vmatprep.mubr.bf16.mxu0 0
        %2642 = vmatmul.mubr.bf16.gmra.mrb[0].mxu0 %v2607
        %v2643 = vpop.f32.mrb[0].mxu0
        %v2644 = vadd.f32 %v2559, %v2643
        %v2645 = vpop.f32.mrb[0].mxu0
        %v2646 = vadd.f32 %v2563, %v2645
        %v2647 = vpop.f32.mrb[0].mxu0
        %v2648 = vadd.f32 %v2559, %v2647
        %v2649 = vpop.f32.mrb[0].mxu0
        %v2650 = vadd.f32 %v2563, %v2649
        %2651 = vdwg.mxu0
        %v2652 = vmax.f32 %v2644, 0.0
        %v2653 = vmax.f32 %v2646, 0.0
        %v2654 = vmax.f32 %v2648, 0.0
        %v2655 = vmax.f32 %v2650, 0.0
        %v2656 = vpack.c.bf16 %v2654, %v2652
        %v2657 = vpack.c.bf16 %v2655, %v2653
        %s2658 = scalar_lea.vmem [#allocation17], 128
        %v2659 = vld [vmem:[%s2658] sm:$0xf]
        %v2660 = vld [vmem:[%s2658 + $0x4] sm:$0xf]
        %v2661 = vld [vmem:[%s2658 + $0x8] sm:$0xf]
        %v2662 = vld [vmem:[%s2658 + $0xc] sm:$0xf]
        %v2663 = vld [vmem:[%s2658 + $0x10] sm:$0xf]
        %v2664 = vld [vmem:[%s2658 + $0x14] sm:$0xf]
        %v2665 = vld [vmem:[%s2658 + $0x18] sm:$0xf]
        %v2666 = vld [vmem:[%s2658 + $0x1c] sm:$0xf]
        %v2667 = vld [vmem:[%s2658 + $0x20] sm:$0xf]
        %v2668 = vld [vmem:[%s2658 + $0x24] sm:$0xf]
        %v2669 = vld [vmem:[%s2658 + $0x28] sm:$0xf]
        %v2670 = vld [vmem:[%s2658 + $0x2c] sm:$0xf]
        %v2671 = vld [vmem:[%s2658 + $0x30] sm:$0xf]
        %v2672 = vld [vmem:[%s2658 + $0x34] sm:$0xf]
        %v2673 = vld [vmem:[%s2658 + $0x38] sm:$0xf]
        %v2674 = vld [vmem:[%s2658 + $0x3c] sm:$0xf]
        %v2675 = vld [vmem:[%s2658 + $0x40] sm:$0xf]
        %v2676 = vld [vmem:[%s2658 + $0x44] sm:$0xf]
        %v2677 = vld [vmem:[%s2658 + $0x48] sm:$0xf]
        %v2678 = vld [vmem:[%s2658 + $0x4c] sm:$0xf]
        %v2679 = vld [vmem:[%s2658 + $0x50] sm:$0xf]
        %v2680 = vld [vmem:[%s2658 + $0x54] sm:$0xf]
        %v2681 = vld [vmem:[%s2658 + $0x58] sm:$0xf]
        %v2682 = vld [vmem:[%s2658 + $0x5c] sm:$0xf]
        %v2683 = vld [vmem:[%s2658 + $0x60] sm:$0xf]
        %v2684 = vld [vmem:[%s2658 + $0x64] sm:$0xf]
        %v2685 = vld [vmem:[%s2658 + $0x68] sm:$0xf]
        %v2686 = vld [vmem:[%s2658 + $0x6c] sm:$0xf]
        %v2687 = vld [vmem:[%s2658 + $0x70] sm:$0xf]
        %v2688 = vld [vmem:[%s2658 + $0x74] sm:$0xf]
        %v2689 = vld [vmem:[%s2658 + $0x78] sm:$0xf]
        %v2690 = vld [vmem:[%s2658 + $0x7c] sm:$0xf]
        %s2691 = scalar_lea.vmem [#allocation19], 1
        %v2692 = vld [vmem:[%s2691] sm:$0x1]
        %v2694 = vlaneseq
        %v2695 = vshrl.u32 %v2694, 7
        %v2696 = vsub.s32 0, %v2695
        %v2697 = vrot.slane %v2692, %v2696
        %v2731 = vunpack.c.l.b16 %v2659
        %v2732 = vunpack.c.l.b16 %v2660
        %v2733 = vunpack.c.l.b16 %v2661
        %v2734 = vunpack.c.l.b16 %v2662
        %v2735 = vunpack.c.l.b16 %v2663
        %v2736 = vunpack.c.l.b16 %v2664
        %v2737 = vunpack.c.l.b16 %v2665
        %v2738 = vunpack.c.l.b16 %v2666
        %v2739 = vunpack.c.l.b16 %v2667
        %v2740 = vunpack.c.l.b16 %v2668
        %v2741 = vunpack.c.l.b16 %v2669
        %v2742 = vunpack.c.l.b16 %v2670
        %v2743 = vunpack.c.l.b16 %v2671
        %v2744 = vunpack.c.l.b16 %v2672
        %v2745 = vunpack.c.l.b16 %v2673
        %v2746 = vunpack.c.l.b16 %v2674
        %v2747 = vunpack.c.l.b16 %v2675
        %v2748 = vunpack.c.l.b16 %v2676
        %v2749 = vunpack.c.l.b16 %v2677
        %v2750 = vunpack.c.l.b16 %v2678
        %v2751 = vunpack.c.l.b16 %v2679
        %v2752 = vunpack.c.l.b16 %v2680
        %v2753 = vunpack.c.l.b16 %v2681
        %v2754 = vunpack.c.l.b16 %v2682
        %v2755 = vunpack.c.l.b16 %v2683
        %v2756 = vunpack.c.l.b16 %v2684
        %v2757 = vunpack.c.l.b16 %v2685
        %v2758 = vunpack.c.l.b16 %v2686
        %v2759 = vunpack.c.l.b16 %v2687
        %v2760 = vunpack.c.l.b16 %v2688
        %v2761 = vunpack.c.l.b16 %v2689
        %v2762 = vunpack.c.l.b16 %v2690
        %v2763 = vpack.c.b16 %v2732, %v2731
        %v2764 = vpack.c.b16 %v2734, %v2733
        %v2765 = vpack.c.b16 %v2736, %v2735
        %v2766 = vpack.c.b16 %v2738, %v2737
        %v2767 = vpack.c.b16 %v2740, %v2739
        %v2768 = vpack.c.b16 %v2742, %v2741
        %v2769 = vpack.c.b16 %v2744, %v2743
        %v2770 = vpack.c.b16 %v2746, %v2745
        %v2771 = vpack.c.b16 %v2748, %v2747
        %v2772 = vpack.c.b16 %v2750, %v2749
        %v2773 = vpack.c.b16 %v2752, %v2751
        %v2774 = vpack.c.b16 %v2754, %v2753
        %v2775 = vpack.c.b16 %v2756, %v2755
        %v2776 = vpack.c.b16 %v2758, %v2757
        %v2777 = vpack.c.b16 %v2760, %v2759
        %v2778 = vpack.c.b16 %v2762, %v2761
        %2795 = vmatprep.subr.bf16.mxu0 0
        %2796 = vmatpush1.bf16.msra.mxu0 %v2763
        %2797 = vmatprep.subr.bf16.mxu0 0
        %2798 = vmatpush1.bf16.msra.mxu0 %v2764
        %2799 = vmatprep.subr.bf16.mxu0 0
        %2800 = vmatpush1.bf16.msra.mxu0 %v2765
        %2801 = vmatprep.subr.bf16.mxu0 0
        %2802 = vmatpush1.bf16.msra.mxu0 %v2766
        %2803 = vmatprep.subr.bf16.mxu0 0
        %2804 = vmatpush1.bf16.msra.mxu0 %v2767
        %2805 = vmatprep.subr.bf16.mxu0 0
        %2806 = vmatpush1.bf16.msra.mxu0 %v2768
        %2807 = vmatprep.subr.bf16.mxu0 0
        %2808 = vmatpush1.bf16.msra.mxu0 %v2769
        %2809 = vmatprep.subr.bf16.mxu0 0
        %2810 = vmatpush1.bf16.msra.mxu0 %v2770
        %2811 = vmatprep.subr.bf16.mxu0 0
        %2812 = vmatpush1.bf16.msra.mxu0 %v2771
        %2813 = vmatprep.subr.bf16.mxu0 0
        %2814 = vmatpush1.bf16.msra.mxu0 %v2772
        %2815 = vmatprep.subr.bf16.mxu0 0
        %2816 = vmatpush1.bf16.msra.mxu0 %v2773
        %2817 = vmatprep.subr.bf16.mxu0 0
        %2818 = vmatpush1.bf16.msra.mxu0 %v2774
        %2819 = vmatprep.subr.bf16.mxu0 0
        %2820 = vmatpush1.bf16.msra.mxu0 %v2775
        %2821 = vmatprep.subr.bf16.mxu0 0
        %2822 = vmatpush1.bf16.msra.mxu0 %v2776
        %2823 = vmatprep.subr.bf16.mxu0 0
        %2824 = vmatpush1.bf16.msra.mxu0 %v2777
        %2825 = vmatprep.subr.bf16.mxu0 0
        %2826 = vmatpush1.bf16.msra.mxu0 %v2778
        %2827 = vmatprep.mubr.bf16.mxu0 %v2657
        %2828 = vmatmul.mubr.bf16.gmra.mrb[0].mxu0 %v2656
        %v2829 = vpop.f32.mrb[0].mxu0
        %v2830 = vadd.f32 %v2697, %v2829
        %v2831 = vpop.f32.mrb[0].mxu0
        %v2832 = vpop.f32.mrb[0].mxu0
        %v2833 = vpop.f32.mrb[0].mxu0
        %2834 = vdwg.mxu0
        %v2835 = vadd.f32 %v2541, %v2830
        %s2836 = scalar_lea.vmem [#allocation20], 1
        %v2837 = vld [vmem:[%s2836] sm:$0x1]
        %s2838 = scalar_lea.vmem [#allocation22], 1
        %v2839 = vld [vmem:[%s2838] sm:$0x1]
        %v2840 = vsel %vm840, %v2835, 0.0
        %2841 = vadd.xlane.f32.xlu0 %v2840
        %v2842 = vpop.xlane.xlu0 %2841
        %v2843 = vmul.f32 %v2842, %v1440
        %v2844 = vsub.f32 %v2835, %v2843
        %v2845 = vmul.f32 %v2844, %v2844
        %v2846 = vsel %vm840, %v2845, 0.0
        %2847 = vadd.xlane.f32.xlu0 %v2846
        %v2848 = vpop.xlane.xlu0 %2847
        %v2849 = vmul.f32 %v2848, %v1440
        %v2850 = vadd.f32 %v2849, 1e-05
        %v2851 = vrsqrt.pop %v2850
        %v2852 = vmul.f32 %v2844, %v2851
        %v2854 = vlaneseq
        %v2855 = vshrl.u32 %v2854, 7
        %v2856 = vsub.s32 0, %v2855
        %v2857 = vrot.slane %v2837, %v2856
        %v2859 = vmul.f32 %v2852, %v2857
        %v2861 = vlaneseq
        %v2862 = vshrl.u32 %v2861, 7
        %v2863 = vsub.s32 0, %v2862
        %v2864 = vrot.slane %v2839, %v2863
        %v2866 = vadd.f32 %v2859, %v2864
        %v2867 = vpack.c.bf16 %v2866, %v2866
        %v2868 = vld [vmem:[#allocation23] sm:$0xf]
        %v2869 = vld [vmem:[#allocation23 + $0x4] sm:$0xf]
        %v2870 = vld [vmem:[#allocation23 + $0x8] sm:$0xf]
        %v2871 = vld [vmem:[#allocation23 + $0xc] sm:$0xf]
        %v2872 = vld [vmem:[#allocation23 + $0x10] sm:$0xf]
        %v2873 = vld [vmem:[#allocation23 + $0x14] sm:$0xf]
        %v2874 = vld [vmem:[#allocation23 + $0x18] sm:$0xf]
        %v2875 = vld [vmem:[#allocation23 + $0x1c] sm:$0xf]
        %v2876 = vld [vmem:[#allocation25] sm:$0x1]
        %v2885 = vunpack.c.l.b16 %v2868
        %v2886 = vunpack.c.l.b16 %v2869
        %v2887 = vunpack.c.l.b16 %v2870
        %v2888 = vunpack.c.l.b16 %v2871
        %v2889 = vunpack.c.l.b16 %v2872
        %v2890 = vunpack.c.l.b16 %v2873
        %v2891 = vunpack.c.l.b16 %v2874
        %v2892 = vunpack.c.l.b16 %v2875
        %v2893 = vpack.c.b16 %v2886, %v2885
        %v2894 = vpack.c.b16 %v2888, %v2887
        %v2895 = vpack.c.b16 %v2890, %v2889
        %v2896 = vpack.c.b16 %v2892, %v2891
        %v2902 = vsel %vm840, %v2867, 0
        %2904 = vmatprep.subr.bf16.mxu0 0
        %2905 = vmatpush1.bf16.msra.mxu0 %v2893
        %2906 = vmatprep.subr.bf16.mxu0 0
        %2907 = vmatpush1.bf16.msra.mxu0 %v2894
        %2908 = vmatprep.subr.bf16.mxu0 0
        %2909 = vmatpush1.bf16.msra.mxu0 %v2895
        %2910 = vmatprep.subr.bf16.mxu0 0
        %2911 = vmatpush1.bf16.msra.mxu0 %v2896
        %2912 = vmatprep.subr.bf16.mxu0 0
        %2913 = vmatpush1.bf16.msra.mxu0 0
        %2914 = vmatprep.subr.bf16.mxu0 0
        %2915 = vmatpush1.bf16.msra.mxu0 0
        %2916 = vmatprep.subr.bf16.mxu0 0
        %2917 = vmatpush1.bf16.msra.mxu0 0
        %2918 = vmatprep.subr.bf16.mxu0 0
        %2919 = vmatpush1.bf16.msra.mxu0 0
        %2920 = vmatprep.subr.bf16.mxu0 0
        %2921 = vmatpush1.bf16.msra.mxu0 0
        %2922 = vmatprep.subr.bf16.mxu0 0
        %2923 = vmatpush1.bf16.msra.mxu0 0
        %2924 = vmatprep.subr.bf16.mxu0 0
        %2925 = vmatpush1.bf16.msra.mxu0 0
        %2926 = vmatprep.subr.bf16.mxu0 0
        %2927 = vmatpush1.bf16.msra.mxu0 0
        %2928 = vmatprep.subr.bf16.mxu0 0
        %2929 = vmatpush1.bf16.msra.mxu0 0
        %2930 = vmatprep.subr.bf16.mxu0 0
        %2931 = vmatpush1.bf16.msra.mxu0 0
        %2932 = vmatprep.subr.bf16.mxu0 0
        %2933 = vmatpush1.bf16.msra.mxu0 0
        %2934 = vmatprep.subr.bf16.mxu0 0
        %2935 = vmatpush1.bf16.msra.mxu0 0
        %2936 = vmatprep.mubr.bf16.mxu0 0
        %2937 = vmatmul.mubr.bf16.gmra.mrb[0].mxu0 %v2902
        %v2938 = vpop.f32.mrb[0].mxu0
        %v2939 = vadd.f32 %v2876, %v2938
        %v2940 = vpop.f32.mrb[0].mxu0
        %v2941 = vpop.f32.mrb[0].mxu0
        %v2942 = vpop.f32.mrb[0].mxu0
        %2943 = vdwg.mxu0
        %2944 = vst [vmem:[%s731] sm:$0x1] %v2939
        %s2945 = sand.u32 %s374, 1
        %s2946 = scalar_lea.sflag [#allocation4], %s2945
        %s2947 = sand.u32 %s374, 1
        %s2948 = scalar_lea.vmem [#allocation26], %s2947
        // Predicated region
        $region141: #{neurotoken_transformer_forward.1} parent=79 // pred_check
          %p2949 = pneg %p384
        $region142: #{neurotoken_transformer_forward.1} parent=79 // pred_check_branch
          %2951 = sbr.rel (%p2949) target = $region144
        $region143: #{neurotoken_transformer_forward.1} parent=79 // pred_region
          %s2953 = ssub.s32 16, 16
          %2954 = vsyncadd %s2946, %s2953
          %s2955 = smul.addr %s41, 16
          %s2956 = scalar_lea.hbm %s15, %s2955
          %s2958 = sshll.u32 %s2948, 4
          %s2959 = int_to_ptr.vmem [resolvable:$true] %s2958
          %2961 = dma.vmem_to_hbm [thread:$0]  %s2959, 16, %s2956, %s2946
        $region144: #{neurotoken_transformer_forward.1} parent=79 // pred_fallthru
          _
      $region80: #{neurotoken_transformer_forward.1} parent=5 // pred_fallthru
        _
      %p2962 = scmp.le.s32.totalorder 2, %s36
      // Predicated region
      $region145: #{neurotoken_transformer_forward.1} parent=5 // pred_check
        %p2963 = pneg %p2962
      $region146: #{neurotoken_transformer_forward.1} parent=5 // pred_check_branch
        %2965 = sbr.rel (%p2963) target = $region148
      $region147: #{neurotoken_transformer_forward.1} parent=5 // pred_region
        %s2966 = ssub.s32 %s36, 2
        // Predicated region
        $region149: #{neurotoken_transformer_forward.1} parent=147 // pred_check
          %p2967 = pneg %p390
        $region150: #{neurotoken_transformer_forward.1} parent=147 // pred_check_branch
          %2969 = sbr.rel (%p2967) target = $region152
        $region151: #{neurotoken_transformer_forward.1} parent=147 // pred_region
          %s2970 = sand.u32 %s375, 1
          %s2971 = scalar_lea.sflag [#allocation4], %s2970
          %s2972 = sand.u32 %s375, 1
          %s2973 = scalar_lea.vmem [#allocation26], %s2972
          %2974 = dma.done %s2971, 16
        $region152: #{neurotoken_transformer_forward.1} parent=147 // pred_fallthru
          _
      $region148: #{neurotoken_transformer_forward.1} parent=5 // pred_fallthru
        _
    $region6: #{neurotoken_transformer_forward.1} parent=1 // loop_footer
      %s40 = sadd.s32 1, %s36
    $region7: #{neurotoken_transformer_forward.1} parent=1 // loop_footer_branch
      %35 = sbr.rel target = $region3
    $region8: #{neurotoken_transformer_forward.1} parent=1 // loop_exit
      _
    %2975 = vsyncpa [#allocation3], 1
    %s2976 = scalar_lea.sflag [#allocation3], 1
    %2977 = vsyncpa %s2976, 1
    %2978 = vsyncpa [#allocation6], 1
    %s2979 = scalar_lea.sflag [#allocation6], 1
    %2980 = vsyncpa %s2979, 1
    %2981 = vsyncpa [#allocation9], 1
    %2982 = vsyncpa [#allocation12], 1
    %2983 = vsyncpa [#allocation15], 1
    %2984 = vsyncpa [#allocation18], 1
    %2985 = vsyncpa [#allocation21], 1
    %2986 = vsyncpa [#allocation24], 1
    %2987 = vsyncpa [#allocation4], 1
    %s2988 = scalar_lea.sflag [#allocation4], 1
    %2989 = vsyncpa %s2988, 1

</llo_original>
